<compile_context>
chip_gen: v7x
topology: tpu7x:2x2x1
jax: 0.10.0
libtpu: 0.0.40
codegen_flags: <defaults>
</compile_context>

<pallas_src>
import functools

import jax
import jax.numpy as jnp
from jax import lax
from jax.experimental import pallas as pl
from jax.experimental.pallas import tpu as pltpu

PAD = 128       # padded channel / hidden / text dim (lane- & MXU-aligned)
SUBLANE = 8     # f32 sublane tile


def _round_up(x, m):
    return -(-x // m) * m


def _vmem_bytes(shape, itemsize):
    """(8,128)-tile-padded VMEM footprint of one buffer."""
    if len(shape) == 0:
        lead, r, c = 1, 1, 1
    elif len(shape) == 1:
        lead, r, c = 1, 1, shape[0]
    else:
        lead = 1
        for d in shape[:-2]:
            lead *= d
        r, c = shape[-2], shape[-1]
    return lead * _round_up(max(r, 1), SUBLANE) * _round_up(max(c, 1), PAD) * itemsize


# --------------------------------------------------------------------------
# Shared in-kernel forward (used by the fused train kernel and the val kernel).
# --------------------------------------------------------------------------
def _forward(x_ref, txt_ref, params_ref, xt_ref, wstack_ref, *, C, Dt, B, HW, M):
    """Build the K=256 packed operand [x | bcast(text)] and run the 2-layer MLP.

    Returns (xtb, w2b, hb, pred):
      xtb  (Mp, 2*PAD) bf16  packed input, exactly zero in all padded lanes/rows
      w2b  (PAD, PAD)  bf16  second-layer weight
      hb   (Mp, PAD)   bf16  relu hidden activations
      pred (Mp, PAD)   f32   network output (exactly zero in padded lanes/rows)
    """
    P = PAD
    # Zero-init the packed-input scratch, then write only the logical lanes:
    #   lanes [0, C)      <- NHWC-flattened image rows
    #   lanes [P, P+Dt)   <- per-image text embedding, broadcast over its HW rows
    xt_ref[...] = jnp.zeros_like(xt_ref)
    xt_ref[:M, :C] = x_ref[...]
    for b in range(B):                                    # B static -> unrolled
        xt_ref[b * HW:(b + 1) * HW, P:P + Dt] = jnp.broadcast_to(
            txt_ref[b:b + 1, :], (HW, Dt))

    # Stack [W1; Wt] into one (2P, P) weight so the first layer is a single
    # K=256 GEMM (fills the 256-deep MXU on v6e/v7x; neutral on v5e).
    wstack_ref[:P, :] = params_ref[0]
    wstack_ref[P:, :] = params_ref[2]

    xtb = xt_ref[...].astype(jnp.bfloat16)                # (Mp, 2P)
    w1t = wstack_ref[...].astype(jnp.bfloat16)            # (2P, P)
    w2b = params_ref[1].astype(jnp.bfloat16)              # (P, P)

    pre = jnp.dot(xtb, w1t, preferred_element_type=jnp.float32)   # (Mp, P) f32
    hb = jnp.maximum(pre, 0.0).astype(jnp.bfloat16)                # relu
    pred = jnp.dot(hb, w2b, preferred_element_type=jnp.float32)    # (Mp, P) f32
    return xtb, w2b, hb, pred


def _mse(noise_ref, npad_ref, pred, *, C, M, inv_n):
    """Pad noise into VMEM scratch; return (diff, loss) with exact logical mean."""
    npad_ref[...] = jnp.zeros_like(npad_ref)
    npad_ref[:M, :C] = noise_ref[...]
    diff = pred - npad_ref[...]                 # exactly zero in padded lanes/rows
    loss = jnp.sum(diff * diff, axis=(0, 1), keepdims=True) * inv_n
    return diff, loss


# --------------------------------------------------------------------------
# Fused train kernel: forward loss + analytic grads + Adam update (in place).
# --------------------------------------------------------------------------
def _train_kernel(x_ref, noise_ref, txt_ref, params_ref, m_ref, v_ref, bc_ref,
                  loss_ref, p_out, m_out, v_out,
                  xt_ref, npad_ref, wstack_ref,
                  *, C, Dt, B, HW, M, inv_n, lr, eps, beta1, beta2):
    P = PAD
    xtb, w2b, hb, pred = _forward(x_ref, txt_ref, params_ref, xt_ref, wstack_ref,
                                  C=C, Dt=Dt, B=B, HW=HW, M=M)
    diff, loss = _mse(noise_ref, npad_ref, pred, C=C, M=M, inv_n=inv_n)
    loss_ref[...] = loss

    # ---- analytic backward of mean((pred - noise)^2) ----
    scale = 2.0 * inv_n                                   # dL/dpred = scale * diff
    db = diff.astype(jnp.bfloat16)

    # dW2 = h^T @ dpred : contract over rows (no explicit transpose / XLU pass).
    dw2 = scale * lax.dot_general(hb, db, (((0,), (0,)), ((), ())),
                                  preferred_element_type=jnp.float32)
    # dh = dpred @ W2^T : contract over the channel axis of both operands.
    dh = lax.dot_general(db, w2b, (((1,), (1,)), ((), ())),
                         preferred_element_type=jnp.float32)
    # ReLU backward: mask on the activations (no f32 pre-activation carried).
    dpre = jnp.where(hb > 0, dh, 0.0).astype(jnp.bfloat16)
    # d[W1; Wt] = [x | t]^T @ dpre as one K-packed GEMM, then split the rows.
    dw1t = scale * lax.dot_general(xtb, dpre, (((0,), (0,)), ((), ())),
                                   preferred_element_type=jnp.float32)  # (2P, P)
    grads = (dw1t[:P, :], dw2, dw1t[P:, :])               # (dW1, dW2, dWt)

    # ---- fused Adam: params / m / v are aliased in-place outputs ----
    inv_bc1 = bc_ref[0]                                   # 1 / (1 - beta1**t)
    inv_bc2 = bc_ref[1]                                   # 1 / (1 - beta2**t)
    for i in range(3):                                    # static unroll
        g = grads[i]
        m_new = beta1 * m_ref[i] + (1.0 - beta1) * g
        v_new = beta2 * v_ref[i] + (1.0 - beta2) * (g * g)
        m_hat = m_new * inv_bc1
        v_hat = v_new * inv_bc2
        denom = jnp.sqrt(v_hat) + eps
        p_out[i] = params_ref[i] - lr * m_hat * pl.reciprocal(denom, approx=True)
        m_out[i] = m_new
        v_out[i] = v_new


# --------------------------------------------------------------------------
# Validation kernel: loss only (no grads, no optimizer state).
# --------------------------------------------------------------------------
def _val_kernel(x_ref, noise_ref, txt_ref, params_ref,
                loss_ref, xt_ref, npad_ref, wstack_ref,
                *, C, Dt, B, HW, M, inv_n):
    _, _, _, pred = _forward(x_ref, txt_ref, params_ref, xt_ref, wstack_ref,
                             C=C, Dt=Dt, B=B, HW=HW, M=M)
    _, loss = _mse(noise_ref, npad_ref, pred, C=C, M=M, inv_n=inv_n)
    loss_ref[...] = loss


# --------------------------------------------------------------------------
# pallas_call wrappers.
# --------------------------------------------------------------------------
def _common_dims(x, txt):
    M, C = x.shape
    B, Dt = txt.shape
    assert M % B == 0, "rows must be grouped per image"
    HW = M // B
    Mp = _round_up(M, SUBLANE)
    inv_n = 1.0 / float(M * C)
    return M, C, B, Dt, HW, Mp, inv_n


def _vmem_limit(arrays, scratch_dims):
    explicit = sum(_vmem_bytes(a.shape, a.dtype.itemsize) for a in arrays)
    explicit += sum(_vmem_bytes(s, 4) for s in scratch_dims)      # f32 scratches
    # Generous headroom for compiler-managed temporaries (pre/pred/diff/dh/...);
    # total stays a small fraction of the 16-32 MiB scoped default on v5e/v6e/v7x.
    return explicit + 8 * 1024 * 1024


def _train_call(x, noise, txt, params, m, v, bc, *, lr, eps, beta1, beta2):
    M, C, B, Dt, HW, Mp, inv_n = _common_dims(x, txt)
    P = PAD
    vmem = pl.BlockSpec(memory_space=pltpu.MemorySpace.VMEM)
    smem = pl.BlockSpec(memory_space=pltpu.MemorySpace.SMEM)
    scratch_dims = [(Mp, 2 * P), (Mp, P), (2 * P, P)]     # xt, noise-pad, [W1;Wt]
    out_shape = (jax.ShapeDtypeStruct((1, 1), jnp.float32),
                 jax.ShapeDtypeStruct(params.shape, jnp.float32),
                 jax.ShapeDtypeStruct(params.shape, jnp.float32),
                 jax.ShapeDtypeStruct(params.shape, jnp.float32))
    limit = _vmem_limit([x, noise, txt, params, m, v] + list(out_shape),
                        scratch_dims)
    return pl.pallas_call(
        functools.partial(_train_kernel, C=C, Dt=Dt, B=B, HW=HW, M=M, inv_n=inv_n,
                          lr=lr, eps=eps, beta1=beta1, beta2=beta2),
        out_shape=out_shape,
        in_specs=[vmem, vmem, vmem, vmem, vmem, vmem, smem],
        out_specs=(vmem, vmem, vmem, vmem),
        scratch_shapes=[pltpu.VMEM(s, jnp.float32) for s in scratch_dims],
        input_output_aliases={3: 1, 4: 2, 5: 3},          # params, m, v in place
        compiler_params=pltpu.CompilerParams(vmem_limit_bytes=limit),
    )(x, noise, txt, params, m, v, bc)


def _val_call(x, noise, txt, params):
    M, C, B, Dt, HW, Mp, inv_n = _common_dims(x, txt)
    P = PAD
    vmem = pl.BlockSpec(memory_space=pltpu.MemorySpace.VMEM)
    scratch_dims = [(Mp, 2 * P), (Mp, P), (2 * P, P)]
    out_shape = jax.ShapeDtypeStruct((1, 1), jnp.float32)
    limit = _vmem_limit([x, noise, txt, params, out_shape], scratch_dims)
    return pl.pallas_call(
        functools.partial(_val_kernel, C=C, Dt=Dt, B=B, HW=HW, M=M, inv_n=inv_n),
        out_shape=out_shape,
        in_specs=[vmem, vmem, vmem, vmem],
        out_specs=vmem,
        scratch_shapes=[pltpu.VMEM(s, jnp.float32) for s in scratch_dims],
        compiler_params=pltpu.CompilerParams(vmem_limit_bytes=limit),
    )(x, noise, txt, params)


def _pad2d(a, rows, cols):
    a = jnp.asarray(a, jnp.float32)
    return jnp.pad(a, ((0, rows - a.shape[0]), (0, cols - a.shape[1])))


# --------------------------------------------------------------------------
# ImagenTrainer equivalent (training loop + validation loop).
# --------------------------------------------------------------------------
class ImagenTrainerPallas:
    def __init__(self, params, epochs=2, first_epoch=1, p=1,
                 lr=1e-4, eps=1e-8, beta1=0.9, beta2=0.99):
        self.p = p
        self.first_epoch, self.epochs = first_epoch, epochs
        self.lr, self.eps, self.beta1, self.beta2 = lr, eps, beta1, beta2
        self.C, self.Ch = params["w1"].shape
        self.Dt = params["wt"].shape[0]
        P = PAD

        # Padded + stacked params (3, 128, 128): padded regions start at zero,
        # receive exactly-zero grads, and therefore stay zero under Adam.
        self.params = jnp.stack([_pad2d(params["w1"], P, P),
                                 _pad2d(params["w2"], P, P),
                                 _pad2d(params["wt"], P, P)])
        self.m = jnp.zeros_like(self.params)
        self.v = jnp.zeros_like(self.params)
        self.step = 0
        # TODO(synk): high_model / sample() (DDPM sampling) not reproduced here.

        def prep(images, noise):
            # NCHW -> rows = (B*HW) on sublanes, unpadded C on lanes.
            B, C, H, W = images.shape
            M = B * H * W
            x = jnp.transpose(images.astype(jnp.float32), (0, 2, 3, 1)).reshape(M, C)
            nz = jnp.transpose(noise.astype(jnp.float32), (0, 2, 3, 1)).reshape(M, C)
            return x, nz

        lr_, eps_, b1_, b2_ = lr, eps, beta1, beta2

        def train_step(images, texts, noise, params_, m_, v_, step_f):
            x, nz = prep(images, noise)
            bc = jnp.stack([1.0 / (1.0 - b1_ ** step_f),
                            1.0 / (1.0 - b2_ ** step_f)]).astype(jnp.float32)
            loss, new_p, new_m, new_v = _train_call(
                x, nz, texts.astype(jnp.float32), params_, m_, v_, bc,
                lr=lr_, eps=eps_, beta1=b1_, beta2=b2_)
            return loss[0, 0], new_p, new_m, new_v

        def val_step(images, texts, noise, params_):
            x, nz = prep(images, noise)
            return _val_call(x, nz, texts.astype(jnp.float32), params_)[0, 0]

        # Donate params/m/v so the in-kernel aliasing is a true in-place update.
        self._train_step = jax.jit(train_step, donate_argnums=(3, 4, 5))
        self._val_step = jax.jit(val_step)

    def get_param(self, name):
        idx = {"w1": 0, "w2": 1, "wt": 2}[name]
        r, c = {"w1": (self.C, self.Ch),
                "w2": (self.Ch, self.C),
                "wt": (self.Dt, self.Ch)}[name]
        return self.params[idx, :r, :c]

    def validation_loss(self, data):
        total = jnp.float32(0.0)
        for images, texts, noise in data:            # no-grad pass: loss-only kernel
            total = total + self._val_step(images, texts, noise, self.params)
        return float(total) / len(data)              # single host sync

    def forward(self, train_data, valid_data, path=None, inter_path=None,
                save_new_each=10):
        train_loss_per_epoch, valid_loss_per_epoch = [], []
        for _epoch in range(self.first_epoch, self.epochs + 1):
            total = jnp.float32(0.0)
            for images, texts, noise in train_data:
                self.step += 1
                loss, self.params, self.m, self.v = self._train_step(
                    images, texts, noise, self.params, self.m, self.v,
                    jnp.float32(self.step))
                total = total + loss                 # device-side accumulation
            train_loss_per_epoch.append(float(total) / len(train_data))  # 1 sync/epoch
            valid_loss_per_epoch.append(self.validation_loss(valid_data))
            # TODO(synk): torch.save checkpointing (file I/O) skipped.
        # TODO(synk): matplotlib loss-curve plotting omitted.
        return train_loss_per_epoch, valid_loss_per_epoch


if __name__ == "__main__":
    B, C, H, W = 2, 4, 16, 16      # small shapes consistent with the trainer's batches
    Dt, Ch = 8, 32                 # text-embedding dim / hidden dim

    key = jax.random.PRNGKey(0)
    k_w1, k_w2, k_wt, k_data = jax.random.split(key, 4)
    params = {
        "w1": 0.1 * jax.random.normal(k_w1, (C, Ch), jnp.float32),
        "w2": 0.1 * jax.random.normal(k_w2, (Ch, C), jnp.float32),
        "wt": 0.1 * jax.random.normal(k_wt, (Dt, Ch), jnp.float32),
    }

    def make_batch(k):
        ki, kt, kn = jax.random.split(k, 3)
        images = jax.random.normal(ki, (B, C, H, W), jnp.float32)   # NCHW, like PyTorch
        texts = jax.random.normal(kt, (B, Dt), jnp.float32)         # pre-encoded text
        noise = jax.random.normal(kn, (B, C, H, W), jnp.float32)    # diffusion target
        return images, texts, noise

    ks = jax.random.split(k_data, 3)
    train_data = [make_batch(ks[0]), make_batch(ks[1])]
    valid_data = [make_batch(ks[2])]

    trainer = ImagenTrainerPallas(params, epochs=2, first_epoch=1)
    train_losses, valid_losses = trainer.forward(train_data, valid_data)

    jax.block_until_ready(trainer.params)
    assert len(train_losses) == 2 and len(valid_losses) == 2
    assert all(jnp.isfinite(jnp.float32(l)) for l in train_losses + valid_losses)
    print("KERNEL_OK")
</pallas_src>

<mosaic_0001>
module attributes {stable_mosaic.version = 11 : i64} {
  func.func @_train_kernel(%arg0: memref<512x4xf32, #tpu.memory_space<vmem>>, %arg1: memref<512x4xf32, #tpu.memory_space<vmem>>, %arg2: memref<2x8xf32, #tpu.memory_space<vmem>>, %arg3: memref<3x128x128xf32, #tpu.memory_space<vmem>>, %arg4: memref<3x128x128xf32, #tpu.memory_space<vmem>>, %arg5: memref<3x128x128xf32, #tpu.memory_space<vmem>>, %arg6: memref<2xf32, #tpu.memory_space<smem>>, %arg7: memref<1x1xf32, #tpu.memory_space<vmem>>, %arg8: memref<3x128x128xf32, #tpu.memory_space<vmem>>, %arg9: memref<3x128x128xf32, #tpu.memory_space<vmem>>, %arg10: memref<3x128x128xf32, #tpu.memory_space<vmem>>, %arg11: memref<512x256xf32, #tpu.memory_space<vmem>>, %arg12: memref<512x128xf32, #tpu.memory_space<vmem>>, %arg13: memref<256x128xf32, #tpu.memory_space<vmem>>) attributes {dimension_semantics = [], scalar_prefetch = 0 : i64, scratch_operands = 3 : i64, tpu.core_type = #tpu.core_type<tc>} {
    %cst = arith.constant 0.000000e+00 : f32
    %0 = vector.broadcast %cst : f32 to vector<512x256xf32>
    %c0 = arith.constant 0 : index
    %c0_0 = arith.constant 0 : index
    %1 = vector.load %arg11[%c0, %c0_0] : memref<512x256xf32, #tpu.memory_space<vmem>>, vector<512x256xf32>
    tpu.vector_store %arg11[%c0, %c0_0], %0 {strides = array<i32>} : memref<512x256xf32, #tpu.memory_space<vmem>>, vector<512x256xf32>,
    %c0_1 = arith.constant 0 : index
    %c0_2 = arith.constant 0 : index
    %2 = vector.load %arg0[%c0_1, %c0_2] : memref<512x4xf32, #tpu.memory_space<vmem>>, vector<512x4xf32>
    %c0_3 = arith.constant 0 : index
    %c0_4 = arith.constant 0 : index
    %3 = vector.load %arg11[%c0_3, %c0_4] : memref<512x256xf32, #tpu.memory_space<vmem>>, vector<512x4xf32>
    tpu.vector_store %arg11[%c0_3, %c0_4], %2 {strides = array<i32>} : memref<512x256xf32, #tpu.memory_space<vmem>>, vector<512x4xf32>,
    %c0_5 = arith.constant 0 : index
    %c0_6 = arith.constant 0 : index
    %4 = vector.load %arg2[%c0_5, %c0_6] : memref<2x8xf32, #tpu.memory_space<vmem>>, vector<1x8xf32>
    %5 = vector.shape_cast %4 : vector<1x8xf32> to vector<1x8xf32>
    %6 = vector.broadcast %5 : vector<1x8xf32> to vector<256x8xf32>
    %c0_7 = arith.constant 0 : index
    %c128 = arith.constant 128 : index
    %7 = vector.load %arg11[%c0_7, %c128] : memref<512x256xf32, #tpu.memory_space<vmem>>, vector<256x8xf32>
    tpu.vector_store %arg11[%c0_7, %c128], %6 {strides = array<i32>} : memref<512x256xf32, #tpu.memory_space<vmem>>, vector<256x8xf32>,
    %c1 = arith.constant 1 : index
    %c0_8 = arith.constant 0 : index
    %8 = vector.load %arg2[%c1, %c0_8] : memref<2x8xf32, #tpu.memory_space<vmem>>, vector<1x8xf32>
    %9 = vector.shape_cast %8 : vector<1x8xf32> to vector<1x8xf32>
    %10 = vector.broadcast %9 : vector<1x8xf32> to vector<256x8xf32>
    %c256 = arith.constant 256 : index
    %c128_9 = arith.constant 128 : index
    %11 = vector.load %arg11[%c256, %c128_9] : memref<512x256xf32, #tpu.memory_space<vmem>>, vector<256x8xf32>
    tpu.vector_store %arg11[%c256, %c128_9], %10 {strides = array<i32>} : memref<512x256xf32, #tpu.memory_space<vmem>>, vector<256x8xf32>,
    %c0_10 = arith.constant 0 : index
    %c0_11 = arith.constant 0 : index
    %c0_12 = arith.constant 0 : index
    %12 = vector.load %arg3[%c0_10, %c0_11, %c0_12] : memref<3x128x128xf32, #tpu.memory_space<vmem>>, vector<1x128x128xf32>
    %13 = vector.shape_cast %12 : vector<1x128x128xf32> to vector<128x128xf32>
    %c0_13 = arith.constant 0 : index
    %c0_14 = arith.constant 0 : index
    %14 = vector.load %arg13[%c0_13, %c0_14] : memref<256x128xf32, #tpu.memory_space<vmem>>, vector<128x128xf32>
    tpu.vector_store %arg13[%c0_13, %c0_14], %13 {strides = array<i32>} : memref<256x128xf32, #tpu.memory_space<vmem>>, vector<128x128xf32>,
    %c2 = arith.constant 2 : index
    %c0_15 = arith.constant 0 : index
    %c0_16 = arith.constant 0 : index
    %15 = vector.load %arg3[%c2, %c0_15, %c0_16] : memref<3x128x128xf32, #tpu.memory_space<vmem>>, vector<1x128x128xf32>
    %16 = vector.shape_cast %15 : vector<1x128x128xf32> to vector<128x128xf32>
    %c128_17 = arith.constant 128 : index
    %c0_18 = arith.constant 0 : index
    %17 = vector.load %arg13[%c128_17, %c0_18] : memref<256x128xf32, #tpu.memory_space<vmem>>, vector<128x128xf32>
    tpu.vector_store %arg13[%c128_17, %c0_18], %16 {strides = array<i32>} : memref<256x128xf32, #tpu.memory_space<vmem>>, vector<128x128xf32>,
    %c0_19 = arith.constant 0 : index
    %c0_20 = arith.constant 0 : index
    %18 = vector.load %arg11[%c0_19, %c0_20] : memref<512x256xf32, #tpu.memory_space<vmem>>, vector<512x256xf32>
    %19 = arith.truncf %18 : vector<512x256xf32> to vector<512x256xbf16>
    %c0_21 = arith.constant 0 : index
    %c0_22 = arith.constant 0 : index
    %20 = vector.load %arg13[%c0_21, %c0_22] : memref<256x128xf32, #tpu.memory_space<vmem>>, vector<256x128xf32>
    %21 = arith.truncf %20 : vector<256x128xf32> to vector<256x128xbf16>
    %c1_23 = arith.constant 1 : index
    %c0_24 = arith.constant 0 : index
    %c0_25 = arith.constant 0 : index
    %22 = vector.load %arg3[%c1_23, %c0_24, %c0_25] : memref<3x128x128xf32, #tpu.memory_space<vmem>>, vector<1x128x128xf32>
    %23 = vector.shape_cast %22 : vector<1x128x128xf32> to vector<128x128xf32>
    %24 = arith.truncf %23 : vector<128x128xf32> to vector<128x128xbf16>
    %cst_26 = arith.constant dense<0.000000e+00> : vector<512x128xf32>
    %25 = tpu.matmul %19, %21, %cst_26 {dimension_numbers = #tpu.dot_dimension_numbers<[1], [0], [0], [1], [0, 0, 1, 1], [], []>} : vector<512x256xbf16>, vector<256x128xbf16>, vector<512x128xf32> -> vector<512x128xf32>
    %cst_27 = arith.constant 0.000000e+00 : f32
    %26 = vector.broadcast %cst_27 : f32 to vector<512x128xf32>
    %27 = arith.maximumf %25, %26 : vector<512x128xf32>
    %28 = arith.truncf %27 : vector<512x128xf32> to vector<512x128xbf16>
    %cst_28 = arith.constant dense<0.000000e+00> : vector<512x128xf32>
    %29 = tpu.matmul %28, %24, %cst_28 {dimension_numbers = #tpu.dot_dimension_numbers<[1], [0], [0], [1], [0, 0, 1, 1], [], []>} : vector<512x128xbf16>, vector<128x128xbf16>, vector<512x128xf32> -> vector<512x128xf32>
    %cst_29 = arith.constant 0.000000e+00 : f32
    %30 = vector.broadcast %cst_29 : f32 to vector<512x128xf32>
    %c0_30 = arith.constant 0 : index
    %c0_31 = arith.constant 0 : index
    %31 = vector.load %arg12[%c0_30, %c0_31] : memref<512x128xf32, #tpu.memory_space<vmem>>, vector<512x128xf32>
    tpu.vector_store %arg12[%c0_30, %c0_31], %30 {strides = array<i32>} : memref<512x128xf32, #tpu.memory_space<vmem>>, vector<512x128xf32>,
    %c0_32 = arith.constant 0 : index
    %c0_33 = arith.constant 0 : index
    %32 = vector.load %arg1[%c0_32, %c0_33] : memref<512x4xf32, #tpu.memory_space<vmem>>, vector<512x4xf32>
    %c0_34 = arith.constant 0 : index
    %c0_35 = arith.constant 0 : index
    %33 = vector.load %arg12[%c0_34, %c0_35] : memref<512x128xf32, #tpu.memory_space<vmem>>, vector<512x4xf32>
    tpu.vector_store %arg12[%c0_34, %c0_35], %32 {strides = array<i32>} : memref<512x128xf32, #tpu.memory_space<vmem>>, vector<512x4xf32>,
    %c0_36 = arith.constant 0 : index
    %c0_37 = arith.constant 0 : index
    %34 = vector.load %arg12[%c0_36, %c0_37] : memref<512x128xf32, #tpu.memory_space<vmem>>, vector<512x128xf32>
    %35 = arith.subf %29, %34 : vector<512x128xf32>
    %36 = arith.mulf %35, %35 : vector<512x128xf32>
    %37 = vector.shape_cast %36 : vector<512x128xf32> to vector<1x512x128xf32>
    %cst_38 = arith.constant dense<0.000000e+00> : vector<1xf32>
    %38 = vector.multi_reduction <add>, %37, %cst_38 [1, 2] : vector<1x512x128xf32> to vector<1xf32>
    %39 = vector.shape_cast %38 : vector<1xf32> to vector<1x1x1xf32>
    %40 = vector.extract %39[0, 0, 0] : f32 from vector<1x1x1xf32>
    %41 = vector.broadcast %40 : f32 to vector<1x1xf32>
    %cst_39 = arith.constant 4.8828125E-4 : f32
    %42 = vector.broadcast %cst_39 : f32 to vector<1x1xf32>
    %43 = arith.mulf %41, %42 : vector<1x1xf32>
    %c0_40 = arith.constant 0 : index
    %c0_41 = arith.constant 0 : index
    %44 = vector.load %arg7[%c0_40, %c0_41] : memref<1x1xf32, #tpu.memory_space<vmem>>, vector<1x1xf32>
    tpu.vector_store %arg7[%c0_40, %c0_41], %43 {strides = array<i32>} : memref<1x1xf32, #tpu.memory_space<vmem>>, vector<1x1xf32>,
    %45 = arith.truncf %35 : vector<512x128xf32> to vector<512x128xbf16>
    %cst_42 = arith.constant dense<0.000000e+00> : vector<128x128xf32>
    %46 = tpu.matmul %28, %45, %cst_42 {dimension_numbers = #tpu.dot_dimension_numbers<[0], [0], [1], [1], [0, 1, 1, 1], [], []>} : vector<512x128xbf16>, vector<512x128xbf16>, vector<128x128xf32> -> vector<128x128xf32>
    %cst_43 = arith.constant 9.765625E-4 : f32
    %47 = vector.broadcast %cst_43 : f32 to vector<128x128xf32>
    %48 = arith.mulf %47, %46 : vector<128x128xf32>
    %cst_44 = arith.constant dense<0.000000e+00> : vector<512x128xf32>
    %49 = tpu.matmul %45, %24, %cst_44 {dimension_numbers = #tpu.dot_dimension_numbers<[1], [1], [0], [0], [0, 0, 1, 0], [], []>} : vector<512x128xbf16>, vector<128x128xbf16>, vector<512x128xf32> -> vector<512x128xf32>
    %cst_45 = arith.constant 0.000000e+00 : bf16
    %50 = vector.broadcast %cst_45 : bf16 to vector<512x128xbf16>
    %51 = arith.cmpf ogt, %28, %50 : vector<512x128xbf16>
    %cst_46 = arith.constant 0.000000e+00 : f32
    %52 = vector.broadcast %cst_46 : f32 to vector<512x128xf32>
    %53 = arith.select %51, %49, %52 : vector<512x128xi1>, vector<512x128xf32>
    %54 = arith.truncf %53 : vector<512x128xf32> to vector<512x128xbf16>
    %cst_47 = arith.constant dense<0.000000e+00> : vector<256x128xf32>
    %55 = tpu.matmul %19, %54, %cst_47 {dimension_numbers = #tpu.dot_dimension_numbers<[0], [0], [1], [1], [0, 1, 1, 1], [], []>} : vector<512x256xbf16>, vector<512x128xbf16>, vector<256x128xf32> -> vector<256x128xf32>
    %cst_48 = arith.constant 9.765625E-4 : f32
    %56 = vector.broadcast %cst_48 : f32 to vector<256x128xf32>
    %57 = arith.mulf %56, %55 : vector<256x128xf32>
    %58 = vector.extract_strided_slice %57 {offsets = [0, 0], sizes = [128, 128], strides = [1, 1]} : vector<256x128xf32> to vector<128x128xf32>
    %59 = vector.extract_strided_slice %57 {offsets = [128, 0], sizes = [128, 128], strides = [1, 1]} : vector<256x128xf32> to vector<128x128xf32>
    %c0_49 = arith.constant 0 : index
    %60 = memref.load %arg6[%c0_49] : memref<2xf32, #tpu.memory_space<smem>>
    %c1_50 = arith.constant 1 : index
    %61 = memref.load %arg6[%c1_50] : memref<2xf32, #tpu.memory_space<smem>>
    %c0_51 = arith.constant 0 : index
    %c0_52 = arith.constant 0 : index
    %c0_53 = arith.constant 0 : index
    %62 = vector.load %arg4[%c0_51, %c0_52, %c0_53] : memref<3x128x128xf32, #tpu.memory_space<vmem>>, vector<1x128x128xf32>
    %63 = vector.shape_cast %62 : vector<1x128x128xf32> to vector<128x128xf32>
    %cst_54 = arith.constant 0.899999976 : f32
    %64 = vector.broadcast %cst_54 : f32 to vector<128x128xf32>
    %65 = arith.mulf %64, %63 : vector<128x128xf32>
    %cst_55 = arith.constant 1.000000e-01 : f32
    %66 = vector.broadcast %cst_55 : f32 to vector<128x128xf32>
    %67 = arith.mulf %66, %58 : vector<128x128xf32>
    %68 = arith.addf %65, %67 : vector<128x128xf32>
    %c0_56 = arith.constant 0 : index
    %c0_57 = arith.constant 0 : index
    %c0_58 = arith.constant 0 : index
    %69 = vector.load %arg5[%c0_56, %c0_57, %c0_58] : memref<3x128x128xf32, #tpu.memory_space<vmem>>, vector<1x128x128xf32>
    %70 = vector.shape_cast %69 : vector<1x128x128xf32> to vector<128x128xf32>
    %cst_59 = arith.constant 9.900000e-01 : f32
    %71 = vector.broadcast %cst_59 : f32 to vector<128x128xf32>
    %72 = arith.mulf %71, %70 : vector<128x128xf32>
    %73 = arith.mulf %58, %58 : vector<128x128xf32>
    %cst_60 = arith.constant 0.00999999977 : f32
    %74 = vector.broadcast %cst_60 : f32 to vector<128x128xf32>
    %75 = arith.mulf %74, %73 : vector<128x128xf32>
    %76 = arith.addf %72, %75 : vector<128x128xf32>
    %77 = vector.broadcast %60 : f32 to vector<128x128xf32>
    %78 = arith.mulf %68, %77 : vector<128x128xf32>
    %79 = vector.broadcast %61 : f32 to vector<128x128xf32>
    %80 = arith.mulf %76, %79 : vector<128x128xf32>
    %81 = math.sqrt %80 : vector<128x128xf32>
    %cst_61 = arith.constant 9.99999993E-9 : f32
    %82 = vector.broadcast %cst_61 : f32 to vector<128x128xf32>
    %83 = arith.addf %81, %82 : vector<128x128xf32>
    %c0_62 = arith.constant 0 : index
    %c0_63 = arith.constant 0 : index
    %c0_64 = arith.constant 0 : index
    %84 = vector.load %arg3[%c0_62, %c0_63, %c0_64] : memref<3x128x128xf32, #tpu.memory_space<vmem>>, vector<1x128x128xf32>
    %85 = vector.shape_cast %84 : vector<1x128x128xf32> to vector<128x128xf32>
    %cst_65 = arith.constant 9.99999974E-5 : f32
    %86 = vector.broadcast %cst_65 : f32 to vector<128x128xf32>
    %87 = arith.mulf %86, %78 : vector<128x128xf32>
    %88 = tpu.reciprocal %83 {approx = true} : vector<128x128xf32> -> vector<128x128xf32>
    %89 = arith.mulf %87, %88 : vector<128x128xf32>
    %90 = arith.subf %85, %89 : vector<128x128xf32>
    %c0_66 = arith.constant 0 : index
    %c0_67 = arith.constant 0 : index
    %c0_68 = arith.constant 0 : index
    %91 = vector.load %arg8[%c0_66, %c0_67, %c0_68] : memref<3x128x128xf32, #tpu.memory_space<vmem>>, vector<1x128x128xf32>
    %92 = vector.shape_cast %91 : vector<1x128x128xf32> to vector<128x128xf32>
    %93 = vector.shape_cast %90 : vector<128x128xf32> to vector<1x128x128xf32>
    tpu.vector_store %arg8[%c0_66, %c0_67, %c0_68], %93 {strides = array<i32>} : memref<3x128x128xf32, #tpu.memory_space<vmem>>, vector<1x128x128xf32>,
    %c0_69 = arith.constant 0 : index
    %c0_70 = arith.constant 0 : index
    %c0_71 = arith.constant 0 : index
    %94 = vector.load %arg9[%c0_69, %c0_70, %c0_71] : memref<3x128x128xf32, #tpu.memory_space<vmem>>, vector<1x128x128xf32>
    %95 = vector.shape_cast %94 : vector<1x128x128xf32> to vector<128x128xf32>
    %96 = vector.shape_cast %68 : vector<128x128xf32> to vector<1x128x128xf32>
    tpu.vector_store %arg9[%c0_69, %c0_70, %c0_71], %96 {strides = array<i32>} : memref<3x128x128xf32, #tpu.memory_space<vmem>>, vector<1x128x128xf32>,
    %c0_72 = arith.constant 0 : index
    %c0_73 = arith.constant 0 : index
    %c0_74 = arith.constant 0 : index
    %97 = vector.load %arg10[%c0_72, %c0_73, %c0_74] : memref<3x128x128xf32, #tpu.memory_space<vmem>>, vector<1x128x128xf32>
    %98 = vector.shape_cast %97 : vector<1x128x128xf32> to vector<128x128xf32>
    %99 = vector.shape_cast %76 : vector<128x128xf32> to vector<1x128x128xf32>
    tpu.vector_store %arg10[%c0_72, %c0_73, %c0_74], %99 {strides = array<i32>} : memref<3x128x128xf32, #tpu.memory_space<vmem>>, vector<1x128x128xf32>,
    %c1_75 = arith.constant 1 : index
    %c0_76 = arith.constant 0 : index
    %c0_77 = arith.constant 0 : index
    %100 = vector.load %arg4[%c1_75, %c0_76, %c0_77] : memref<3x128x128xf32, #tpu.memory_space<vmem>>, vector<1x128x128xf32>
    %101 = vector.shape_cast %100 : vector<1x128x128xf32> to vector<128x128xf32>
    %cst_78 = arith.constant 0.899999976 : f32
    %102 = vector.broadcast %cst_78 : f32 to vector<128x128xf32>
    %103 = arith.mulf %102, %101 : vector<128x128xf32>
    %cst_79 = arith.constant 1.000000e-01 : f32
    %104 = vector.broadcast %cst_79 : f32 to vector<128x128xf32>
    %105 = arith.mulf %104, %48 : vector<128x128xf32>
    %106 = arith.addf %103, %105 : vector<128x128xf32>
    %c1_80 = arith.constant 1 : index
    %c0_81 = arith.constant 0 : index
    %c0_82 = arith.constant 0 : index
    %107 = vector.load %arg5[%c1_80, %c0_81, %c0_82] : memref<3x128x128xf32, #tpu.memory_space<vmem>>, vector<1x128x128xf32>
    %108 = vector.shape_cast %107 : vector<1x128x128xf32> to vector<128x128xf32>
    %cst_83 = arith.constant 9.900000e-01 : f32
    %109 = vector.broadcast %cst_83 : f32 to vector<128x128xf32>
    %110 = arith.mulf %109, %108 : vector<128x128xf32>
    %111 = arith.mulf %48, %48 : vector<128x128xf32>
    %cst_84 = arith.constant 0.00999999977 : f32
    %112 = vector.broadcast %cst_84 : f32 to vector<128x128xf32>
    %113 = arith.mulf %112, %111 : vector<128x128xf32>
    %114 = arith.addf %110, %113 : vector<128x128xf32>
    %115 = vector.broadcast %60 : f32 to vector<128x128xf32>
    %116 = arith.mulf %106, %115 : vector<128x128xf32>
    %117 = vector.broadcast %61 : f32 to vector<128x128xf32>
    %118 = arith.mulf %114, %117 : vector<128x128xf32>
    %119 = math.sqrt %118 : vector<128x128xf32>
    %cst_85 = arith.constant 9.99999993E-9 : f32
    %120 = vector.broadcast %cst_85 : f32 to vector<128x128xf32>
    %121 = arith.addf %119, %120 : vector<128x128xf32>
    %c1_86 = arith.constant 1 : index
    %c0_87 = arith.constant 0 : index
    %c0_88 = arith.constant 0 : index
    %122 = vector.load %arg3[%c1_86, %c0_87, %c0_88] : memref<3x128x128xf32, #tpu.memory_space<vmem>>, vector<1x128x128xf32>
    %123 = vector.shape_cast %122 : vector<1x128x128xf32> to vector<128x128xf32>
    %cst_89 = arith.constant 9.99999974E-5 : f32
    %124 = vector.broadcast %cst_89 : f32 to vector<128x128xf32>
    %125 = arith.mulf %124, %116 : vector<128x128xf32>
    %126 = tpu.reciprocal %121 {approx = true} : vector<128x128xf32> -> vector<128x128xf32>
    %127 = arith.mulf %125, %126 : vector<128x128xf32>
    %128 = arith.subf %123, %127 : vector<128x128xf32>
    %c1_90 = arith.constant 1 : index
    %c0_91 = arith.constant 0 : index
    %c0_92 = arith.constant 0 : index
    %129 = vector.load %arg8[%c1_90, %c0_91, %c0_92] : memref<3x128x128xf32, #tpu.memory_space<vmem>>, vector<1x128x128xf32>
    %130 = vector.shape_cast %129 : vector<1x128x128xf32> to vector<128x128xf32>
    %131 = vector.shape_cast %128 : vector<128x128xf32> to vector<1x128x128xf32>
    tpu.vector_store %arg8[%c1_90, %c0_91, %c0_92], %131 {strides = array<i32>} : memref<3x128x128xf32, #tpu.memory_space<vmem>>, vector<1x128x128xf32>,
    %c1_93 = arith.constant 1 : index
    %c0_94 = arith.constant 0 : index
    %c0_95 = arith.constant 0 : index
    %132 = vector.load %arg9[%c1_93, %c0_94, %c0_95] : memref<3x128x128xf32, #tpu.memory_space<vmem>>, vector<1x128x128xf32>
    %133 = vector.shape_cast %132 : vector<1x128x128xf32> to vector<128x128xf32>
    %134 = vector.shape_cast %106 : vector<128x128xf32> to vector<1x128x128xf32>
    tpu.vector_store %arg9[%c1_93, %c0_94, %c0_95], %134 {strides = array<i32>} : memref<3x128x128xf32, #tpu.memory_space<vmem>>, vector<1x128x128xf32>,
    %c1_96 = arith.constant 1 : index
    %c0_97 = arith.constant 0 : index
    %c0_98 = arith.constant 0 : index
    %135 = vector.load %arg10[%c1_96, %c0_97, %c0_98] : memref<3x128x128xf32, #tpu.memory_space<vmem>>, vector<1x128x128xf32>
    %136 = vector.shape_cast %135 : vector<1x128x128xf32> to vector<128x128xf32>
    %137 = vector.shape_cast %114 : vector<128x128xf32> to vector<1x128x128xf32>
    tpu.vector_store %arg10[%c1_96, %c0_97, %c0_98], %137 {strides = array<i32>} : memref<3x128x128xf32, #tpu.memory_space<vmem>>, vector<1x128x128xf32>,
    %c2_99 = arith.constant 2 : index
    %c0_100 = arith.constant 0 : index
    %c0_101 = arith.constant 0 : index
    %138 = vector.load %arg4[%c2_99, %c0_100, %c0_101] : memref<3x128x128xf32, #tpu.memory_space<vmem>>, vector<1x128x128xf32>
    %139 = vector.shape_cast %138 : vector<1x128x128xf32> to vector<128x128xf32>
    %cst_102 = arith.constant 0.899999976 : f32
    %140 = vector.broadcast %cst_102 : f32 to vector<128x128xf32>
    %141 = arith.mulf %140, %139 : vector<128x128xf32>
    %cst_103 = arith.constant 1.000000e-01 : f32
    %142 = vector.broadcast %cst_103 : f32 to vector<128x128xf32>
    %143 = arith.mulf %142, %59 : vector<128x128xf32>
    %144 = arith.addf %141, %143 : vector<128x128xf32>
    %c2_104 = arith.constant 2 : index
    %c0_105 = arith.constant 0 : index
    %c0_106 = arith.constant 0 : index
    %145 = vector.load %arg5[%c2_104, %c0_105, %c0_106] : memref<3x128x128xf32, #tpu.memory_space<vmem>>, vector<1x128x128xf32>
    %146 = vector.shape_cast %145 : vector<1x128x128xf32> to vector<128x128xf32>
    %cst_107 = arith.constant 9.900000e-01 : f32
    %147 = vector.broadcast %cst_107 : f32 to vector<128x128xf32>
    %148 = arith.mulf %147, %146 : vector<128x128xf32>
    %149 = arith.mulf %59, %59 : vector<128x128xf32>
    %cst_108 = arith.constant 0.00999999977 : f32
    %150 = vector.broadcast %cst_108 : f32 to vector<128x128xf32>
    %151 = arith.mulf %150, %149 : vector<128x128xf32>
    %152 = arith.addf %148, %151 : vector<128x128xf32>
    %153 = vector.broadcast %60 : f32 to vector<128x128xf32>
    %154 = arith.mulf %144, %153 : vector<128x128xf32>
    %155 = vector.broadcast %61 : f32 to vector<128x128xf32>
    %156 = arith.mulf %152, %155 : vector<128x128xf32>
    %157 = math.sqrt %156 : vector<128x128xf32>
    %cst_109 = arith.constant 9.99999993E-9 : f32
    %158 = vector.broadcast %cst_109 : f32 to vector<128x128xf32>
    %159 = arith.addf %157, %158 : vector<128x128xf32>
    %c2_110 = arith.constant 2 : index
    %c0_111 = arith.constant 0 : index
    %c0_112 = arith.constant 0 : index
    %160 = vector.load %arg3[%c2_110, %c0_111, %c0_112] : memref<3x128x128xf32, #tpu.memory_space<vmem>>, vector<1x128x128xf32>
    %161 = vector.shape_cast %160 : vector<1x128x128xf32> to vector<128x128xf32>
    %cst_113 = arith.constant 9.99999974E-5 : f32
    %162 = vector.broadcast %cst_113 : f32 to vector<128x128xf32>
    %163 = arith.mulf %162, %154 : vector<128x128xf32>
    %164 = tpu.reciprocal %159 {approx = true} : vector<128x128xf32> -> vector<128x128xf32>
    %165 = arith.mulf %163, %164 : vector<128x128xf32>
    %166 = arith.subf %161, %165 : vector<128x128xf32>
    %c2_114 = arith.constant 2 : index
    %c0_115 = arith.constant 0 : index
    %c0_116 = arith.constant 0 : index
    %167 = vector.load %arg8[%c2_114, %c0_115, %c0_116] : memref<3x128x128xf32, #tpu.memory_space<vmem>>, vector<1x128x128xf32>
    %168 = vector.shape_cast %167 : vector<1x128x128xf32> to vector<128x128xf32>
    %169 = vector.shape_cast %166 : vector<128x128xf32> to vector<1x128x128xf32>
    tpu.vector_store %arg8[%c2_114, %c0_115, %c0_116], %169 {strides = array<i32>} : memref<3x128x128xf32, #tpu.memory_space<vmem>>, vector<1x128x128xf32>,
    %c2_117 = arith.constant 2 : index
    %c0_118 = arith.constant 0 : index
    %c0_119 = arith.constant 0 : index
    %170 = vector.load %arg9[%c2_117, %c0_118, %c0_119] : memref<3x128x128xf32, #tpu.memory_space<vmem>>, vector<1x128x128xf32>
    %171 = vector.shape_cast %170 : vector<1x128x128xf32> to vector<128x128xf32>
    %172 = vector.shape_cast %144 : vector<128x128xf32> to vector<1x128x128xf32>
    tpu.vector_store %arg9[%c2_117, %c0_118, %c0_119], %172 {strides = array<i32>} : memref<3x128x128xf32, #tpu.memory_space<vmem>>, vector<1x128x128xf32>,
    %c2_120 = arith.constant 2 : index
    %c0_121 = arith.constant 0 : index
    %c0_122 = arith.constant 0 : index
    %173 = vector.load %arg10[%c2_120, %c0_121, %c0_122] : memref<3x128x128xf32, #tpu.memory_space<vmem>>, vector<1x128x128xf32>
    %174 = vector.shape_cast %173 : vector<1x128x128xf32> to vector<128x128xf32>
    %175 = vector.shape_cast %152 : vector<128x128xf32> to vector<1x128x128xf32>
    tpu.vector_store %arg10[%c2_120, %c0_121, %c0_122], %175 {strides = array<i32>} : memref<3x128x128xf32, #tpu.memory_space<vmem>>, vector<1x128x128xf32>,
    return
  }
}

</mosaic_0001>

<llo_original>
// kernel: train_step.1
$region0: #{train_step.1}
  #allocation0 [shape = 'u32[]', space=smem, size = 0x4, offset = 0x4, fixed_abs, tag = 'smem constant byte address 0x4 - core index']
  #allocation1 [shape = 'u32[144,128]{1,0:T(1,128)}', space=vmem, size = 0x12000, scoped, tag = 'internal scratch']
  #allocation2 [shape = 'f32[512,256]{1,0:T(8,128)}', space=vmem, size = 0x80000, scoped, tag = 'scratch operand']
  #allocation3 [shape = 'f32[512,128]{1,0:T(8,128)}', space=vmem, size = 0x40000, scoped, tag = 'scratch operand']
  #allocation4 [shape = 'f32[256,128]{1,0:T(8,128)}', space=vmem, size = 0x20000, scoped, tag = 'scratch operand']
  %s0 = inlined_call_operand.vmem [shape: f32[512,4], index: 0, kind: input, shape index: {}]
  %s1 = inlined_call_operand.vmem [shape: f32[512,4], index: 1, kind: input, shape index: {}]
  %s2 = inlined_call_operand.vmem [shape: f32[2,8], index: 2, kind: input, shape index: {}]
  %s3 = inlined_call_operand.vmem [shape: f32[3,128,128], index: 3, kind: input, shape index: {}, may-alias: {3,8}]
  %s4 = inlined_call_operand.vmem [shape: f32[3,128,128], index: 4, kind: input, shape index: {}, may-alias: {4,9}]
  %s5 = inlined_call_operand.vmem [shape: f32[3,128,128], index: 5, kind: input, shape index: {}, may-alias: {5,10}]
  %s6 = inlined_call_operand.vmem [shape: f32[2], index: 6, kind: input, shape index: {}]
  %s7 = inlined_call_operand.hbm [shape: f32[1,1], index: 7, kind: output, shape index: {0}]
  %s8 = inlined_call_operand.vmem [shape: f32[3,128,128], index: 8, kind: output, shape index: {1}, may-alias: {3,8}]
  %s9 = inlined_call_operand.vmem [shape: f32[3,128,128], index: 9, kind: output, shape index: {2}, may-alias: {4,9}]
  %s10 = inlined_call_operand.vmem [shape: f32[3,128,128], index: 10, kind: output, shape index: {3}, may-alias: {5,10}]
  %11 = xla_tuple %s7, %s8, %s9, %s10
  %s12 = sld [smem:[#allocation0]]
  $region66: #{train_step.1} parent=0
    _
  %s14 = ssub.s32 1, %s12
  %s15 = scalar_select 0, %s14, %s12
  $region1: #{train_step.1} parent=0
    #allocation5 [shape = 'u8[512]{0}', space=smem, size = 0x200, scoped, tag = 'input window, operand 6, single buffered']
    #allocation6 [shape = 's32[1]{0}', space=sflag, size = 0x4, scoped, tag = 'scoped memory for train_step.1']
    #allocation7 [shape = 's32[1]{0}', space=sflag, size = 0x4, scoped, tag = 'scoped memory for train_step.1']
    #allocation8 [shape = 'u8[512]{0}', space=vmem, size = 0x400, scoped, tag = 'output window, operand 0, single buffered']
    %16 = vsyncpa [#allocation7], 0
    %17 = vsyncpa [#allocation6], 0
    // Predicated region
    $region2: #{train_step.1} parent=1 // pred_check
      _
    $region3: #{train_step.1} parent=1 // pred_check_branch
      %19 = sbr.rel (0) target = $region5
    $region4: #{train_step.1} parent=1 // pred_region
      _
    $region5: #{train_step.1} parent=1 // pred_fallthru
      _
    // Predicated region
    $region6: #{train_step.1} parent=1 // pred_check
      _
    $region7: #{train_step.1} parent=1 // pred_check_branch
      %21 = sbr.rel (0) target = $region9
    $region8: #{train_step.1} parent=1 // pred_region
      _
    $region9: #{train_step.1} parent=1 // pred_fallthru
      _
    // Predicated region
    $region10: #{train_step.1} parent=1 // pred_check
      _
    $region11: #{train_step.1} parent=1 // pred_check_branch
      %23 = sbr.rel (0) target = $region13
    $region12: #{train_step.1} parent=1 // pred_region
      _
    $region13: #{train_step.1} parent=1 // pred_fallthru
      _
    // Predicated region
    $region14: #{train_step.1} parent=1 // pred_check
      _
    $region15: #{train_step.1} parent=1 // pred_check_branch
      %25 = sbr.rel (0) target = $region17
    $region16: #{train_step.1} parent=1 // pred_region
      _
    $region17: #{train_step.1} parent=1 // pred_fallthru
      _
    // Predicated region
    $region18: #{train_step.1} parent=1 // pred_check
      _
    $region19: #{train_step.1} parent=1 // pred_check_branch
      %27 = sbr.rel (0) target = $region21
    $region20: #{train_step.1} parent=1 // pred_region
      _
    $region21: #{train_step.1} parent=1 // pred_fallthru
      _
    // Predicated region
    $region22: #{train_step.1} parent=1 // pred_check
      _
    $region23: #{train_step.1} parent=1 // pred_check_branch
      %29 = sbr.rel (0) target = $region25
    $region24: #{train_step.1} parent=1 // pred_region
      _
    $region25: #{train_step.1} parent=1 // pred_fallthru
      _
    // Predicated region
    $region26: #{train_step.1} parent=1 // pred_check
      _
    $region27: #{train_step.1} parent=1 // pred_check_branch
      %31 = sbr.rel (0) target = $region29
    $region28: #{train_step.1} parent=1 // pred_region
      %s33 = ssub.s32 16, 16
      %34 = vsyncadd [#allocation7], %s33
      %s36 = sshll.u32 %s6, 4
      %s37 = int_to_ptr.vmem [resolvable:$true] %s36
      %39 = dma.vmem_to_smem %s37, 16, [#allocation5], [#allocation7]
    $region29: #{train_step.1} parent=1 // pred_fallthru
      _
    // Predicated region
    $region30: #{train_step.1} parent=1 // pred_check
      _
    $region31: #{train_step.1} parent=1 // pred_check_branch
      %41 = sbr.rel (0) target = $region33
    $region32: #{train_step.1} parent=1 // pred_region
      %42 = dma.done [#allocation7], 16
    $region33: #{train_step.1} parent=1 // pred_fallthru
      _
    %43 = sfence
    %47 = vst [vmem:[#allocation2] sm:$0xff] 0.0
    %48 = vst [vmem:[#allocation2 + $0x8] sm:$0xff] 0.0
    %49 = vst [vmem:[#allocation2 + $0x10] sm:$0xff] 0.0
    %50 = vst [vmem:[#allocation2 + $0x18] sm:$0xff] 0.0
    %51 = vst [vmem:[#allocation2 + $0x20] sm:$0xff] 0.0
    %52 = vst [vmem:[#allocation2 + $0x28] sm:$0xff] 0.0
    %53 = vst [vmem:[#allocation2 + $0x30] sm:$0xff] 0.0
    %54 = vst [vmem:[#allocation2 + $0x38] sm:$0xff] 0.0
    %55 = vst [vmem:[#allocation2 + $0x40] sm:$0xff] 0.0
    %56 = vst [vmem:[#allocation2 + $0x48] sm:$0xff] 0.0
    %57 = vst [vmem:[#allocation2 + $0x50] sm:$0xff] 0.0
    %58 = vst [vmem:[#allocation2 + $0x58] sm:$0xff] 0.0
    %59 = vst [vmem:[#allocation2 + $0x60] sm:$0xff] 0.0
    %60 = vst [vmem:[#allocation2 + $0x68] sm:$0xff] 0.0
    %61 = vst [vmem:[#allocation2 + $0x70] sm:$0xff] 0.0
    %62 = vst [vmem:[#allocation2 + $0x78] sm:$0xff] 0.0
    %63 = vst [vmem:[#allocation2 + $0x80] sm:$0xff] 0.0
    %64 = vst [vmem:[#allocation2 + $0x88] sm:$0xff] 0.0
    %65 = vst [vmem:[#allocation2 + $0x90] sm:$0xff] 0.0
    %66 = vst [vmem:[#allocation2 + $0x98] sm:$0xff] 0.0
    %67 = vst [vmem:[#allocation2 + $0xa0] sm:$0xff] 0.0
    %68 = vst [vmem:[#allocation2 + $0xa8] sm:$0xff] 0.0
    %69 = vst [vmem:[#allocation2 + $0xb0] sm:$0xff] 0.0
    %70 = vst [vmem:[#allocation2 + $0xb8] sm:$0xff] 0.0
    %71 = vst [vmem:[#allocation2 + $0xc0] sm:$0xff] 0.0
    %72 = vst [vmem:[#allocation2 + $0xc8] sm:$0xff] 0.0
    %73 = vst [vmem:[#allocation2 + $0xd0] sm:$0xff] 0.0
    %74 = vst [vmem:[#allocation2 + $0xd8] sm:$0xff] 0.0
    %75 = vst [vmem:[#allocation2 + $0xe0] sm:$0xff] 0.0
    %76 = vst [vmem:[#allocation2 + $0xe8] sm:$0xff] 0.0
    %77 = vst [vmem:[#allocation2 + $0xf0] sm:$0xff] 0.0
    %78 = vst [vmem:[#allocation2 + $0xf8] sm:$0xff] 0.0
    %79 = vst [vmem:[#allocation2 + $0x100] sm:$0xff] 0.0
    %80 = vst [vmem:[#allocation2 + $0x108] sm:$0xff] 0.0
    %81 = vst [vmem:[#allocation2 + $0x110] sm:$0xff] 0.0
    %82 = vst [vmem:[#allocation2 + $0x118] sm:$0xff] 0.0
    %83 = vst [vmem:[#allocation2 + $0x120] sm:$0xff] 0.0
    %84 = vst [vmem:[#allocation2 + $0x128] sm:$0xff] 0.0
    %85 = vst [vmem:[#allocation2 + $0x130] sm:$0xff] 0.0
    %86 = vst [vmem:[#allocation2 + $0x138] sm:$0xff] 0.0
    %87 = vst [vmem:[#allocation2 + $0x140] sm:$0xff] 0.0
    %88 = vst [vmem:[#allocation2 + $0x148] sm:$0xff] 0.0
    %89 = vst [vmem:[#allocation2 + $0x150] sm:$0xff] 0.0
    %90 = vst [vmem:[#allocation2 + $0x158] sm:$0xff] 0.0
    %91 = vst [vmem:[#allocation2 + $0x160] sm:$0xff] 0.0
    %92 = vst [vmem:[#allocation2 + $0x168] sm:$0xff] 0.0
    %93 = vst [vmem:[#allocation2 + $0x170] sm:$0xff] 0.0
    %94 = vst [vmem:[#allocation2 + $0x178] sm:$0xff] 0.0
    %95 = vst [vmem:[#allocation2 + $0x180] sm:$0xff] 0.0
    %96 = vst [vmem:[#allocation2 + $0x188] sm:$0xff] 0.0
    %97 = vst [vmem:[#allocation2 + $0x190] sm:$0xff] 0.0
    %98 = vst [vmem:[#allocation2 + $0x198] sm:$0xff] 0.0
    %99 = vst [vmem:[#allocation2 + $0x1a0] sm:$0xff] 0.0
    %100 = vst [vmem:[#allocation2 + $0x1a8] sm:$0xff] 0.0
    %101 = vst [vmem:[#allocation2 + $0x1b0] sm:$0xff] 0.0
    %102 = vst [vmem:[#allocation2 + $0x1b8] sm:$0xff] 0.0
    %103 = vst [vmem:[#allocation2 + $0x1c0] sm:$0xff] 0.0
    %104 = vst [vmem:[#allocation2 + $0x1c8] sm:$0xff] 0.0
    %105 = vst [vmem:[#allocation2 + $0x1d0] sm:$0xff] 0.0
    %106 = vst [vmem:[#allocation2 + $0x1d8] sm:$0xff] 0.0
    %107 = vst [vmem:[#allocation2 + $0x1e0] sm:$0xff] 0.0
    %108 = vst [vmem:[#allocation2 + $0x1e8] sm:$0xff] 0.0
    %109 = vst [vmem:[#allocation2 + $0x1f0] sm:$0xff] 0.0
    %110 = vst [vmem:[#allocation2 + $0x1f8] sm:$0xff] 0.0
    %111 = vst [vmem:[#allocation2 + $0x200] sm:$0xff] 0.0
    %112 = vst [vmem:[#allocation2 + $0x208] sm:$0xff] 0.0
    %113 = vst [vmem:[#allocation2 + $0x210] sm:$0xff] 0.0
    %114 = vst [vmem:[#allocation2 + $0x218] sm:$0xff] 0.0
    %115 = vst [vmem:[#allocation2 + $0x220] sm:$0xff] 0.0
    %116 = vst [vmem:[#allocation2 + $0x228] sm:$0xff] 0.0
    %117 = vst [vmem:[#allocation2 + $0x230] sm:$0xff] 0.0
    %118 = vst [vmem:[#allocation2 + $0x238] sm:$0xff] 0.0
    %119 = vst [vmem:[#allocation2 + $0x240] sm:$0xff] 0.0
    %120 = vst [vmem:[#allocation2 + $0x248] sm:$0xff] 0.0
    %121 = vst [vmem:[#allocation2 + $0x250] sm:$0xff] 0.0
    %122 = vst [vmem:[#allocation2 + $0x258] sm:$0xff] 0.0
    %123 = vst [vmem:[#allocation2 + $0x260] sm:$0xff] 0.0
    %124 = vst [vmem:[#allocation2 + $0x268] sm:$0xff] 0.0
    %125 = vst [vmem:[#allocation2 + $0x270] sm:$0xff] 0.0
    %126 = vst [vmem:[#allocation2 + $0x278] sm:$0xff] 0.0
    %127 = vst [vmem:[#allocation2 + $0x280] sm:$0xff] 0.0
    %128 = vst [vmem:[#allocation2 + $0x288] sm:$0xff] 0.0
    %129 = vst [vmem:[#allocation2 + $0x290] sm:$0xff] 0.0
    %130 = vst [vmem:[#allocation2 + $0x298] sm:$0xff] 0.0
    %131 = vst [vmem:[#allocation2 + $0x2a0] sm:$0xff] 0.0
    %132 = vst [vmem:[#allocation2 + $0x2a8] sm:$0xff] 0.0
    %133 = vst [vmem:[#allocation2 + $0x2b0] sm:$0xff] 0.0
    %134 = vst [vmem:[#allocation2 + $0x2b8] sm:$0xff] 0.0
    %135 = vst [vmem:[#allocation2 + $0x2c0] sm:$0xff] 0.0
    %136 = vst [vmem:[#allocation2 + $0x2c8] sm:$0xff] 0.0
    %137 = vst [vmem:[#allocation2 + $0x2d0] sm:$0xff] 0.0
    %138 = vst [vmem:[#allocation2 + $0x2d8] sm:$0xff] 0.0
    %139 = vst [vmem:[#allocation2 + $0x2e0] sm:$0xff] 0.0
    %140 = vst [vmem:[#allocation2 + $0x2e8] sm:$0xff] 0.0
    %141 = vst [vmem:[#allocation2 + $0x2f0] sm:$0xff] 0.0
    %142 = vst [vmem:[#allocation2 + $0x2f8] sm:$0xff] 0.0
    %143 = vst [vmem:[#allocation2 + $0x300] sm:$0xff] 0.0
    %144 = vst [vmem:[#allocation2 + $0x308] sm:$0xff] 0.0
    %145 = vst [vmem:[#allocation2 + $0x310] sm:$0xff] 0.0
    %146 = vst [vmem:[#allocation2 + $0x318] sm:$0xff] 0.0
    %147 = vst [vmem:[#allocation2 + $0x320] sm:$0xff] 0.0
    %148 = vst [vmem:[#allocation2 + $0x328] sm:$0xff] 0.0
    %149 = vst [vmem:[#allocation2 + $0x330] sm:$0xff] 0.0
    %150 = vst [vmem:[#allocation2 + $0x338] sm:$0xff] 0.0
    %151 = vst [vmem:[#allocation2 + $0x340] sm:$0xff] 0.0
    %152 = vst [vmem:[#allocation2 + $0x348] sm:$0xff] 0.0
    %153 = vst [vmem:[#allocation2 + $0x350] sm:$0xff] 0.0
    %154 = vst [vmem:[#allocation2 + $0x358] sm:$0xff] 0.0
    %155 = vst [vmem:[#allocation2 + $0x360] sm:$0xff] 0.0
    %156 = vst [vmem:[#allocation2 + $0x368] sm:$0xff] 0.0
    %157 = vst [vmem:[#allocation2 + $0x370] sm:$0xff] 0.0
    %158 = vst [vmem:[#allocation2 + $0x378] sm:$0xff] 0.0
    %159 = vst [vmem:[#allocation2 + $0x380] sm:$0xff] 0.0
    %160 = vst [vmem:[#allocation2 + $0x388] sm:$0xff] 0.0
    %161 = vst [vmem:[#allocation2 + $0x390] sm:$0xff] 0.0
    %162 = vst [vmem:[#allocation2 + $0x398] sm:$0xff] 0.0
    %163 = vst [vmem:[#allocation2 + $0x3a0] sm:$0xff] 0.0
    %164 = vst [vmem:[#allocation2 + $0x3a8] sm:$0xff] 0.0
    %165 = vst [vmem:[#allocation2 + $0x3b0] sm:$0xff] 0.0
    %166 = vst [vmem:[#allocation2 + $0x3b8] sm:$0xff] 0.0
    %167 = vst [vmem:[#allocation2 + $0x3c0] sm:$0xff] 0.0
    %168 = vst [vmem:[#allocation2 + $0x3c8] sm:$0xff] 0.0
    %169 = vst [vmem:[#allocation2 + $0x3d0] sm:$0xff] 0.0
    %170 = vst [vmem:[#allocation2 + $0x3d8] sm:$0xff] 0.0
    %171 = vst [vmem:[#allocation2 + $0x3e0] sm:$0xff] 0.0
    %172 = vst [vmem:[#allocation2 + $0x3e8] sm:$0xff] 0.0
    %173 = vst [vmem:[#allocation2 + $0x3f0] sm:$0xff] 0.0
    %174 = vst [vmem:[#allocation2 + $0x3f8] sm:$0xff] 0.0
    %v175 = vld [vmem:[%s0] sm:$0xff]
    %v176 = vld [vmem:[%s0 + $0x8] sm:$0xff]
    %v177 = vld [vmem:[%s0 + $0x10] sm:$0xff]
    %v178 = vld [vmem:[%s0 + $0x18] sm:$0xff]
    %v179 = vld [vmem:[%s0 + $0x20] sm:$0xff]
    %v180 = vld [vmem:[%s0 + $0x28] sm:$0xff]
    %v181 = vld [vmem:[%s0 + $0x30] sm:$0xff]
    %v182 = vld [vmem:[%s0 + $0x38] sm:$0xff]
    %v183 = vld [vmem:[%s0 + $0x40] sm:$0xff]
    %v184 = vld [vmem:[%s0 + $0x48] sm:$0xff]
    %v185 = vld [vmem:[%s0 + $0x50] sm:$0xff]
    %v186 = vld [vmem:[%s0 + $0x58] sm:$0xff]
    %v187 = vld [vmem:[%s0 + $0x60] sm:$0xff]
    %v188 = vld [vmem:[%s0 + $0x68] sm:$0xff]
    %v189 = vld [vmem:[%s0 + $0x70] sm:$0xff]
    %v190 = vld [vmem:[%s0 + $0x78] sm:$0xff]
    %v191 = vld [vmem:[%s0 + $0x80] sm:$0xff]
    %v192 = vld [vmem:[%s0 + $0x88] sm:$0xff]
    %v193 = vld [vmem:[%s0 + $0x90] sm:$0xff]
    %v194 = vld [vmem:[%s0 + $0x98] sm:$0xff]
    %v195 = vld [vmem:[%s0 + $0xa0] sm:$0xff]
    %v196 = vld [vmem:[%s0 + $0xa8] sm:$0xff]
    %v197 = vld [vmem:[%s0 + $0xb0] sm:$0xff]
    %v198 = vld [vmem:[%s0 + $0xb8] sm:$0xff]
    %v199 = vld [vmem:[%s0 + $0xc0] sm:$0xff]
    %v200 = vld [vmem:[%s0 + $0xc8] sm:$0xff]
    %v201 = vld [vmem:[%s0 + $0xd0] sm:$0xff]
    %v202 = vld [vmem:[%s0 + $0xd8] sm:$0xff]
    %v203 = vld [vmem:[%s0 + $0xe0] sm:$0xff]
    %v204 = vld [vmem:[%s0 + $0xe8] sm:$0xff]
    %v205 = vld [vmem:[%s0 + $0xf0] sm:$0xff]
    %v206 = vld [vmem:[%s0 + $0xf8] sm:$0xff]
    %v207 = vld [vmem:[%s0 + $0x100] sm:$0xff]
    %v208 = vld [vmem:[%s0 + $0x108] sm:$0xff]
    %v209 = vld [vmem:[%s0 + $0x110] sm:$0xff]
    %v210 = vld [vmem:[%s0 + $0x118] sm:$0xff]
    %v211 = vld [vmem:[%s0 + $0x120] sm:$0xff]
    %v212 = vld [vmem:[%s0 + $0x128] sm:$0xff]
    %v213 = vld [vmem:[%s0 + $0x130] sm:$0xff]
    %v214 = vld [vmem:[%s0 + $0x138] sm:$0xff]
    %v215 = vld [vmem:[%s0 + $0x140] sm:$0xff]
    %v216 = vld [vmem:[%s0 + $0x148] sm:$0xff]
    %v217 = vld [vmem:[%s0 + $0x150] sm:$0xff]
    %v218 = vld [vmem:[%s0 + $0x158] sm:$0xff]
    %v219 = vld [vmem:[%s0 + $0x160] sm:$0xff]
    %v220 = vld [vmem:[%s0 + $0x168] sm:$0xff]
    %v221 = vld [vmem:[%s0 + $0x170] sm:$0xff]
    %v222 = vld [vmem:[%s0 + $0x178] sm:$0xff]
    %v223 = vld [vmem:[%s0 + $0x180] sm:$0xff]
    %v224 = vld [vmem:[%s0 + $0x188] sm:$0xff]
    %v225 = vld [vmem:[%s0 + $0x190] sm:$0xff]
    %v226 = vld [vmem:[%s0 + $0x198] sm:$0xff]
    %v227 = vld [vmem:[%s0 + $0x1a0] sm:$0xff]
    %v228 = vld [vmem:[%s0 + $0x1a8] sm:$0xff]
    %v229 = vld [vmem:[%s0 + $0x1b0] sm:$0xff]
    %v230 = vld [vmem:[%s0 + $0x1b8] sm:$0xff]
    %v231 = vld [vmem:[%s0 + $0x1c0] sm:$0xff]
    %v232 = vld [vmem:[%s0 + $0x1c8] sm:$0xff]
    %v233 = vld [vmem:[%s0 + $0x1d0] sm:$0xff]
    %v234 = vld [vmem:[%s0 + $0x1d8] sm:$0xff]
    %v235 = vld [vmem:[%s0 + $0x1e0] sm:$0xff]
    %v236 = vld [vmem:[%s0 + $0x1e8] sm:$0xff]
    %v237 = vld [vmem:[%s0 + $0x1f0] sm:$0xff]
    %v238 = vld [vmem:[%s0 + $0x1f8] sm:$0xff]
    %vm239 = vcmask 31744
    %240 = vst.msk [vmem:[#allocation2] sm:$0xff] %vm239, %v175
    %241 = vst.msk [vmem:[#allocation2 + $0x10] sm:$0xff] %vm239, %v176
    %242 = vst.msk [vmem:[#allocation2 + $0x20] sm:$0xff] %vm239, %v177
    %243 = vst.msk [vmem:[#allocation2 + $0x30] sm:$0xff] %vm239, %v178
    %244 = vst.msk [vmem:[#allocation2 + $0x40] sm:$0xff] %vm239, %v179
    %245 = vst.msk [vmem:[#allocation2 + $0x50] sm:$0xff] %vm239, %v180
    %246 = vst.msk [vmem:[#allocation2 + $0x60] sm:$0xff] %vm239, %v181
    %247 = vst.msk [vmem:[#allocation2 + $0x70] sm:$0xff] %vm239, %v182
    %248 = vst.msk [vmem:[#allocation2 + $0x80] sm:$0xff] %vm239, %v183
    %249 = vst.msk [vmem:[#allocation2 + $0x90] sm:$0xff] %vm239, %v184
    %250 = vst.msk [vmem:[#allocation2 + $0xa0] sm:$0xff] %vm239, %v185
    %251 = vst.msk [vmem:[#allocation2 + $0xb0] sm:$0xff] %vm239, %v186
    %252 = vst.msk [vmem:[#allocation2 + $0xc0] sm:$0xff] %vm239, %v187
    %253 = vst.msk [vmem:[#allocation2 + $0xd0] sm:$0xff] %vm239, %v188
    %254 = vst.msk [vmem:[#allocation2 + $0xe0] sm:$0xff] %vm239, %v189
    %255 = vst.msk [vmem:[#allocation2 + $0xf0] sm:$0xff] %vm239, %v190
    %256 = vst.msk [vmem:[#allocation2 + $0x100] sm:$0xff] %vm239, %v191
    %257 = vst.msk [vmem:[#allocation2 + $0x110] sm:$0xff] %vm239, %v192
    %258 = vst.msk [vmem:[#allocation2 + $0x120] sm:$0xff] %vm239, %v193
    %259 = vst.msk [vmem:[#allocation2 + $0x130] sm:$0xff] %vm239, %v194
    %260 = vst.msk [vmem:[#allocation2 + $0x140] sm:$0xff] %vm239, %v195
    %261 = vst.msk [vmem:[#allocation2 + $0x150] sm:$0xff] %vm239, %v196
    %262 = vst.msk [vmem:[#allocation2 + $0x160] sm:$0xff] %vm239, %v197
    %263 = vst.msk [vmem:[#allocation2 + $0x170] sm:$0xff] %vm239, %v198
    %264 = vst.msk [vmem:[#allocation2 + $0x180] sm:$0xff] %vm239, %v199
    %265 = vst.msk [vmem:[#allocation2 + $0x190] sm:$0xff] %vm239, %v200
    %266 = vst.msk [vmem:[#allocation2 + $0x1a0] sm:$0xff] %vm239, %v201
    %267 = vst.msk [vmem:[#allocation2 + $0x1b0] sm:$0xff] %vm239, %v202
    %268 = vst.msk [vmem:[#allocation2 + $0x1c0] sm:$0xff] %vm239, %v203
    %269 = vst.msk [vmem:[#allocation2 + $0x1d0] sm:$0xff] %vm239, %v204
    %270 = vst.msk [vmem:[#allocation2 + $0x1e0] sm:$0xff] %vm239, %v205
    %271 = vst.msk [vmem:[#allocation2 + $0x1f0] sm:$0xff] %vm239, %v206
    %272 = vst.msk [vmem:[#allocation2 + $0x200] sm:$0xff] %vm239, %v207
    %273 = vst.msk [vmem:[#allocation2 + $0x210] sm:$0xff] %vm239, %v208
    %274 = vst.msk [vmem:[#allocation2 + $0x220] sm:$0xff] %vm239, %v209
    %275 = vst.msk [vmem:[#allocation2 + $0x230] sm:$0xff] %vm239, %v210
    %276 = vst.msk [vmem:[#allocation2 + $0x240] sm:$0xff] %vm239, %v211
    %277 = vst.msk [vmem:[#allocation2 + $0x250] sm:$0xff] %vm239, %v212
    %278 = vst.msk [vmem:[#allocation2 + $0x260] sm:$0xff] %vm239, %v213
    %279 = vst.msk [vmem:[#allocation2 + $0x270] sm:$0xff] %vm239, %v214
    %280 = vst.msk [vmem:[#allocation2 + $0x280] sm:$0xff] %vm239, %v215
    %281 = vst.msk [vmem:[#allocation2 + $0x290] sm:$0xff] %vm239, %v216
    %282 = vst.msk [vmem:[#allocation2 + $0x2a0] sm:$0xff] %vm239, %v217
    %283 = vst.msk [vmem:[#allocation2 + $0x2b0] sm:$0xff] %vm239, %v218
    %284 = vst.msk [vmem:[#allocation2 + $0x2c0] sm:$0xff] %vm239, %v219
    %285 = vst.msk [vmem:[#allocation2 + $0x2d0] sm:$0xff] %vm239, %v220
    %286 = vst.msk [vmem:[#allocation2 + $0x2e0] sm:$0xff] %vm239, %v221
    %287 = vst.msk [vmem:[#allocation2 + $0x2f0] sm:$0xff] %vm239, %v222
    %288 = vst.msk [vmem:[#allocation2 + $0x300] sm:$0xff] %vm239, %v223
    %289 = vst.msk [vmem:[#allocation2 + $0x310] sm:$0xff] %vm239, %v224
    %290 = vst.msk [vmem:[#allocation2 + $0x320] sm:$0xff] %vm239, %v225
    %291 = vst.msk [vmem:[#allocation2 + $0x330] sm:$0xff] %vm239, %v226
    %292 = vst.msk [vmem:[#allocation2 + $0x340] sm:$0xff] %vm239, %v227
    %293 = vst.msk [vmem:[#allocation2 + $0x350] sm:$0xff] %vm239, %v228
    %294 = vst.msk [vmem:[#allocation2 + $0x360] sm:$0xff] %vm239, %v229
    %295 = vst.msk [vmem:[#allocation2 + $0x370] sm:$0xff] %vm239, %v230
    %296 = vst.msk [vmem:[#allocation2 + $0x380] sm:$0xff] %vm239, %v231
    %297 = vst.msk [vmem:[#allocation2 + $0x390] sm:$0xff] %vm239, %v232
    %298 = vst.msk [vmem:[#allocation2 + $0x3a0] sm:$0xff] %vm239, %v233
    %299 = vst.msk [vmem:[#allocation2 + $0x3b0] sm:$0xff] %vm239, %v234
    %300 = vst.msk [vmem:[#allocation2 + $0x3c0] sm:$0xff] %vm239, %v235
    %301 = vst.msk [vmem:[#allocation2 + $0x3d0] sm:$0xff] %vm239, %v236
    %302 = vst.msk [vmem:[#allocation2 + $0x3e0] sm:$0xff] %vm239, %v237
    %303 = vst.msk [vmem:[#allocation2 + $0x3f0] sm:$0xff] %vm239, %v238
    %v304 = vld [vmem:[%s2] sm:$0x1]
    %v305 = vlaneseq
    %v306 = vshrl.u32 %v305, 7
    %v307 = vsub.s32 0, %v306
    %v308 = vrot.slane %v304, %v307
    %vm309 = vcmask 64512
    %310 = vst.msk [vmem:[#allocation2 + $0x8] sm:$0xff] %vm309, %v308
    %311 = vst.msk [vmem:[#allocation2 + $0x18] sm:$0xff] %vm309, %v308
    %312 = vst.msk [vmem:[#allocation2 + $0x28] sm:$0xff] %vm309, %v308
    %313 = vst.msk [vmem:[#allocation2 + $0x38] sm:$0xff] %vm309, %v308
    %314 = vst.msk [vmem:[#allocation2 + $0x48] sm:$0xff] %vm309, %v308
    %315 = vst.msk [vmem:[#allocation2 + $0x58] sm:$0xff] %vm309, %v308
    %316 = vst.msk [vmem:[#allocation2 + $0x68] sm:$0xff] %vm309, %v308
    %317 = vst.msk [vmem:[#allocation2 + $0x78] sm:$0xff] %vm309, %v308
    %318 = vst.msk [vmem:[#allocation2 + $0x88] sm:$0xff] %vm309, %v308
    %319 = vst.msk [vmem:[#allocation2 + $0x98] sm:$0xff] %vm309, %v308
    %320 = vst.msk [vmem:[#allocation2 + $0xa8] sm:$0xff] %vm309, %v308
    %321 = vst.msk [vmem:[#allocation2 + $0xb8] sm:$0xff] %vm309, %v308
    %322 = vst.msk [vmem:[#allocation2 + $0xc8] sm:$0xff] %vm309, %v308
    %323 = vst.msk [vmem:[#allocation2 + $0xd8] sm:$0xff] %vm309, %v308
    %324 = vst.msk [vmem:[#allocation2 + $0xe8] sm:$0xff] %vm309, %v308
    %325 = vst.msk [vmem:[#allocation2 + $0xf8] sm:$0xff] %vm309, %v308
    %326 = vst.msk [vmem:[#allocation2 + $0x108] sm:$0xff] %vm309, %v308
    %327 = vst.msk [vmem:[#allocation2 + $0x118] sm:$0xff] %vm309, %v308
    %328 = vst.msk [vmem:[#allocation2 + $0x128] sm:$0xff] %vm309, %v308
    %329 = vst.msk [vmem:[#allocation2 + $0x138] sm:$0xff] %vm309, %v308
    %330 = vst.msk [vmem:[#allocation2 + $0x148] sm:$0xff] %vm309, %v308
    %331 = vst.msk [vmem:[#allocation2 + $0x158] sm:$0xff] %vm309, %v308
    %332 = vst.msk [vmem:[#allocation2 + $0x168] sm:$0xff] %vm309, %v308
    %333 = vst.msk [vmem:[#allocation2 + $0x178] sm:$0xff] %vm309, %v308
    %334 = vst.msk [vmem:[#allocation2 + $0x188] sm:$0xff] %vm309, %v308
    %335 = vst.msk [vmem:[#allocation2 + $0x198] sm:$0xff] %vm309, %v308
    %336 = vst.msk [vmem:[#allocation2 + $0x1a8] sm:$0xff] %vm309, %v308
    %337 = vst.msk [vmem:[#allocation2 + $0x1b8] sm:$0xff] %vm309, %v308
    %338 = vst.msk [vmem:[#allocation2 + $0x1c8] sm:$0xff] %vm309, %v308
    %339 = vst.msk [vmem:[#allocation2 + $0x1d8] sm:$0xff] %vm309, %v308
    %340 = vst.msk [vmem:[#allocation2 + $0x1e8] sm:$0xff] %vm309, %v308
    %341 = vst.msk [vmem:[#allocation2 + $0x1f8] sm:$0xff] %vm309, %v308
    %v342 = vld [vmem:[%s2 + $0x1] sm:$0x1]
    %v343 = vlaneseq
    %v344 = vshrl.u32 %v343, 7
    %v345 = vsub.s32 0, %v344
    %v346 = vrot.slane %v342, %v345
    %347 = vst.msk [vmem:[#allocation2 + $0x208] sm:$0xff] %vm309, %v346
    %348 = vst.msk [vmem:[#allocation2 + $0x218] sm:$0xff] %vm309, %v346
    %349 = vst.msk [vmem:[#allocation2 + $0x228] sm:$0xff] %vm309, %v346
    %350 = vst.msk [vmem:[#allocation2 + $0x238] sm:$0xff] %vm309, %v346
    %351 = vst.msk [vmem:[#allocation2 + $0x248] sm:$0xff] %vm309, %v346
    %352 = vst.msk [vmem:[#allocation2 + $0x258] sm:$0xff] %vm309, %v346
    %353 = vst.msk [vmem:[#allocation2 + $0x268] sm:$0xff] %vm309, %v346
    %354 = vst.msk [vmem:[#allocation2 + $0x278] sm:$0xff] %vm309, %v346
    %355 = vst.msk [vmem:[#allocation2 + $0x288] sm:$0xff] %vm309, %v346
    %356 = vst.msk [vmem:[#allocation2 + $0x298] sm:$0xff] %vm309, %v346
    %357 = vst.msk [vmem:[#allocation2 + $0x2a8] sm:$0xff] %vm309, %v346
    %358 = vst.msk [vmem:[#allocation2 + $0x2b8] sm:$0xff] %vm309, %v346
    %359 = vst.msk [vmem:[#allocation2 + $0x2c8] sm:$0xff] %vm309, %v346
    %360 = vst.msk [vmem:[#allocation2 + $0x2d8] sm:$0xff] %vm309, %v346
    %361 = vst.msk [vmem:[#allocation2 + $0x2e8] sm:$0xff] %vm309, %v346
    %362 = vst.msk [vmem:[#allocation2 + $0x2f8] sm:$0xff] %vm309, %v346
    %363 = vst.msk [vmem:[#allocation2 + $0x308] sm:$0xff] %vm309, %v346
    %364 = vst.msk [vmem:[#allocation2 + $0x318] sm:$0xff] %vm309, %v346
    %365 = vst.msk [vmem:[#allocation2 + $0x328] sm:$0xff] %vm309, %v346
    %366 = vst.msk [vmem:[#allocation2 + $0x338] sm:$0xff] %vm309, %v346
    %367 = vst.msk [vmem:[#allocation2 + $0x348] sm:$0xff] %vm309, %v346
    %368 = vst.msk [vmem:[#allocation2 + $0x358] sm:$0xff] %vm309, %v346
    %369 = vst.msk [vmem:[#allocation2 + $0x368] sm:$0xff] %vm309, %v346
    %370 = vst.msk [vmem:[#allocation2 + $0x378] sm:$0xff] %vm309, %v346
    %371 = vst.msk [vmem:[#allocation2 + $0x388] sm:$0xff] %vm309, %v346
    %372 = vst.msk [vmem:[#allocation2 + $0x398] sm:$0xff] %vm309, %v346
    %373 = vst.msk [vmem:[#allocation2 + $0x3a8] sm:$0xff] %vm309, %v346
    %374 = vst.msk [vmem:[#allocation2 + $0x3b8] sm:$0xff] %vm309, %v346
    %375 = vst.msk [vmem:[#allocation2 + $0x3c8] sm:$0xff] %vm309, %v346
    %376 = vst.msk [vmem:[#allocation2 + $0x3d8] sm:$0xff] %vm309, %v346
    %377 = vst.msk [vmem:[#allocation2 + $0x3e8] sm:$0xff] %vm309, %v346
    %378 = vst.msk [vmem:[#allocation2 + $0x3f8] sm:$0xff] %vm309, %v346
    %v379 = vld [vmem:[%s3] sm:$0xff]
    %v380 = vld [vmem:[%s3 + $0x8] sm:$0xff]
    %v381 = vld [vmem:[%s3 + $0x10] sm:$0xff]
    %v382 = vld [vmem:[%s3 + $0x18] sm:$0xff]
    %v383 = vld [vmem:[%s3 + $0x20] sm:$0xff]
    %v384 = vld [vmem:[%s3 + $0x28] sm:$0xff]
    %v385 = vld [vmem:[%s3 + $0x30] sm:$0xff]
    %v386 = vld [vmem:[%s3 + $0x38] sm:$0xff]
    %v387 = vld [vmem:[%s3 + $0x40] sm:$0xff]
    %v388 = vld [vmem:[%s3 + $0x48] sm:$0xff]
    %v389 = vld [vmem:[%s3 + $0x50] sm:$0xff]
    %v390 = vld [vmem:[%s3 + $0x58] sm:$0xff]
    %v391 = vld [vmem:[%s3 + $0x60] sm:$0xff]
    %v392 = vld [vmem:[%s3 + $0x68] sm:$0xff]
    %v393 = vld [vmem:[%s3 + $0x70] sm:$0xff]
    %v394 = vld [vmem:[%s3 + $0x78] sm:$0xff]
    %395 = vst [vmem:[#allocation4] sm:$0xff] %v379
    %396 = vst [vmem:[#allocation4 + $0x8] sm:$0xff] %v380
    %397 = vst [vmem:[#allocation4 + $0x10] sm:$0xff] %v381
    %398 = vst [vmem:[#allocation4 + $0x18] sm:$0xff] %v382
    %399 = vst [vmem:[#allocation4 + $0x20] sm:$0xff] %v383
    %400 = vst [vmem:[#allocation4 + $0x28] sm:$0xff] %v384
    %401 = vst [vmem:[#allocation4 + $0x30] sm:$0xff] %v385
    %402 = vst [vmem:[#allocation4 + $0x38] sm:$0xff] %v386
    %403 = vst [vmem:[#allocation4 + $0x40] sm:$0xff] %v387
    %404 = vst [vmem:[#allocation4 + $0x48] sm:$0xff] %v388
    %405 = vst [vmem:[#allocation4 + $0x50] sm:$0xff] %v389
    %406 = vst [vmem:[#allocation4 + $0x58] sm:$0xff] %v390
    %407 = vst [vmem:[#allocation4 + $0x60] sm:$0xff] %v391
    %408 = vst [vmem:[#allocation4 + $0x68] sm:$0xff] %v392
    %409 = vst [vmem:[#allocation4 + $0x70] sm:$0xff] %v393
    %410 = vst [vmem:[#allocation4 + $0x78] sm:$0xff] %v394
    %s411 = scalar_lea.vmem %s3, 256
    %v412 = vld [vmem:[%s411] sm:$0xff]
    %v413 = vld [vmem:[%s411 + $0x8] sm:$0xff]
    %v414 = vld [vmem:[%s411 + $0x10] sm:$0xff]
    %v415 = vld [vmem:[%s411 + $0x18] sm:$0xff]
    %v416 = vld [vmem:[%s411 + $0x20] sm:$0xff]
    %v417 = vld [vmem:[%s411 + $0x28] sm:$0xff]
    %v418 = vld [vmem:[%s411 + $0x30] sm:$0xff]
    %v419 = vld [vmem:[%s411 + $0x38] sm:$0xff]
    %v420 = vld [vmem:[%s411 + $0x40] sm:$0xff]
    %v421 = vld [vmem:[%s411 + $0x48] sm:$0xff]
    %v422 = vld [vmem:[%s411 + $0x50] sm:$0xff]
    %v423 = vld [vmem:[%s411 + $0x58] sm:$0xff]
    %v424 = vld [vmem:[%s411 + $0x60] sm:$0xff]
    %v425 = vld [vmem:[%s411 + $0x68] sm:$0xff]
    %v426 = vld [vmem:[%s411 + $0x70] sm:$0xff]
    %v427 = vld [vmem:[%s411 + $0x78] sm:$0xff]
    %428 = vst [vmem:[#allocation4 + $0x80] sm:$0xff] %v412
    %429 = vst [vmem:[#allocation4 + $0x88] sm:$0xff] %v413
    %430 = vst [vmem:[#allocation4 + $0x90] sm:$0xff] %v414
    %431 = vst [vmem:[#allocation4 + $0x98] sm:$0xff] %v415
    %432 = vst [vmem:[#allocation4 + $0xa0] sm:$0xff] %v416
    %433 = vst [vmem:[#allocation4 + $0xa8] sm:$0xff] %v417
    %434 = vst [vmem:[#allocation4 + $0xb0] sm:$0xff] %v418
    %435 = vst [vmem:[#allocation4 + $0xb8] sm:$0xff] %v419
    %436 = vst [vmem:[#allocation4 + $0xc0] sm:$0xff] %v420
    %437 = vst [vmem:[#allocation4 + $0xc8] sm:$0xff] %v421
    %438 = vst [vmem:[#allocation4 + $0xd0] sm:$0xff] %v422
    %439 = vst [vmem:[#allocation4 + $0xd8] sm:$0xff] %v423
    %440 = vst [vmem:[#allocation4 + $0xe0] sm:$0xff] %v424
    %441 = vst [vmem:[#allocation4 + $0xe8] sm:$0xff] %v425
    %442 = vst [vmem:[#allocation4 + $0xf0] sm:$0xff] %v426
    %443 = vst [vmem:[#allocation4 + $0xf8] sm:$0xff] %v427
    %v444 = vld [vmem:[#allocation2] sm:$0xff]
    %v445 = vld [vmem:[#allocation2 + $0x8] sm:$0xff]
    %v446 = vld [vmem:[#allocation2 + $0x10] sm:$0xff]
    %v447 = vld [vmem:[#allocation2 + $0x18] sm:$0xff]
    %v448 = vld [vmem:[#allocation2 + $0x20] sm:$0xff]
    %v449 = vld [vmem:[#allocation2 + $0x28] sm:$0xff]
    %v450 = vld [vmem:[#allocation2 + $0x30] sm:$0xff]
    %v451 = vld [vmem:[#allocation2 + $0x38] sm:$0xff]
    %v452 = vld [vmem:[#allocation2 + $0x40] sm:$0xff]
    %v453 = vld [vmem:[#allocation2 + $0x48] sm:$0xff]
    %v454 = vld [vmem:[#allocation2 + $0x50] sm:$0xff]
    %v455 = vld [vmem:[#allocation2 + $0x58] sm:$0xff]
    %v456 = vld [vmem:[#allocation2 + $0x60] sm:$0xff]
    %v457 = vld [vmem:[#allocation2 + $0x68] sm:$0xff]
    %v458 = vld [vmem:[#allocation2 + $0x70] sm:$0xff]
    %v459 = vld [vmem:[#allocation2 + $0x78] sm:$0xff]
    %v460 = vld [vmem:[#allocation2 + $0x80] sm:$0xff]
    %v461 = vld [vmem:[#allocation2 + $0x88] sm:$0xff]
    %v462 = vld [vmem:[#allocation2 + $0x90] sm:$0xff]
    %v463 = vld [vmem:[#allocation2 + $0x98] sm:$0xff]
    %v464 = vld [vmem:[#allocation2 + $0xa0] sm:$0xff]
    %v465 = vld [vmem:[#allocation2 + $0xa8] sm:$0xff]
    %v466 = vld [vmem:[#allocation2 + $0xb0] sm:$0xff]
    %v467 = vld [vmem:[#allocation2 + $0xb8] sm:$0xff]
    %v468 = vld [vmem:[#allocation2 + $0xc0] sm:$0xff]
    %v469 = vld [vmem:[#allocation2 + $0xc8] sm:$0xff]
    %v470 = vld [vmem:[#allocation2 + $0xd0] sm:$0xff]
    %v471 = vld [vmem:[#allocation2 + $0xd8] sm:$0xff]
    %v472 = vld [vmem:[#allocation2 + $0xe0] sm:$0xff]
    %v473 = vld [vmem:[#allocation2 + $0xe8] sm:$0xff]
    %v474 = vld [vmem:[#allocation2 + $0xf0] sm:$0xff]
    %v475 = vld [vmem:[#allocation2 + $0xf8] sm:$0xff]
    %v476 = vld [vmem:[#allocation2 + $0x100] sm:$0xff]
    %v477 = vld [vmem:[#allocation2 + $0x108] sm:$0xff]
    %v478 = vld [vmem:[#allocation2 + $0x110] sm:$0xff]
    %v479 = vld [vmem:[#allocation2 + $0x118] sm:$0xff]
    %v480 = vld [vmem:[#allocation2 + $0x120] sm:$0xff]
    %v481 = vld [vmem:[#allocation2 + $0x128] sm:$0xff]
    %v482 = vld [vmem:[#allocation2 + $0x130] sm:$0xff]
    %v483 = vld [vmem:[#allocation2 + $0x138] sm:$0xff]
    %v484 = vld [vmem:[#allocation2 + $0x140] sm:$0xff]
    %v485 = vld [vmem:[#allocation2 + $0x148] sm:$0xff]
    %v486 = vld [vmem:[#allocation2 + $0x150] sm:$0xff]
    %v487 = vld [vmem:[#allocation2 + $0x158] sm:$0xff]
    %v488 = vld [vmem:[#allocation2 + $0x160] sm:$0xff]
    %v489 = vld [vmem:[#allocation2 + $0x168] sm:$0xff]
    %v490 = vld [vmem:[#allocation2 + $0x170] sm:$0xff]
    %v491 = vld [vmem:[#allocation2 + $0x178] sm:$0xff]
    %v492 = vld [vmem:[#allocation2 + $0x180] sm:$0xff]
    %v493 = vld [vmem:[#allocation2 + $0x188] sm:$0xff]
    %v494 = vld [vmem:[#allocation2 + $0x190] sm:$0xff]
    %v495 = vld [vmem:[#allocation2 + $0x198] sm:$0xff]
    %v496 = vld [vmem:[#allocation2 + $0x1a0] sm:$0xff]
    %v497 = vld [vmem:[#allocation2 + $0x1a8] sm:$0xff]
    %v498 = vld [vmem:[#allocation2 + $0x1b0] sm:$0xff]
    %v499 = vld [vmem:[#allocation2 + $0x1b8] sm:$0xff]
    %v500 = vld [vmem:[#allocation2 + $0x1c0] sm:$0xff]
    %v501 = vld [vmem:[#allocation2 + $0x1c8] sm:$0xff]
    %v502 = vld [vmem:[#allocation2 + $0x1d0] sm:$0xff]
    %v503 = vld [vmem:[#allocation2 + $0x1d8] sm:$0xff]
    %v504 = vld [vmem:[#allocation2 + $0x1e0] sm:$0xff]
    %v505 = vld [vmem:[#allocation2 + $0x1e8] sm:$0xff]
    %v506 = vld [vmem:[#allocation2 + $0x1f0] sm:$0xff]
    %v507 = vld [vmem:[#allocation2 + $0x1f8] sm:$0xff]
    %v508 = vld [vmem:[#allocation2 + $0x200] sm:$0xff]
    %v509 = vld [vmem:[#allocation2 + $0x208] sm:$0xff]
    %v510 = vld [vmem:[#allocation2 + $0x210] sm:$0xff]
    %v511 = vld [vmem:[#allocation2 + $0x218] sm:$0xff]
    %v512 = vld [vmem:[#allocation2 + $0x220] sm:$0xff]
    %v513 = vld [vmem:[#allocation2 + $0x228] sm:$0xff]
    %v514 = vld [vmem:[#allocation2 + $0x230] sm:$0xff]
    %v515 = vld [vmem:[#allocation2 + $0x238] sm:$0xff]
    %v516 = vld [vmem:[#allocation2 + $0x240] sm:$0xff]
    %v517 = vld [vmem:[#allocation2 + $0x248] sm:$0xff]
    %v518 = vld [vmem:[#allocation2 + $0x250] sm:$0xff]
    %v519 = vld [vmem:[#allocation2 + $0x258] sm:$0xff]
    %v520 = vld [vmem:[#allocation2 + $0x260] sm:$0xff]
    %v521 = vld [vmem:[#allocation2 + $0x268] sm:$0xff]
    %v522 = vld [vmem:[#allocation2 + $0x270] sm:$0xff]
    %v523 = vld [vmem:[#allocation2 + $0x278] sm:$0xff]
    %v524 = vld [vmem:[#allocation2 + $0x280] sm:$0xff]
    %v525 = vld [vmem:[#allocation2 + $0x288] sm:$0xff]
    %v526 = vld [vmem:[#allocation2 + $0x290] sm:$0xff]
    %v527 = vld [vmem:[#allocation2 + $0x298] sm:$0xff]
    %v528 = vld [vmem:[#allocation2 + $0x2a0] sm:$0xff]
    %v529 = vld [vmem:[#allocation2 + $0x2a8] sm:$0xff]
    %v530 = vld [vmem:[#allocation2 + $0x2b0] sm:$0xff]
    %v531 = vld [vmem:[#allocation2 + $0x2b8] sm:$0xff]
    %v532 = vld [vmem:[#allocation2 + $0x2c0] sm:$0xff]
    %v533 = vld [vmem:[#allocation2 + $0x2c8] sm:$0xff]
    %v534 = vld [vmem:[#allocation2 + $0x2d0] sm:$0xff]
    %v535 = vld [vmem:[#allocation2 + $0x2d8] sm:$0xff]
    %v536 = vld [vmem:[#allocation2 + $0x2e0] sm:$0xff]
    %v537 = vld [vmem:[#allocation2 + $0x2e8] sm:$0xff]
    %v538 = vld [vmem:[#allocation2 + $0x2f0] sm:$0xff]
    %v539 = vld [vmem:[#allocation2 + $0x2f8] sm:$0xff]
    %v540 = vld [vmem:[#allocation2 + $0x300] sm:$0xff]
    %v541 = vld [vmem:[#allocation2 + $0x308] sm:$0xff]
    %v542 = vld [vmem:[#allocation2 + $0x310] sm:$0xff]
    %v543 = vld [vmem:[#allocation2 + $0x318] sm:$0xff]
    %v544 = vld [vmem:[#allocation2 + $0x320] sm:$0xff]
    %v545 = vld [vmem:[#allocation2 + $0x328] sm:$0xff]
    %v546 = vld [vmem:[#allocation2 + $0x330] sm:$0xff]
    %v547 = vld [vmem:[#allocation2 + $0x338] sm:$0xff]
    %v548 = vld [vmem:[#allocation2 + $0x340] sm:$0xff]
    %v549 = vld [vmem:[#allocation2 + $0x348] sm:$0xff]
    %v550 = vld [vmem:[#allocation2 + $0x350] sm:$0xff]
    %v551 = vld [vmem:[#allocation2 + $0x358] sm:$0xff]
    %v552 = vld [vmem:[#allocation2 + $0x360] sm:$0xff]
    %v553 = vld [vmem:[#allocation2 + $0x368] sm:$0xff]
    %v554 = vld [vmem:[#allocation2 + $0x370] sm:$0xff]
    %v555 = vld [vmem:[#allocation2 + $0x378] sm:$0xff]
    %v556 = vld [vmem:[#allocation2 + $0x380] sm:$0xff]
    %v557 = vld [vmem:[#allocation2 + $0x388] sm:$0xff]
    %v558 = vld [vmem:[#allocation2 + $0x390] sm:$0xff]
    %v559 = vld [vmem:[#allocation2 + $0x398] sm:$0xff]
    %v560 = vld [vmem:[#allocation2 + $0x3a0] sm:$0xff]
    %v561 = vld [vmem:[#allocation2 + $0x3a8] sm:$0xff]
    %v562 = vld [vmem:[#allocation2 + $0x3b0] sm:$0xff]
    %v563 = vld [vmem:[#allocation2 + $0x3b8] sm:$0xff]
    %v564 = vld [vmem:[#allocation2 + $0x3c0] sm:$0xff]
    %v565 = vld [vmem:[#allocation2 + $0x3c8] sm:$0xff]
    %v566 = vld [vmem:[#allocation2 + $0x3d0] sm:$0xff]
    %v567 = vld [vmem:[#allocation2 + $0x3d8] sm:$0xff]
    %v568 = vld [vmem:[#allocation2 + $0x3e0] sm:$0xff]
    %v569 = vld [vmem:[#allocation2 + $0x3e8] sm:$0xff]
    %v570 = vld [vmem:[#allocation2 + $0x3f0] sm:$0xff]
    %v571 = vld [vmem:[#allocation2 + $0x3f8] sm:$0xff]
    %v572 = vpack.c.bf16 %v446, %v444
    %v573 = vpack.c.bf16 %v447, %v445
    %v574 = vpack.c.bf16 %v450, %v448
    %v575 = vpack.c.bf16 %v451, %v449
    %v576 = vpack.c.bf16 %v454, %v452
    %v577 = vpack.c.bf16 %v455, %v453
    %v578 = vpack.c.bf16 %v458, %v456
    %v579 = vpack.c.bf16 %v459, %v457
    %v580 = vpack.c.bf16 %v462, %v460
    %v581 = vpack.c.bf16 %v463, %v461
    %v582 = vpack.c.bf16 %v466, %v464
    %v583 = vpack.c.bf16 %v467, %v465
    %v584 = vpack.c.bf16 %v470, %v468
    %v585 = vpack.c.bf16 %v471, %v469
    %v586 = vpack.c.bf16 %v474, %v472
    %v587 = vpack.c.bf16 %v475, %v473
    %v588 = vpack.c.bf16 %v478, %v476
    %v589 = vpack.c.bf16 %v479, %v477
    %v590 = vpack.c.bf16 %v482, %v480
    %v591 = vpack.c.bf16 %v483, %v481
    %v592 = vpack.c.bf16 %v486, %v484
    %v593 = vpack.c.bf16 %v487, %v485
    %v594 = vpack.c.bf16 %v490, %v488
    %v595 = vpack.c.bf16 %v491, %v489
    %v596 = vpack.c.bf16 %v494, %v492
    %v597 = vpack.c.bf16 %v495, %v493
    %v598 = vpack.c.bf16 %v498, %v496
    %v599 = vpack.c.bf16 %v499, %v497
    %v600 = vpack.c.bf16 %v502, %v500
    %v601 = vpack.c.bf16 %v503, %v501
    %v602 = vpack.c.bf16 %v506, %v504
    %v603 = vpack.c.bf16 %v507, %v505
    %v604 = vpack.c.bf16 %v510, %v508
    %v605 = vpack.c.bf16 %v511, %v509
    %v606 = vpack.c.bf16 %v514, %v512
    %v607 = vpack.c.bf16 %v515, %v513
    %v608 = vpack.c.bf16 %v518, %v516
    %v609 = vpack.c.bf16 %v519, %v517
    %v610 = vpack.c.bf16 %v522, %v520
    %v611 = vpack.c.bf16 %v523, %v521
    %v612 = vpack.c.bf16 %v526, %v524
    %v613 = vpack.c.bf16 %v527, %v525
    %v614 = vpack.c.bf16 %v530, %v528
    %v615 = vpack.c.bf16 %v531, %v529
    %v616 = vpack.c.bf16 %v534, %v532
    %v617 = vpack.c.bf16 %v535, %v533
    %v618 = vpack.c.bf16 %v538, %v536
    %v619 = vpack.c.bf16 %v539, %v537
    %v620 = vpack.c.bf16 %v542, %v540
    %v621 = vpack.c.bf16 %v543, %v541
    %v622 = vpack.c.bf16 %v546, %v544
    %v623 = vpack.c.bf16 %v547, %v545
    %v624 = vpack.c.bf16 %v550, %v548
    %v625 = vpack.c.bf16 %v551, %v549
    %v626 = vpack.c.bf16 %v554, %v552
    %v627 = vpack.c.bf16 %v555, %v553
    %v628 = vpack.c.bf16 %v558, %v556
    %v629 = vpack.c.bf16 %v559, %v557
    %v630 = vpack.c.bf16 %v562, %v560
    %v631 = vpack.c.bf16 %v563, %v561
    %v632 = vpack.c.bf16 %v566, %v564
    %v633 = vpack.c.bf16 %v567, %v565
    %v634 = vpack.c.bf16 %v570, %v568
    %v635 = vpack.c.bf16 %v571, %v569
    %v636 = vld [vmem:[#allocation4] sm:$0xff]
    %v637 = vld [vmem:[#allocation4 + $0x8] sm:$0xff]
    %v638 = vld [vmem:[#allocation4 + $0x10] sm:$0xff]
    %v639 = vld [vmem:[#allocation4 + $0x18] sm:$0xff]
    %v640 = vld [vmem:[#allocation4 + $0x20] sm:$0xff]
    %v641 = vld [vmem:[#allocation4 + $0x28] sm:$0xff]
    %v642 = vld [vmem:[#allocation4 + $0x30] sm:$0xff]
    %v643 = vld [vmem:[#allocation4 + $0x38] sm:$0xff]
    %v644 = vld [vmem:[#allocation4 + $0x40] sm:$0xff]
    %v645 = vld [vmem:[#allocation4 + $0x48] sm:$0xff]
    %v646 = vld [vmem:[#allocation4 + $0x50] sm:$0xff]
    %v647 = vld [vmem:[#allocation4 + $0x58] sm:$0xff]
    %v648 = vld [vmem:[#allocation4 + $0x60] sm:$0xff]
    %v649 = vld [vmem:[#allocation4 + $0x68] sm:$0xff]
    %v650 = vld [vmem:[#allocation4 + $0x70] sm:$0xff]
    %v651 = vld [vmem:[#allocation4 + $0x78] sm:$0xff]
    %v652 = vld [vmem:[#allocation4 + $0x80] sm:$0xff]
    %v653 = vld [vmem:[#allocation4 + $0x88] sm:$0xff]
    %v654 = vld [vmem:[#allocation4 + $0x90] sm:$0xff]
    %v655 = vld [vmem:[#allocation4 + $0x98] sm:$0xff]
    %v656 = vld [vmem:[#allocation4 + $0xa0] sm:$0xff]
    %v657 = vld [vmem:[#allocation4 + $0xa8] sm:$0xff]
    %v658 = vld [vmem:[#allocation4 + $0xb0] sm:$0xff]
    %v659 = vld [vmem:[#allocation4 + $0xb8] sm:$0xff]
    %v660 = vld [vmem:[#allocation4 + $0xc0] sm:$0xff]
    %v661 = vld [vmem:[#allocation4 + $0xc8] sm:$0xff]
    %v662 = vld [vmem:[#allocation4 + $0xd0] sm:$0xff]
    %v663 = vld [vmem:[#allocation4 + $0xd8] sm:$0xff]
    %v664 = vld [vmem:[#allocation4 + $0xe0] sm:$0xff]
    %v665 = vld [vmem:[#allocation4 + $0xe8] sm:$0xff]
    %v666 = vld [vmem:[#allocation4 + $0xf0] sm:$0xff]
    %v667 = vld [vmem:[#allocation4 + $0xf8] sm:$0xff]
    %v668 = vpack.c.bf16 %v637, %v636
    %v669 = vpack.c.bf16 %v639, %v638
    %v670 = vpack.c.bf16 %v641, %v640
    %v671 = vpack.c.bf16 %v643, %v642
    %v672 = vpack.c.bf16 %v645, %v644
    %v673 = vpack.c.bf16 %v647, %v646
    %v674 = vpack.c.bf16 %v649, %v648
    %v675 = vpack.c.bf16 %v651, %v650
    %v676 = vpack.c.bf16 %v653, %v652
    %v677 = vpack.c.bf16 %v655, %v654
    %v678 = vpack.c.bf16 %v657, %v656
    %v679 = vpack.c.bf16 %v659, %v658
    %v680 = vpack.c.bf16 %v661, %v660
    %v681 = vpack.c.bf16 %v663, %v662
    %v682 = vpack.c.bf16 %v665, %v664
    %v683 = vpack.c.bf16 %v667, %v666
    %s684 = scalar_lea.vmem %s3, 128
    %v685 = vld [vmem:[%s684] sm:$0xff]
    %v686 = vld [vmem:[%s684 + $0x8] sm:$0xff]
    %v687 = vld [vmem:[%s684 + $0x10] sm:$0xff]
    %v688 = vld [vmem:[%s684 + $0x18] sm:$0xff]
    %v689 = vld [vmem:[%s684 + $0x20] sm:$0xff]
    %v690 = vld [vmem:[%s684 + $0x28] sm:$0xff]
    %v691 = vld [vmem:[%s684 + $0x30] sm:$0xff]
    %v692 = vld [vmem:[%s684 + $0x38] sm:$0xff]
    %v693 = vld [vmem:[%s684 + $0x40] sm:$0xff]
    %v694 = vld [vmem:[%s684 + $0x48] sm:$0xff]
    %v695 = vld [vmem:[%s684 + $0x50] sm:$0xff]
    %v696 = vld [vmem:[%s684 + $0x58] sm:$0xff]
    %v697 = vld [vmem:[%s684 + $0x60] sm:$0xff]
    %v698 = vld [vmem:[%s684 + $0x68] sm:$0xff]
    %v699 = vld [vmem:[%s684 + $0x70] sm:$0xff]
    %v700 = vld [vmem:[%s684 + $0x78] sm:$0xff]
    %v701 = vpack.c.bf16 %v686, %v685
    %v702 = vpack.c.bf16 %v688, %v687
    %v703 = vpack.c.bf16 %v690, %v689
    %v704 = vpack.c.bf16 %v692, %v691
    %v705 = vpack.c.bf16 %v694, %v693
    %v706 = vpack.c.bf16 %v696, %v695
    %v707 = vpack.c.bf16 %v698, %v697
    %v708 = vpack.c.bf16 %v700, %v699
    %709 = vmatprep.subr.bf16.mxu0 0
    %710 = vmatpush1.bf16.msra.mxu0 %v668
    %711 = vmatprep.subr.bf16.mxu0 0
    %712 = vmatpush1.bf16.msra.mxu0 %v669
    %713 = vmatprep.subr.bf16.mxu0 0
    %714 = vmatpush1.bf16.msra.mxu0 %v670
    %715 = vmatprep.subr.bf16.mxu0 0
    %716 = vmatpush1.bf16.msra.mxu0 %v671
    %717 = vmatprep.subr.bf16.mxu0 0
    %718 = vmatpush1.bf16.msra.mxu0 %v672
    %719 = vmatprep.subr.bf16.mxu0 0
    %720 = vmatpush1.bf16.msra.mxu0 %v673
    %721 = vmatprep.subr.bf16.mxu0 0
    %722 = vmatpush1.bf16.msra.mxu0 %v674
    %723 = vmatprep.subr.bf16.mxu0 0
    %724 = vmatpush1.bf16.msra.mxu0 %v675
    %725 = vmatprep.subr.bf16.mxu0 0
    %726 = vmatpush1.bf16.msra.mxu0 %v676
    %727 = vmatprep.subr.bf16.mxu0 0
    %728 = vmatpush1.bf16.msra.mxu0 %v677
    %729 = vmatprep.subr.bf16.mxu0 0
    %730 = vmatpush1.bf16.msra.mxu0 %v678
    %731 = vmatprep.subr.bf16.mxu0 0
    %732 = vmatpush1.bf16.msra.mxu0 %v679
    %733 = vmatprep.subr.bf16.mxu0 0
    %734 = vmatpush1.bf16.msra.mxu0 %v680
    %735 = vmatprep.subr.bf16.mxu0 0
    %736 = vmatpush1.bf16.msra.mxu0 %v681
    %737 = vmatprep.subr.bf16.mxu0 0
    %738 = vmatpush1.bf16.msra.mxu0 %v682
    %739 = vmatprep.subr.bf16.mxu0 0
    %740 = vmatpush1.bf16.msra.mxu0 %v683
    %741 = vmatprep.mubr.bf16.mxu0 %v573
    %742 = vmatmul.mubr.bf16.gmra.mrb[0].mxu0 %v572
    %v743 = vpop.f32.mrb[0].mxu0
    %v744 = vadd.f32 0.0, %v743
    %v745 = vpop.f32.mrb[0].mxu0
    %v746 = vpop.f32.mrb[0].mxu0
    %v747 = vadd.f32 0.0, %v746
    %v748 = vpop.f32.mrb[0].mxu0
    %749 = vmatprep.mubr.bf16.mxu0 %v575
    %750 = vmatmul.mubr.bf16.gmra.mrb[0].mxu0 %v574
    %v751 = vpop.f32.mrb[0].mxu0
    %v752 = vadd.f32 0.0, %v751
    %v753 = vpop.f32.mrb[0].mxu0
    %v754 = vpop.f32.mrb[0].mxu0
    %v755 = vadd.f32 0.0, %v754
    %v756 = vpop.f32.mrb[0].mxu0
    %757 = vmatprep.mubr.bf16.mxu0 %v577
    %758 = vmatmul.mubr.bf16.gmra.mrb[0].mxu0 %v576
    %v759 = vpop.f32.mrb[0].mxu0
    %v760 = vadd.f32 0.0, %v759
    %v761 = vpop.f32.mrb[0].mxu0
    %v762 = vpop.f32.mrb[0].mxu0
    %v763 = vadd.f32 0.0, %v762
    %v764 = vpop.f32.mrb[0].mxu0
    %765 = vmatprep.mubr.bf16.mxu0 %v579
    %766 = vmatmul.mubr.bf16.gmra.mrb[0].mxu0 %v578
    %v767 = vpop.f32.mrb[0].mxu0
    %v768 = vadd.f32 0.0, %v767
    %v769 = vpop.f32.mrb[0].mxu0
    %v770 = vpop.f32.mrb[0].mxu0
    %v771 = vadd.f32 0.0, %v770
    %v772 = vpop.f32.mrb[0].mxu0
    %773 = vmatprep.mubr.bf16.mxu0 %v581
    %774 = vmatmul.mubr.bf16.gmra.mrb[0].mxu0 %v580
    %v775 = vpop.f32.mrb[0].mxu0
    %v776 = vadd.f32 0.0, %v775
    %v777 = vpop.f32.mrb[0].mxu0
    %v778 = vpop.f32.mrb[0].mxu0
    %v779 = vadd.f32 0.0, %v778
    %v780 = vpop.f32.mrb[0].mxu0
    %781 = vmatprep.mubr.bf16.mxu0 %v583
    %782 = vmatmul.mubr.bf16.gmra.mrb[0].mxu0 %v582
    %v783 = vpop.f32.mrb[0].mxu0
    %v784 = vadd.f32 0.0, %v783
    %v785 = vpop.f32.mrb[0].mxu0
    %v786 = vpop.f32.mrb[0].mxu0
    %v787 = vadd.f32 0.0, %v786
    %v788 = vpop.f32.mrb[0].mxu0
    %789 = vmatprep.mubr.bf16.mxu0 %v585
    %790 = vmatmul.mubr.bf16.gmra.mrb[0].mxu0 %v584
    %v791 = vpop.f32.mrb[0].mxu0
    %v792 = vadd.f32 0.0, %v791
    %v793 = vpop.f32.mrb[0].mxu0
    %v794 = vpop.f32.mrb[0].mxu0
    %v795 = vadd.f32 0.0, %v794
    %v796 = vpop.f32.mrb[0].mxu0
    %797 = vmatprep.mubr.bf16.mxu0 %v587
    %798 = vmatmul.mubr.bf16.gmra.mrb[0].mxu0 %v586
    %v799 = vpop.f32.mrb[0].mxu0
    %v800 = vadd.f32 0.0, %v799
    %v801 = vpop.f32.mrb[0].mxu0
    %v802 = vpop.f32.mrb[0].mxu0
    %v803 = vadd.f32 0.0, %v802
    %v804 = vpop.f32.mrb[0].mxu0
    %805 = vmatprep.mubr.bf16.mxu0 %v589
    %806 = vmatmul.mubr.bf16.gmra.mrb[0].mxu0 %v588
    %v807 = vpop.f32.mrb[0].mxu0
    %v808 = vadd.f32 0.0, %v807
    %v809 = vpop.f32.mrb[0].mxu0
    %v810 = vpop.f32.mrb[0].mxu0
    %v811 = vadd.f32 0.0, %v810
    %v812 = vpop.f32.mrb[0].mxu0
    %813 = vmatprep.mubr.bf16.mxu0 %v591
    %814 = vmatmul.mubr.bf16.gmra.mrb[0].mxu0 %v590
    %v815 = vpop.f32.mrb[0].mxu0
    %v816 = vadd.f32 0.0, %v815
    %v817 = vpop.f32.mrb[0].mxu0
    %v818 = vpop.f32.mrb[0].mxu0
    %v819 = vadd.f32 0.0, %v818
    %v820 = vpop.f32.mrb[0].mxu0
    %821 = vmatprep.mubr.bf16.mxu0 %v593
    %822 = vmatmul.mubr.bf16.gmra.mrb[0].mxu0 %v592
    %v823 = vpop.f32.mrb[0].mxu0
    %v824 = vadd.f32 0.0, %v823
    %v825 = vpop.f32.mrb[0].mxu0
    %v826 = vpop.f32.mrb[0].mxu0
    %v827 = vadd.f32 0.0, %v826
    %v828 = vpop.f32.mrb[0].mxu0
    %829 = vmatprep.mubr.bf16.mxu0 %v595
    %830 = vmatmul.mubr.bf16.gmra.mrb[0].mxu0 %v594
    %v831 = vpop.f32.mrb[0].mxu0
    %v832 = vadd.f32 0.0, %v831
    %v833 = vpop.f32.mrb[0].mxu0
    %v834 = vpop.f32.mrb[0].mxu0
    %v835 = vadd.f32 0.0, %v834
    %v836 = vpop.f32.mrb[0].mxu0
    %837 = vmatprep.mubr.bf16.mxu0 %v597
    %838 = vmatmul.mubr.bf16.gmra.mrb[0].mxu0 %v596
    %v839 = vpop.f32.mrb[0].mxu0
    %v840 = vadd.f32 0.0, %v839
    %v841 = vpop.f32.mrb[0].mxu0
    %v842 = vpop.f32.mrb[0].mxu0
    %v843 = vadd.f32 0.0, %v842
    %v844 = vpop.f32.mrb[0].mxu0
    %845 = vmatprep.mubr.bf16.mxu0 %v599
    %846 = vmatmul.mubr.bf16.gmra.mrb[0].mxu0 %v598
    %v847 = vpop.f32.mrb[0].mxu0
    %v848 = vadd.f32 0.0, %v847
    %v849 = vpop.f32.mrb[0].mxu0
    %v850 = vpop.f32.mrb[0].mxu0
    %v851 = vadd.f32 0.0, %v850
    %v852 = vpop.f32.mrb[0].mxu0
    %853 = vmatprep.mubr.bf16.mxu0 %v601
    %854 = vmatmul.mubr.bf16.gmra.mrb[0].mxu0 %v600
    %v855 = vpop.f32.mrb[0].mxu0
    %v856 = vadd.f32 0.0, %v855
    %v857 = vpop.f32.mrb[0].mxu0
    %v858 = vpop.f32.mrb[0].mxu0
    %v859 = vadd.f32 0.0, %v858
    %v860 = vpop.f32.mrb[0].mxu0
    %861 = vmatprep.mubr.bf16.mxu0 %v603
    %862 = vmatmul.mubr.bf16.gmra.mrb[0].mxu0 %v602
    %v863 = vpop.f32.mrb[0].mxu0
    %v864 = vadd.f32 0.0, %v863
    %v865 = vpop.f32.mrb[0].mxu0
    %v866 = vpop.f32.mrb[0].mxu0
    %v867 = vadd.f32 0.0, %v866
    %v868 = vpop.f32.mrb[0].mxu0
    %869 = vmatprep.mubr.bf16.mxu0 %v605
    %870 = vmatmul.mubr.bf16.gmra.mrb[0].mxu0 %v604
    %v871 = vpop.f32.mrb[0].mxu0
    %v872 = vadd.f32 0.0, %v871
    %v873 = vpop.f32.mrb[0].mxu0
    %v874 = vpop.f32.mrb[0].mxu0
    %v875 = vadd.f32 0.0, %v874
    %v876 = vpop.f32.mrb[0].mxu0
    %877 = vmatprep.mubr.bf16.mxu0 %v607
    %878 = vmatmul.mubr.bf16.gmra.mrb[0].mxu0 %v606
    %v879 = vpop.f32.mrb[0].mxu0
    %v880 = vadd.f32 0.0, %v879
    %v881 = vpop.f32.mrb[0].mxu0
    %v882 = vpop.f32.mrb[0].mxu0
    %v883 = vadd.f32 0.0, %v882
    %v884 = vpop.f32.mrb[0].mxu0
    %885 = vmatprep.mubr.bf16.mxu0 %v609
    %886 = vmatmul.mubr.bf16.gmra.mrb[0].mxu0 %v608
    %v887 = vpop.f32.mrb[0].mxu0
    %v888 = vadd.f32 0.0, %v887
    %v889 = vpop.f32.mrb[0].mxu0
    %v890 = vpop.f32.mrb[0].mxu0
    %v891 = vadd.f32 0.0, %v890
    %v892 = vpop.f32.mrb[0].mxu0
    %893 = vmatprep.mubr.bf16.mxu0 %v611
    %894 = vmatmul.mubr.bf16.gmra.mrb[0].mxu0 %v610
    %v895 = vpop.f32.mrb[0].mxu0
    %v896 = vadd.f32 0.0, %v895
    %v897 = vpop.f32.mrb[0].mxu0
    %v898 = vpop.f32.mrb[0].mxu0
    %v899 = vadd.f32 0.0, %v898
    %v900 = vpop.f32.mrb[0].mxu0
    %901 = vmatprep.mubr.bf16.mxu0 %v613
    %902 = vmatmul.mubr.bf16.gmra.mrb[0].mxu0 %v612
    %v903 = vpop.f32.mrb[0].mxu0
    %v904 = vadd.f32 0.0, %v903
    %v905 = vpop.f32.mrb[0].mxu0
    %v906 = vpop.f32.mrb[0].mxu0
    %v907 = vadd.f32 0.0, %v906
    %v908 = vpop.f32.mrb[0].mxu0
    %909 = vmatprep.mubr.bf16.mxu0 %v615
    %910 = vmatmul.mubr.bf16.gmra.mrb[0].mxu0 %v614
    %v911 = vpop.f32.mrb[0].mxu0
    %v912 = vadd.f32 0.0, %v911
    %v913 = vpop.f32.mrb[0].mxu0
    %v914 = vpop.f32.mrb[0].mxu0
    %v915 = vadd.f32 0.0, %v914
    %v916 = vpop.f32.mrb[0].mxu0
    %917 = vmatprep.mubr.bf16.mxu0 %v617
    %918 = vmatmul.mubr.bf16.gmra.mrb[0].mxu0 %v616
    %v919 = vpop.f32.mrb[0].mxu0
    %v920 = vadd.f32 0.0, %v919
    %v921 = vpop.f32.mrb[0].mxu0
    %v922 = vpop.f32.mrb[0].mxu0
    %v923 = vadd.f32 0.0, %v922
    %v924 = vpop.f32.mrb[0].mxu0
    %925 = vmatprep.mubr.bf16.mxu0 %v619
    %926 = vmatmul.mubr.bf16.gmra.mrb[0].mxu0 %v618
    %v927 = vpop.f32.mrb[0].mxu0
    %v928 = vadd.f32 0.0, %v927
    %v929 = vpop.f32.mrb[0].mxu0
    %v930 = vpop.f32.mrb[0].mxu0
    %v931 = vadd.f32 0.0, %v930
    %v932 = vpop.f32.mrb[0].mxu0
    %933 = vmatprep.mubr.bf16.mxu0 %v621
    %934 = vmatmul.mubr.bf16.gmra.mrb[0].mxu0 %v620
    %v935 = vpop.f32.mrb[0].mxu0
    %v936 = vadd.f32 0.0, %v935
    %v937 = vpop.f32.mrb[0].mxu0
    %v938 = vpop.f32.mrb[0].mxu0
    %v939 = vadd.f32 0.0, %v938
    %v940 = vpop.f32.mrb[0].mxu0
    %941 = vmatprep.mubr.bf16.mxu0 %v623
    %942 = vmatmul.mubr.bf16.gmra.mrb[0].mxu0 %v622
    %v943 = vpop.f32.mrb[0].mxu0
    %v944 = vadd.f32 0.0, %v943
    %v945 = vpop.f32.mrb[0].mxu0
    %v946 = vpop.f32.mrb[0].mxu0
    %v947 = vadd.f32 0.0, %v946
    %v948 = vpop.f32.mrb[0].mxu0
    %949 = vmatprep.mubr.bf16.mxu0 %v625
    %950 = vmatmul.mubr.bf16.gmra.mrb[0].mxu0 %v624
    %v951 = vpop.f32.mrb[0].mxu0
    %v952 = vadd.f32 0.0, %v951
    %v953 = vpop.f32.mrb[0].mxu0
    %v954 = vpop.f32.mrb[0].mxu0
    %v955 = vadd.f32 0.0, %v954
    %v956 = vpop.f32.mrb[0].mxu0
    %957 = vmatprep.mubr.bf16.mxu0 %v627
    %958 = vmatmul.mubr.bf16.gmra.mrb[0].mxu0 %v626
    %v959 = vpop.f32.mrb[0].mxu0
    %v960 = vadd.f32 0.0, %v959
    %v961 = vpop.f32.mrb[0].mxu0
    %v962 = vpop.f32.mrb[0].mxu0
    %v963 = vadd.f32 0.0, %v962
    %v964 = vpop.f32.mrb[0].mxu0
    %965 = vmatprep.mubr.bf16.mxu0 %v629
    %966 = vmatmul.mubr.bf16.gmra.mrb[0].mxu0 %v628
    %v967 = vpop.f32.mrb[0].mxu0
    %v968 = vadd.f32 0.0, %v967
    %v969 = vpop.f32.mrb[0].mxu0
    %v970 = vpop.f32.mrb[0].mxu0
    %v971 = vadd.f32 0.0, %v970
    %v972 = vpop.f32.mrb[0].mxu0
    %973 = vmatprep.mubr.bf16.mxu0 %v631
    %974 = vmatmul.mubr.bf16.gmra.mrb[0].mxu0 %v630
    %v975 = vpop.f32.mrb[0].mxu0
    %v976 = vadd.f32 0.0, %v975
    %v977 = vpop.f32.mrb[0].mxu0
    %v978 = vpop.f32.mrb[0].mxu0
    %v979 = vadd.f32 0.0, %v978
    %v980 = vpop.f32.mrb[0].mxu0
    %981 = vmatprep.mubr.bf16.mxu0 %v633
    %982 = vmatmul.mubr.bf16.gmra.mrb[0].mxu0 %v632
    %v983 = vpop.f32.mrb[0].mxu0
    %v984 = vadd.f32 0.0, %v983
    %v985 = vpop.f32.mrb[0].mxu0
    %v986 = vpop.f32.mrb[0].mxu0
    %v987 = vadd.f32 0.0, %v986
    %v988 = vpop.f32.mrb[0].mxu0
    %989 = vmatprep.mubr.bf16.mxu0 %v635
    %990 = vmatmul.mubr.bf16.gmra.mrb[0].mxu0 %v634
    %v991 = vpop.f32.mrb[0].mxu0
    %v992 = vadd.f32 0.0, %v991
    %v993 = vpop.f32.mrb[0].mxu0
    %v994 = vpop.f32.mrb[0].mxu0
    %v995 = vadd.f32 0.0, %v994
    %v996 = vpop.f32.mrb[0].mxu0
    %997 = vdwg.mxu0
    %v998 = vmax.f32 %v744, 0.0
    %v999 = vmax.f32 %v747, 0.0
    %v1000 = vmax.f32 %v752, 0.0
    %v1001 = vmax.f32 %v755, 0.0
    %v1002 = vmax.f32 %v760, 0.0
    %v1003 = vmax.f32 %v763, 0.0
    %v1004 = vmax.f32 %v768, 0.0
    %v1005 = vmax.f32 %v771, 0.0
    %v1006 = vmax.f32 %v776, 0.0
    %v1007 = vmax.f32 %v779, 0.0
    %v1008 = vmax.f32 %v784, 0.0
    %v1009 = vmax.f32 %v787, 0.0
    %v1010 = vmax.f32 %v792, 0.0
    %v1011 = vmax.f32 %v795, 0.0
    %v1012 = vmax.f32 %v800, 0.0
    %v1013 = vmax.f32 %v803, 0.0
    %v1014 = vmax.f32 %v808, 0.0
    %v1015 = vmax.f32 %v811, 0.0
    %v1016 = vmax.f32 %v816, 0.0
    %v1017 = vmax.f32 %v819, 0.0
    %v1018 = vmax.f32 %v824, 0.0
    %v1019 = vmax.f32 %v827, 0.0
    %v1020 = vmax.f32 %v832, 0.0
    %v1021 = vmax.f32 %v835, 0.0
    %v1022 = vmax.f32 %v840, 0.0
    %v1023 = vmax.f32 %v843, 0.0
    %v1024 = vmax.f32 %v848, 0.0
    %v1025 = vmax.f32 %v851, 0.0
    %v1026 = vmax.f32 %v856, 0.0
    %v1027 = vmax.f32 %v859, 0.0
    %v1028 = vmax.f32 %v864, 0.0
    %v1029 = vmax.f32 %v867, 0.0
    %v1030 = vmax.f32 %v872, 0.0
    %v1031 = vmax.f32 %v875, 0.0
    %v1032 = vmax.f32 %v880, 0.0
    %v1033 = vmax.f32 %v883, 0.0
    %v1034 = vmax.f32 %v888, 0.0
    %v1035 = vmax.f32 %v891, 0.0
    %v1036 = vmax.f32 %v896, 0.0
    %v1037 = vmax.f32 %v899, 0.0
    %v1038 = vmax.f32 %v904, 0.0
    %v1039 = vmax.f32 %v907, 0.0
    %v1040 = vmax.f32 %v912, 0.0
    %v1041 = vmax.f32 %v915, 0.0
    %v1042 = vmax.f32 %v920, 0.0
    %v1043 = vmax.f32 %v923, 0.0
    %v1044 = vmax.f32 %v928, 0.0
    %v1045 = vmax.f32 %v931, 0.0
    %v1046 = vmax.f32 %v936, 0.0
    %v1047 = vmax.f32 %v939, 0.0
    %v1048 = vmax.f32 %v944, 0.0
    %v1049 = vmax.f32 %v947, 0.0
    %v1050 = vmax.f32 %v952, 0.0
    %v1051 = vmax.f32 %v955, 0.0
    %v1052 = vmax.f32 %v960, 0.0
    %v1053 = vmax.f32 %v963, 0.0
    %v1054 = vmax.f32 %v968, 0.0
    %v1055 = vmax.f32 %v971, 0.0
    %v1056 = vmax.f32 %v976, 0.0
    %v1057 = vmax.f32 %v979, 0.0
    %v1058 = vmax.f32 %v984, 0.0
    %v1059 = vmax.f32 %v987, 0.0
    %v1060 = vmax.f32 %v992, 0.0
    %v1061 = vmax.f32 %v995, 0.0
    %v1062 = vpack.c.bf16 %v999, %v998
    %v1063 = vpack.c.bf16 %v1001, %v1000
    %v1064 = vpack.c.bf16 %v1003, %v1002
    %v1065 = vpack.c.bf16 %v1005, %v1004
    %v1066 = vpack.c.bf16 %v1007, %v1006
    %v1067 = vpack.c.bf16 %v1009, %v1008
    %v1068 = vpack.c.bf16 %v1011, %v1010
    %v1069 = vpack.c.bf16 %v1013, %v1012
    %v1070 = vpack.c.bf16 %v1015, %v1014
    %v1071 = vpack.c.bf16 %v1017, %v1016
    %v1072 = vpack.c.bf16 %v1019, %v1018
    %v1073 = vpack.c.bf16 %v1021, %v1020
    %v1074 = vpack.c.bf16 %v1023, %v1022
    %v1075 = vpack.c.bf16 %v1025, %v1024
    %v1076 = vpack.c.bf16 %v1027, %v1026
    %v1077 = vpack.c.bf16 %v1029, %v1028
    %v1078 = vpack.c.bf16 %v1031, %v1030
    %v1079 = vpack.c.bf16 %v1033, %v1032
    %v1080 = vpack.c.bf16 %v1035, %v1034
    %v1081 = vpack.c.bf16 %v1037, %v1036
    %v1082 = vpack.c.bf16 %v1039, %v1038
    %v1083 = vpack.c.bf16 %v1041, %v1040
    %v1084 = vpack.c.bf16 %v1043, %v1042
    %v1085 = vpack.c.bf16 %v1045, %v1044
    %v1086 = vpack.c.bf16 %v1047, %v1046
    %v1087 = vpack.c.bf16 %v1049, %v1048
    %v1088 = vpack.c.bf16 %v1051, %v1050
    %v1089 = vpack.c.bf16 %v1053, %v1052
    %v1090 = vpack.c.bf16 %v1055, %v1054
    %v1091 = vpack.c.bf16 %v1057, %v1056
    %v1092 = vpack.c.bf16 %v1059, %v1058
    %v1093 = vpack.c.bf16 %v1061, %v1060
    %1094 = vmatprep.subr.bf16.mxu0 0
    %1095 = vmatpush1.bf16.msra.mxu0 %v701
    %1096 = vmatprep.subr.bf16.mxu0 0
    %1097 = vmatpush1.bf16.msra.mxu0 %v702
    %1098 = vmatprep.subr.bf16.mxu0 0
    %1099 = vmatpush1.bf16.msra.mxu0 %v703
    %1100 = vmatprep.subr.bf16.mxu0 0
    %1101 = vmatpush1.bf16.msra.mxu0 %v704
    %1102 = vmatprep.subr.bf16.mxu0 0
    %1103 = vmatpush1.bf16.msra.mxu0 %v705
    %1104 = vmatprep.subr.bf16.mxu0 0
    %1105 = vmatpush1.bf16.msra.mxu0 %v706
    %1106 = vmatprep.subr.bf16.mxu0 0
    %1107 = vmatpush1.bf16.msra.mxu0 %v707
    %1108 = vmatprep.subr.bf16.mxu0 0
    %1109 = vmatpush1.bf16.msra.mxu0 %v708
    %1110 = vmatprep.subr.bf16.mxu0 0
    %1111 = vmatpush1.bf16.msra.mxu0 0
    %1112 = vmatprep.subr.bf16.mxu0 0
    %1113 = vmatpush1.bf16.msra.mxu0 0
    %1114 = vmatprep.subr.bf16.mxu0 0
    %1115 = vmatpush1.bf16.msra.mxu0 0
    %1116 = vmatprep.subr.bf16.mxu0 0
    %1117 = vmatpush1.bf16.msra.mxu0 0
    %1118 = vmatprep.subr.bf16.mxu0 0
    %1119 = vmatpush1.bf16.msra.mxu0 0
    %1120 = vmatprep.subr.bf16.mxu0 0
    %1121 = vmatpush1.bf16.msra.mxu0 0
    %1122 = vmatprep.subr.bf16.mxu0 0
    %1123 = vmatpush1.bf16.msra.mxu0 0
    %1124 = vmatprep.subr.bf16.mxu0 0
    %1125 = vmatpush1.bf16.msra.mxu0 0
    %1126 = vmatprep.mubr.bf16.mxu0 0
    %1127 = vmatmul.mubr.bf16.gmra.mrb[0].mxu0 %v1062
    %v1128 = vpop.f32.mrb[0].mxu0
    %v1129 = vadd.f32 0.0, %v1128
    %v1130 = vpop.f32.mrb[0].mxu0
    %v1131 = vpop.f32.mrb[0].mxu0
    %v1132 = vadd.f32 0.0, %v1131
    %v1133 = vpop.f32.mrb[0].mxu0
    %1134 = vmatprep.mubr.bf16.mxu0 0
    %1135 = vmatmul.mubr.bf16.gmra.mrb[0].mxu0 %v1063
    %v1136 = vpop.f32.mrb[0].mxu0
    %v1137 = vadd.f32 0.0, %v1136
    %v1138 = vpop.f32.mrb[0].mxu0
    %v1139 = vpop.f32.mrb[0].mxu0
    %v1140 = vadd.f32 0.0, %v1139
    %v1141 = vpop.f32.mrb[0].mxu0
    %1142 = vmatprep.mubr.bf16.mxu0 0
    %1143 = vmatmul.mubr.bf16.gmra.mrb[0].mxu0 %v1064
    %v1144 = vpop.f32.mrb[0].mxu0
    %v1145 = vadd.f32 0.0, %v1144
    %v1146 = vpop.f32.mrb[0].mxu0
    %v1147 = vpop.f32.mrb[0].mxu0
    %v1148 = vadd.f32 0.0, %v1147
    %v1149 = vpop.f32.mrb[0].mxu0
    %1150 = vmatprep.mubr.bf16.mxu0 0
    %1151 = vmatmul.mubr.bf16.gmra.mrb[0].mxu0 %v1065
    %v1152 = vpop.f32.mrb[0].mxu0
    %v1153 = vadd.f32 0.0, %v1152
    %v1154 = vpop.f32.mrb[0].mxu0
    %v1155 = vpop.f32.mrb[0].mxu0
    %v1156 = vadd.f32 0.0, %v1155
    %v1157 = vpop.f32.mrb[0].mxu0
    %1158 = vmatprep.mubr.bf16.mxu0 0
    %1159 = vmatmul.mubr.bf16.gmra.mrb[0].mxu0 %v1066
    %v1160 = vpop.f32.mrb[0].mxu0
    %v1161 = vadd.f32 0.0, %v1160
    %v1162 = vpop.f32.mrb[0].mxu0
    %v1163 = vpop.f32.mrb[0].mxu0
    %v1164 = vadd.f32 0.0, %v1163
    %v1165 = vpop.f32.mrb[0].mxu0
    %1166 = vmatprep.mubr.bf16.mxu0 0
    %1167 = vmatmul.mubr.bf16.gmra.mrb[0].mxu0 %v1067
    %v1168 = vpop.f32.mrb[0].mxu0
    %v1169 = vadd.f32 0.0, %v1168
    %v1170 = vpop.f32.mrb[0].mxu0
    %v1171 = vpop.f32.mrb[0].mxu0
    %v1172 = vadd.f32 0.0, %v1171
    %v1173 = vpop.f32.mrb[0].mxu0
    %1174 = vmatprep.mubr.bf16.mxu0 0
    %1175 = vmatmul.mubr.bf16.gmra.mrb[0].mxu0 %v1068
    %v1176 = vpop.f32.mrb[0].mxu0
    %v1177 = vadd.f32 0.0, %v1176
    %v1178 = vpop.f32.mrb[0].mxu0
    %v1179 = vpop.f32.mrb[0].mxu0
    %v1180 = vadd.f32 0.0, %v1179
    %v1181 = vpop.f32.mrb[0].mxu0
    %1182 = vmatprep.mubr.bf16.mxu0 0
    %1183 = vmatmul.mubr.bf16.gmra.mrb[0].mxu0 %v1069
    %v1184 = vpop.f32.mrb[0].mxu0
    %v1185 = vadd.f32 0.0, %v1184
    %v1186 = vpop.f32.mrb[0].mxu0
    %v1187 = vpop.f32.mrb[0].mxu0
    %v1188 = vadd.f32 0.0, %v1187
    %v1189 = vpop.f32.mrb[0].mxu0
    %1190 = vmatprep.mubr.bf16.mxu0 0
    %1191 = vmatmul.mubr.bf16.gmra.mrb[0].mxu0 %v1070
    %v1192 = vpop.f32.mrb[0].mxu0
    %v1193 = vadd.f32 0.0, %v1192
    %v1194 = vpop.f32.mrb[0].mxu0
    %v1195 = vpop.f32.mrb[0].mxu0
    %v1196 = vadd.f32 0.0, %v1195
    %v1197 = vpop.f32.mrb[0].mxu0
    %1198 = vmatprep.mubr.bf16.mxu0 0
    %1199 = vmatmul.mubr.bf16.gmra.mrb[0].mxu0 %v1071
    %v1200 = vpop.f32.mrb[0].mxu0
    %v1201 = vadd.f32 0.0, %v1200
    %v1202 = vpop.f32.mrb[0].mxu0
    %v1203 = vpop.f32.mrb[0].mxu0
    %v1204 = vadd.f32 0.0, %v1203
    %v1205 = vpop.f32.mrb[0].mxu0
    %1206 = vmatprep.mubr.bf16.mxu0 0
    %1207 = vmatmul.mubr.bf16.gmra.mrb[0].mxu0 %v1072
    %v1208 = vpop.f32.mrb[0].mxu0
    %v1209 = vadd.f32 0.0, %v1208
    %v1210 = vpop.f32.mrb[0].mxu0
    %v1211 = vpop.f32.mrb[0].mxu0
    %v1212 = vadd.f32 0.0, %v1211
    %v1213 = vpop.f32.mrb[0].mxu0
    %1214 = vmatprep.mubr.bf16.mxu0 0
    %1215 = vmatmul.mubr.bf16.gmra.mrb[0].mxu0 %v1073
    %v1216 = vpop.f32.mrb[0].mxu0
    %v1217 = vadd.f32 0.0, %v1216
    %v1218 = vpop.f32.mrb[0].mxu0
    %v1219 = vpop.f32.mrb[0].mxu0
    %v1220 = vadd.f32 0.0, %v1219
    %v1221 = vpop.f32.mrb[0].mxu0
    %1222 = vmatprep.mubr.bf16.mxu0 0
    %1223 = vmatmul.mubr.bf16.gmra.mrb[0].mxu0 %v1074
    %v1224 = vpop.f32.mrb[0].mxu0
    %v1225 = vadd.f32 0.0, %v1224
    %v1226 = vpop.f32.mrb[0].mxu0
    %v1227 = vpop.f32.mrb[0].mxu0
    %v1228 = vadd.f32 0.0, %v1227
    %v1229 = vpop.f32.mrb[0].mxu0
    %1230 = vmatprep.mubr.bf16.mxu0 0
    %1231 = vmatmul.mubr.bf16.gmra.mrb[0].mxu0 %v1075
    %v1232 = vpop.f32.mrb[0].mxu0
    %v1233 = vadd.f32 0.0, %v1232
    %v1234 = vpop.f32.mrb[0].mxu0
    %v1235 = vpop.f32.mrb[0].mxu0
    %v1236 = vadd.f32 0.0, %v1235
    %v1237 = vpop.f32.mrb[0].mxu0
    %1238 = vmatprep.mubr.bf16.mxu0 0
    %1239 = vmatmul.mubr.bf16.gmra.mrb[0].mxu0 %v1076
    %v1240 = vpop.f32.mrb[0].mxu0
    %v1241 = vadd.f32 0.0, %v1240
    %v1242 = vpop.f32.mrb[0].mxu0
    %v1243 = vpop.f32.mrb[0].mxu0
    %v1244 = vadd.f32 0.0, %v1243
    %v1245 = vpop.f32.mrb[0].mxu0
    %1246 = vmatprep.mubr.bf16.mxu0 0
    %1247 = vmatmul.mubr.bf16.gmra.mrb[0].mxu0 %v1077
    %v1248 = vpop.f32.mrb[0].mxu0
    %v1249 = vadd.f32 0.0, %v1248
    %v1250 = vpop.f32.mrb[0].mxu0
    %v1251 = vpop.f32.mrb[0].mxu0
    %v1252 = vadd.f32 0.0, %v1251
    %v1253 = vpop.f32.mrb[0].mxu0
    %1254 = vmatprep.mubr.bf16.mxu0 0
    %1255 = vmatmul.mubr.bf16.gmra.mrb[0].mxu0 %v1078
    %v1256 = vpop.f32.mrb[0].mxu0
    %v1257 = vadd.f32 0.0, %v1256
    %v1258 = vpop.f32.mrb[0].mxu0
    %v1259 = vpop.f32.mrb[0].mxu0
    %v1260 = vadd.f32 0.0, %v1259
    %v1261 = vpop.f32.mrb[0].mxu0
    %1262 = vmatprep.mubr.bf16.mxu0 0
    %1263 = vmatmul.mubr.bf16.gmra.mrb[0].mxu0 %v1079
    %v1264 = vpop.f32.mrb[0].mxu0
    %v1265 = vadd.f32 0.0, %v1264
    %v1266 = vpop.f32.mrb[0].mxu0
    %v1267 = vpop.f32.mrb[0].mxu0
    %v1268 = vadd.f32 0.0, %v1267
    %v1269 = vpop.f32.mrb[0].mxu0
    %1270 = vmatprep.mubr.bf16.mxu0 0
    %1271 = vmatmul.mubr.bf16.gmra.mrb[0].mxu0 %v1080
    %v1272 = vpop.f32.mrb[0].mxu0
    %v1273 = vadd.f32 0.0, %v1272
    %v1274 = vpop.f32.mrb[0].mxu0
    %v1275 = vpop.f32.mrb[0].mxu0
    %v1276 = vadd.f32 0.0, %v1275
    %v1277 = vpop.f32.mrb[0].mxu0
    %1278 = vmatprep.mubr.bf16.mxu0 0
    %1279 = vmatmul.mubr.bf16.gmra.mrb[0].mxu0 %v1081
    %v1280 = vpop.f32.mrb[0].mxu0
    %v1281 = vadd.f32 0.0, %v1280
    %v1282 = vpop.f32.mrb[0].mxu0
    %v1283 = vpop.f32.mrb[0].mxu0
    %v1284 = vadd.f32 0.0, %v1283
    %v1285 = vpop.f32.mrb[0].mxu0
    %1286 = vmatprep.mubr.bf16.mxu0 0
    %1287 = vmatmul.mubr.bf16.gmra.mrb[0].mxu0 %v1082
    %v1288 = vpop.f32.mrb[0].mxu0
    %v1289 = vadd.f32 0.0, %v1288
    %v1290 = vpop.f32.mrb[0].mxu0
    %v1291 = vpop.f32.mrb[0].mxu0
    %v1292 = vadd.f32 0.0, %v1291
    %v1293 = vpop.f32.mrb[0].mxu0
    %1294 = vmatprep.mubr.bf16.mxu0 0
    %1295 = vmatmul.mubr.bf16.gmra.mrb[0].mxu0 %v1083
    %v1296 = vpop.f32.mrb[0].mxu0
    %v1297 = vadd.f32 0.0, %v1296
    %v1298 = vpop.f32.mrb[0].mxu0
    %v1299 = vpop.f32.mrb[0].mxu0
    %v1300 = vadd.f32 0.0, %v1299
    %v1301 = vpop.f32.mrb[0].mxu0
    %1302 = vmatprep.mubr.bf16.mxu0 0
    %1303 = vmatmul.mubr.bf16.gmra.mrb[0].mxu0 %v1084
    %v1304 = vpop.f32.mrb[0].mxu0
    %v1305 = vadd.f32 0.0, %v1304
    %v1306 = vpop.f32.mrb[0].mxu0
    %v1307 = vpop.f32.mrb[0].mxu0
    %v1308 = vadd.f32 0.0, %v1307
    %v1309 = vpop.f32.mrb[0].mxu0
    %1310 = vmatprep.mubr.bf16.mxu0 0
    %1311 = vmatmul.mubr.bf16.gmra.mrb[0].mxu0 %v1085
    %v1312 = vpop.f32.mrb[0].mxu0
    %v1313 = vadd.f32 0.0, %v1312
    %v1314 = vpop.f32.mrb[0].mxu0
    %v1315 = vpop.f32.mrb[0].mxu0
    %v1316 = vadd.f32 0.0, %v1315
    %v1317 = vpop.f32.mrb[0].mxu0
    %1318 = vmatprep.mubr.bf16.mxu0 0
    %1319 = vmatmul.mubr.bf16.gmra.mrb[0].mxu0 %v1086
    %v1320 = vpop.f32.mrb[0].mxu0
    %v1321 = vadd.f32 0.0, %v1320
    %v1322 = vpop.f32.mrb[0].mxu0
    %v1323 = vpop.f32.mrb[0].mxu0
    %v1324 = vadd.f32 0.0, %v1323
    %v1325 = vpop.f32.mrb[0].mxu0
    %1326 = vmatprep.mubr.bf16.mxu0 0
    %1327 = vmatmul.mubr.bf16.gmra.mrb[0].mxu0 %v1087
    %v1328 = vpop.f32.mrb[0].mxu0
    %v1329 = vadd.f32 0.0, %v1328
    %v1330 = vpop.f32.mrb[0].mxu0
    %v1331 = vpop.f32.mrb[0].mxu0
    %v1332 = vadd.f32 0.0, %v1331
    %v1333 = vpop.f32.mrb[0].mxu0
    %1334 = vmatprep.mubr.bf16.mxu0 0
    %1335 = vmatmul.mubr.bf16.gmra.mrb[0].mxu0 %v1088
    %v1336 = vpop.f32.mrb[0].mxu0
    %v1337 = vadd.f32 0.0, %v1336
    %v1338 = vpop.f32.mrb[0].mxu0
    %v1339 = vpop.f32.mrb[0].mxu0
    %v1340 = vadd.f32 0.0, %v1339
    %v1341 = vpop.f32.mrb[0].mxu0
    %1342 = vmatprep.mubr.bf16.mxu0 0
    %1343 = vmatmul.mubr.bf16.gmra.mrb[0].mxu0 %v1089
    %v1344 = vpop.f32.mrb[0].mxu0
    %v1345 = vadd.f32 0.0, %v1344
    %v1346 = vpop.f32.mrb[0].mxu0
    %v1347 = vpop.f32.mrb[0].mxu0
    %v1348 = vadd.f32 0.0, %v1347
    %v1349 = vpop.f32.mrb[0].mxu0
    %1350 = vmatprep.mubr.bf16.mxu0 0
    %1351 = vmatmul.mubr.bf16.gmra.mrb[0].mxu0 %v1090
    %v1352 = vpop.f32.mrb[0].mxu0
    %v1353 = vadd.f32 0.0, %v1352
    %v1354 = vpop.f32.mrb[0].mxu0
    %v1355 = vpop.f32.mrb[0].mxu0
    %v1356 = vadd.f32 0.0, %v1355
    %v1357 = vpop.f32.mrb[0].mxu0
    %1358 = vmatprep.mubr.bf16.mxu0 0
    %1359 = vmatmul.mubr.bf16.gmra.mrb[0].mxu0 %v1091
    %v1360 = vpop.f32.mrb[0].mxu0
    %v1361 = vadd.f32 0.0, %v1360
    %v1362 = vpop.f32.mrb[0].mxu0
    %v1363 = vpop.f32.mrb[0].mxu0
    %v1364 = vadd.f32 0.0, %v1363
    %v1365 = vpop.f32.mrb[0].mxu0
    %1366 = vmatprep.mubr.bf16.mxu0 0
    %1367 = vmatmul.mubr.bf16.gmra.mrb[0].mxu0 %v1092
    %v1368 = vpop.f32.mrb[0].mxu0
    %v1369 = vadd.f32 0.0, %v1368
    %v1370 = vpop.f32.mrb[0].mxu0
    %v1371 = vpop.f32.mrb[0].mxu0
    %v1372 = vadd.f32 0.0, %v1371
    %v1373 = vpop.f32.mrb[0].mxu0
    %1374 = vmatprep.mubr.bf16.mxu0 0
    %1375 = vmatmul.mubr.bf16.gmra.mrb[0].mxu0 %v1093
    %v1376 = vpop.f32.mrb[0].mxu0
    %v1377 = vadd.f32 0.0, %v1376
    %v1378 = vpop.f32.mrb[0].mxu0
    %v1379 = vpop.f32.mrb[0].mxu0
    %v1380 = vadd.f32 0.0, %v1379
    %v1381 = vpop.f32.mrb[0].mxu0
    %1382 = vdwg.mxu0
    %1383 = vst [vmem:[#allocation3] sm:$0xff] 0.0
    %1384 = vst [vmem:[#allocation3 + $0x8] sm:$0xff] 0.0
    %1385 = vst [vmem:[#allocation3 + $0x10] sm:$0xff] 0.0
    %1386 = vst [vmem:[#allocation3 + $0x18] sm:$0xff] 0.0
    %1387 = vst [vmem:[#allocation3 + $0x20] sm:$0xff] 0.0
    %1388 = vst [vmem:[#allocation3 + $0x28] sm:$0xff] 0.0
    %1389 = vst [vmem:[#allocation3 + $0x30] sm:$0xff] 0.0
    %1390 = vst [vmem:[#allocation3 + $0x38] sm:$0xff] 0.0
    %1391 = vst [vmem:[#allocation3 + $0x40] sm:$0xff] 0.0
    %1392 = vst [vmem:[#allocation3 + $0x48] sm:$0xff] 0.0
    %1393 = vst [vmem:[#allocation3 + $0x50] sm:$0xff] 0.0
    %1394 = vst [vmem:[#allocation3 + $0x58] sm:$0xff] 0.0
    %1395 = vst [vmem:[#allocation3 + $0x60] sm:$0xff] 0.0
    %1396 = vst [vmem:[#allocation3 + $0x68] sm:$0xff] 0.0
    %1397 = vst [vmem:[#allocation3 + $0x70] sm:$0xff] 0.0
    %1398 = vst [vmem:[#allocation3 + $0x78] sm:$0xff] 0.0
    %1399 = vst [vmem:[#allocation3 + $0x80] sm:$0xff] 0.0
    %1400 = vst [vmem:[#allocation3 + $0x88] sm:$0xff] 0.0
    %1401 = vst [vmem:[#allocation3 + $0x90] sm:$0xff] 0.0
    %1402 = vst [vmem:[#allocation3 + $0x98] sm:$0xff] 0.0
    %1403 = vst [vmem:[#allocation3 + $0xa0] sm:$0xff] 0.0
    %1404 = vst [vmem:[#allocation3 + $0xa8] sm:$0xff] 0.0
    %1405 = vst [vmem:[#allocation3 + $0xb0] sm:$0xff] 0.0
    %1406 = vst [vmem:[#allocation3 + $0xb8] sm:$0xff] 0.0
    %1407 = vst [vmem:[#allocation3 + $0xc0] sm:$0xff] 0.0
    %1408 = vst [vmem:[#allocation3 + $0xc8] sm:$0xff] 0.0
    %1409 = vst [vmem:[#allocation3 + $0xd0] sm:$0xff] 0.0
    %1410 = vst [vmem:[#allocation3 + $0xd8] sm:$0xff] 0.0
    %1411 = vst [vmem:[#allocation3 + $0xe0] sm:$0xff] 0.0
    %1412 = vst [vmem:[#allocation3 + $0xe8] sm:$0xff] 0.0
    %1413 = vst [vmem:[#allocation3 + $0xf0] sm:$0xff] 0.0
    %1414 = vst [vmem:[#allocation3 + $0xf8] sm:$0xff] 0.0
    %1415 = vst [vmem:[#allocation3 + $0x100] sm:$0xff] 0.0
    %1416 = vst [vmem:[#allocation3 + $0x108] sm:$0xff] 0.0
    %1417 = vst [vmem:[#allocation3 + $0x110] sm:$0xff] 0.0
    %1418 = vst [vmem:[#allocation3 + $0x118] sm:$0xff] 0.0
    %1419 = vst [vmem:[#allocation3 + $0x120] sm:$0xff] 0.0
    %1420 = vst [vmem:[#allocation3 + $0x128] sm:$0xff] 0.0
    %1421 = vst [vmem:[#allocation3 + $0x130] sm:$0xff] 0.0
    %1422 = vst [vmem:[#allocation3 + $0x138] sm:$0xff] 0.0
    %1423 = vst [vmem:[#allocation3 + $0x140] sm:$0xff] 0.0
    %1424 = vst [vmem:[#allocation3 + $0x148] sm:$0xff] 0.0
    %1425 = vst [vmem:[#allocation3 + $0x150] sm:$0xff] 0.0
    %1426 = vst [vmem:[#allocation3 + $0x158] sm:$0xff] 0.0
    %1427 = vst [vmem:[#allocation3 + $0x160] sm:$0xff] 0.0
    %1428 = vst [vmem:[#allocation3 + $0x168] sm:$0xff] 0.0
    %1429 = vst [vmem:[#allocation3 + $0x170] sm:$0xff] 0.0
    %1430 = vst [vmem:[#allocation3 + $0x178] sm:$0xff] 0.0
    %1431 = vst [vmem:[#allocation3 + $0x180] sm:$0xff] 0.0
    %1432 = vst [vmem:[#allocation3 + $0x188] sm:$0xff] 0.0
    %1433 = vst [vmem:[#allocation3 + $0x190] sm:$0xff] 0.0
    %1434 = vst [vmem:[#allocation3 + $0x198] sm:$0xff] 0.0
    %1435 = vst [vmem:[#allocation3 + $0x1a0] sm:$0xff] 0.0
    %1436 = vst [vmem:[#allocation3 + $0x1a8] sm:$0xff] 0.0
    %1437 = vst [vmem:[#allocation3 + $0x1b0] sm:$0xff] 0.0
    %1438 = vst [vmem:[#allocation3 + $0x1b8] sm:$0xff] 0.0
    %1439 = vst [vmem:[#allocation3 + $0x1c0] sm:$0xff] 0.0
    %1440 = vst [vmem:[#allocation3 + $0x1c8] sm:$0xff] 0.0
    %1441 = vst [vmem:[#allocation3 + $0x1d0] sm:$0xff] 0.0
    %1442 = vst [vmem:[#allocation3 + $0x1d8] sm:$0xff] 0.0
    %1443 = vst [vmem:[#allocation3 + $0x1e0] sm:$0xff] 0.0
    %1444 = vst [vmem:[#allocation3 + $0x1e8] sm:$0xff] 0.0
    %1445 = vst [vmem:[#allocation3 + $0x1f0] sm:$0xff] 0.0
    %1446 = vst [vmem:[#allocation3 + $0x1f8] sm:$0xff] 0.0
    %v1447 = vld [vmem:[%s1] sm:$0xff]
    %v1448 = vld [vmem:[%s1 + $0x8] sm:$0xff]
    %v1449 = vld [vmem:[%s1 + $0x10] sm:$0xff]
    %v1450 = vld [vmem:[%s1 + $0x18] sm:$0xff]
    %v1451 = vld [vmem:[%s1 + $0x20] sm:$0xff]
    %v1452 = vld [vmem:[%s1 + $0x28] sm:$0xff]
    %v1453 = vld [vmem:[%s1 + $0x30] sm:$0xff]
    %v1454 = vld [vmem:[%s1 + $0x38] sm:$0xff]
    %v1455 = vld [vmem:[%s1 + $0x40] sm:$0xff]
    %v1456 = vld [vmem:[%s1 + $0x48] sm:$0xff]
    %v1457 = vld [vmem:[%s1 + $0x50] sm:$0xff]
    %v1458 = vld [vmem:[%s1 + $0x58] sm:$0xff]
    %v1459 = vld [vmem:[%s1 + $0x60] sm:$0xff]
    %v1460 = vld [vmem:[%s1 + $0x68] sm:$0xff]
    %v1461 = vld [vmem:[%s1 + $0x70] sm:$0xff]
    %v1462 = vld [vmem:[%s1 + $0x78] sm:$0xff]
    %v1463 = vld [vmem:[%s1 + $0x80] sm:$0xff]
    %v1464 = vld [vmem:[%s1 + $0x88] sm:$0xff]
    %v1465 = vld [vmem:[%s1 + $0x90] sm:$0xff]
    %v1466 = vld [vmem:[%s1 + $0x98] sm:$0xff]
    %v1467 = vld [vmem:[%s1 + $0xa0] sm:$0xff]
    %v1468 = vld [vmem:[%s1 + $0xa8] sm:$0xff]
    %v1469 = vld [vmem:[%s1 + $0xb0] sm:$0xff]
    %v1470 = vld [vmem:[%s1 + $0xb8] sm:$0xff]
    %v1471 = vld [vmem:[%s1 + $0xc0] sm:$0xff]
    %v1472 = vld [vmem:[%s1 + $0xc8] sm:$0xff]
    %v1473 = vld [vmem:[%s1 + $0xd0] sm:$0xff]
    %v1474 = vld [vmem:[%s1 + $0xd8] sm:$0xff]
    %v1475 = vld [vmem:[%s1 + $0xe0] sm:$0xff]
    %v1476 = vld [vmem:[%s1 + $0xe8] sm:$0xff]
    %v1477 = vld [vmem:[%s1 + $0xf0] sm:$0xff]
    %v1478 = vld [vmem:[%s1 + $0xf8] sm:$0xff]
    %v1479 = vld [vmem:[%s1 + $0x100] sm:$0xff]
    %v1480 = vld [vmem:[%s1 + $0x108] sm:$0xff]
    %v1481 = vld [vmem:[%s1 + $0x110] sm:$0xff]
    %v1482 = vld [vmem:[%s1 + $0x118] sm:$0xff]
    %v1483 = vld [vmem:[%s1 + $0x120] sm:$0xff]
    %v1484 = vld [vmem:[%s1 + $0x128] sm:$0xff]
    %v1485 = vld [vmem:[%s1 + $0x130] sm:$0xff]
    %v1486 = vld [vmem:[%s1 + $0x138] sm:$0xff]
    %v1487 = vld [vmem:[%s1 + $0x140] sm:$0xff]
    %v1488 = vld [vmem:[%s1 + $0x148] sm:$0xff]
    %v1489 = vld [vmem:[%s1 + $0x150] sm:$0xff]
    %v1490 = vld [vmem:[%s1 + $0x158] sm:$0xff]
    %v1491 = vld [vmem:[%s1 + $0x160] sm:$0xff]
    %v1492 = vld [vmem:[%s1 + $0x168] sm:$0xff]
    %v1493 = vld [vmem:[%s1 + $0x170] sm:$0xff]
    %v1494 = vld [vmem:[%s1 + $0x178] sm:$0xff]
    %v1495 = vld [vmem:[%s1 + $0x180] sm:$0xff]
    %v1496 = vld [vmem:[%s1 + $0x188] sm:$0xff]
    %v1497 = vld [vmem:[%s1 + $0x190] sm:$0xff]
    %v1498 = vld [vmem:[%s1 + $0x198] sm:$0xff]
    %v1499 = vld [vmem:[%s1 + $0x1a0] sm:$0xff]
    %v1500 = vld [vmem:[%s1 + $0x1a8] sm:$0xff]
    %v1501 = vld [vmem:[%s1 + $0x1b0] sm:$0xff]
    %v1502 = vld [vmem:[%s1 + $0x1b8] sm:$0xff]
    %v1503 = vld [vmem:[%s1 + $0x1c0] sm:$0xff]
    %v1504 = vld [vmem:[%s1 + $0x1c8] sm:$0xff]
    %v1505 = vld [vmem:[%s1 + $0x1d0] sm:$0xff]
    %v1506 = vld [vmem:[%s1 + $0x1d8] sm:$0xff]
    %v1507 = vld [vmem:[%s1 + $0x1e0] sm:$0xff]
    %v1508 = vld [vmem:[%s1 + $0x1e8] sm:$0xff]
    %v1509 = vld [vmem:[%s1 + $0x1f0] sm:$0xff]
    %v1510 = vld [vmem:[%s1 + $0x1f8] sm:$0xff]
    %1511 = vst.msk [vmem:[#allocation3] sm:$0xff] %vm239, %v1447
    %1512 = vst.msk [vmem:[#allocation3 + $0x8] sm:$0xff] %vm239, %v1448
    %1513 = vst.msk [vmem:[#allocation3 + $0x10] sm:$0xff] %vm239, %v1449
    %1514 = vst.msk [vmem:[#allocation3 + $0x18] sm:$0xff] %vm239, %v1450
    %1515 = vst.msk [vmem:[#allocation3 + $0x20] sm:$0xff] %vm239, %v1451
    %1516 = vst.msk [vmem:[#allocation3 + $0x28] sm:$0xff] %vm239, %v1452
    %1517 = vst.msk [vmem:[#allocation3 + $0x30] sm:$0xff] %vm239, %v1453
    %1518 = vst.msk [vmem:[#allocation3 + $0x38] sm:$0xff] %vm239, %v1454
    %1519 = vst.msk [vmem:[#allocation3 + $0x40] sm:$0xff] %vm239, %v1455
    %1520 = vst.msk [vmem:[#allocation3 + $0x48] sm:$0xff] %vm239, %v1456
    %1521 = vst.msk [vmem:[#allocation3 + $0x50] sm:$0xff] %vm239, %v1457
    %1522 = vst.msk [vmem:[#allocation3 + $0x58] sm:$0xff] %vm239, %v1458
    %1523 = vst.msk [vmem:[#allocation3 + $0x60] sm:$0xff] %vm239, %v1459
    %1524 = vst.msk [vmem:[#allocation3 + $0x68] sm:$0xff] %vm239, %v1460
    %1525 = vst.msk [vmem:[#allocation3 + $0x70] sm:$0xff] %vm239, %v1461
    %1526 = vst.msk [vmem:[#allocation3 + $0x78] sm:$0xff] %vm239, %v1462
    %1527 = vst.msk [vmem:[#allocation3 + $0x80] sm:$0xff] %vm239, %v1463
    %1528 = vst.msk [vmem:[#allocation3 + $0x88] sm:$0xff] %vm239, %v1464
    %1529 = vst.msk [vmem:[#allocation3 + $0x90] sm:$0xff] %vm239, %v1465
    %1530 = vst.msk [vmem:[#allocation3 + $0x98] sm:$0xff] %vm239, %v1466
    %1531 = vst.msk [vmem:[#allocation3 + $0xa0] sm:$0xff] %vm239, %v1467
    %1532 = vst.msk [vmem:[#allocation3 + $0xa8] sm:$0xff] %vm239, %v1468
    %1533 = vst.msk [vmem:[#allocation3 + $0xb0] sm:$0xff] %vm239, %v1469
    %1534 = vst.msk [vmem:[#allocation3 + $0xb8] sm:$0xff] %vm239, %v1470
    %1535 = vst.msk [vmem:[#allocation3 + $0xc0] sm:$0xff] %vm239, %v1471
    %1536 = vst.msk [vmem:[#allocation3 + $0xc8] sm:$0xff] %vm239, %v1472
    %1537 = vst.msk [vmem:[#allocation3 + $0xd0] sm:$0xff] %vm239, %v1473
    %1538 = vst.msk [vmem:[#allocation3 + $0xd8] sm:$0xff] %vm239, %v1474
    %1539 = vst.msk [vmem:[#allocation3 + $0xe0] sm:$0xff] %vm239, %v1475
    %1540 = vst.msk [vmem:[#allocation3 + $0xe8] sm:$0xff] %vm239, %v1476
    %1541 = vst.msk [vmem:[#allocation3 + $0xf0] sm:$0xff] %vm239, %v1477
    %1542 = vst.msk [vmem:[#allocation3 + $0xf8] sm:$0xff] %vm239, %v1478
    %1543 = vst.msk [vmem:[#allocation3 + $0x100] sm:$0xff] %vm239, %v1479
    %1544 = vst.msk [vmem:[#allocation3 + $0x108] sm:$0xff] %vm239, %v1480
    %1545 = vst.msk [vmem:[#allocation3 + $0x110] sm:$0xff] %vm239, %v1481
    %1546 = vst.msk [vmem:[#allocation3 + $0x118] sm:$0xff] %vm239, %v1482
    %1547 = vst.msk [vmem:[#allocation3 + $0x120] sm:$0xff] %vm239, %v1483
    %1548 = vst.msk [vmem:[#allocation3 + $0x128] sm:$0xff] %vm239, %v1484
    %1549 = vst.msk [vmem:[#allocation3 + $0x130] sm:$0xff] %vm239, %v1485
    %1550 = vst.msk [vmem:[#allocation3 + $0x138] sm:$0xff] %vm239, %v1486
    %1551 = vst.msk [vmem:[#allocation3 + $0x140] sm:$0xff] %vm239, %v1487
    %1552 = vst.msk [vmem:[#allocation3 + $0x148] sm:$0xff] %vm239, %v1488
    %1553 = vst.msk [vmem:[#allocation3 + $0x150] sm:$0xff] %vm239, %v1489
    %1554 = vst.msk [vmem:[#allocation3 + $0x158] sm:$0xff] %vm239, %v1490
    %1555 = vst.msk [vmem:[#allocation3 + $0x160] sm:$0xff] %vm239, %v1491
    %1556 = vst.msk [vmem:[#allocation3 + $0x168] sm:$0xff] %vm239, %v1492
    %1557 = vst.msk [vmem:[#allocation3 + $0x170] sm:$0xff] %vm239, %v1493
    %1558 = vst.msk [vmem:[#allocation3 + $0x178] sm:$0xff] %vm239, %v1494
    %1559 = vst.msk [vmem:[#allocation3 + $0x180] sm:$0xff] %vm239, %v1495
    %1560 = vst.msk [vmem:[#allocation3 + $0x188] sm:$0xff] %vm239, %v1496
    %1561 = vst.msk [vmem:[#allocation3 + $0x190] sm:$0xff] %vm239, %v1497
    %1562 = vst.msk [vmem:[#allocation3 + $0x198] sm:$0xff] %vm239, %v1498
    %1563 = vst.msk [vmem:[#allocation3 + $0x1a0] sm:$0xff] %vm239, %v1499
    %1564 = vst.msk [vmem:[#allocation3 + $0x1a8] sm:$0xff] %vm239, %v1500
    %1565 = vst.msk [vmem:[#allocation3 + $0x1b0] sm:$0xff] %vm239, %v1501
    %1566 = vst.msk [vmem:[#allocation3 + $0x1b8] sm:$0xff] %vm239, %v1502
    %1567 = vst.msk [vmem:[#allocation3 + $0x1c0] sm:$0xff] %vm239, %v1503
    %1568 = vst.msk [vmem:[#allocation3 + $0x1c8] sm:$0xff] %vm239, %v1504
    %1569 = vst.msk [vmem:[#allocation3 + $0x1d0] sm:$0xff] %vm239, %v1505
    %1570 = vst.msk [vmem:[#allocation3 + $0x1d8] sm:$0xff] %vm239, %v1506
    %1571 = vst.msk [vmem:[#allocation3 + $0x1e0] sm:$0xff] %vm239, %v1507
    %1572 = vst.msk [vmem:[#allocation3 + $0x1e8] sm:$0xff] %vm239, %v1508
    %1573 = vst.msk [vmem:[#allocation3 + $0x1f0] sm:$0xff] %vm239, %v1509
    %1574 = vst.msk [vmem:[#allocation3 + $0x1f8] sm:$0xff] %vm239, %v1510
    %v1575 = vld [vmem:[#allocation3] sm:$0xff]
    %v1576 = vld [vmem:[#allocation3 + $0x8] sm:$0xff]
    %v1577 = vld [vmem:[#allocation3 + $0x10] sm:$0xff]
    %v1578 = vld [vmem:[#allocation3 + $0x18] sm:$0xff]
    %v1579 = vld [vmem:[#allocation3 + $0x20] sm:$0xff]
    %v1580 = vld [vmem:[#allocation3 + $0x28] sm:$0xff]
    %v1581 = vld [vmem:[#allocation3 + $0x30] sm:$0xff]
    %v1582 = vld [vmem:[#allocation3 + $0x38] sm:$0xff]
    %v1583 = vld [vmem:[#allocation3 + $0x40] sm:$0xff]
    %v1584 = vld [vmem:[#allocation3 + $0x48] sm:$0xff]
    %v1585 = vld [vmem:[#allocation3 + $0x50] sm:$0xff]
    %v1586 = vld [vmem:[#allocation3 + $0x58] sm:$0xff]
    %v1587 = vld [vmem:[#allocation3 + $0x60] sm:$0xff]
    %v1588 = vld [vmem:[#allocation3 + $0x68] sm:$0xff]
    %v1589 = vld [vmem:[#allocation3 + $0x70] sm:$0xff]
    %v1590 = vld [vmem:[#allocation3 + $0x78] sm:$0xff]
    %v1591 = vld [vmem:[#allocation3 + $0x80] sm:$0xff]
    %v1592 = vld [vmem:[#allocation3 + $0x88] sm:$0xff]
    %v1593 = vld [vmem:[#allocation3 + $0x90] sm:$0xff]
    %v1594 = vld [vmem:[#allocation3 + $0x98] sm:$0xff]
    %v1595 = vld [vmem:[#allocation3 + $0xa0] sm:$0xff]
    %v1596 = vld [vmem:[#allocation3 + $0xa8] sm:$0xff]
    %v1597 = vld [vmem:[#allocation3 + $0xb0] sm:$0xff]
    %v1598 = vld [vmem:[#allocation3 + $0xb8] sm:$0xff]
    %v1599 = vld [vmem:[#allocation3 + $0xc0] sm:$0xff]
    %v1600 = vld [vmem:[#allocation3 + $0xc8] sm:$0xff]
    %v1601 = vld [vmem:[#allocation3 + $0xd0] sm:$0xff]
    %v1602 = vld [vmem:[#allocation3 + $0xd8] sm:$0xff]
    %v1603 = vld [vmem:[#allocation3 + $0xe0] sm:$0xff]
    %v1604 = vld [vmem:[#allocation3 + $0xe8] sm:$0xff]
    %v1605 = vld [vmem:[#allocation3 + $0xf0] sm:$0xff]
    %v1606 = vld [vmem:[#allocation3 + $0xf8] sm:$0xff]
    %v1607 = vld [vmem:[#allocation3 + $0x100] sm:$0xff]
    %v1608 = vld [vmem:[#allocation3 + $0x108] sm:$0xff]
    %v1609 = vld [vmem:[#allocation3 + $0x110] sm:$0xff]
    %v1610 = vld [vmem:[#allocation3 + $0x118] sm:$0xff]
    %v1611 = vld [vmem:[#allocation3 + $0x120] sm:$0xff]
    %v1612 = vld [vmem:[#allocation3 + $0x128] sm:$0xff]
    %v1613 = vld [vmem:[#allocation3 + $0x130] sm:$0xff]
    %v1614 = vld [vmem:[#allocation3 + $0x138] sm:$0xff]
    %v1615 = vld [vmem:[#allocation3 + $0x140] sm:$0xff]
    %v1616 = vld [vmem:[#allocation3 + $0x148] sm:$0xff]
    %v1617 = vld [vmem:[#allocation3 + $0x150] sm:$0xff]
    %v1618 = vld [vmem:[#allocation3 + $0x158] sm:$0xff]
    %v1619 = vld [vmem:[#allocation3 + $0x160] sm:$0xff]
    %v1620 = vld [vmem:[#allocation3 + $0x168] sm:$0xff]
    %v1621 = vld [vmem:[#allocation3 + $0x170] sm:$0xff]
    %v1622 = vld [vmem:[#allocation3 + $0x178] sm:$0xff]
    %v1623 = vld [vmem:[#allocation3 + $0x180] sm:$0xff]
    %v1624 = vld [vmem:[#allocation3 + $0x188] sm:$0xff]
    %v1625 = vld [vmem:[#allocation3 + $0x190] sm:$0xff]
    %v1626 = vld [vmem:[#allocation3 + $0x198] sm:$0xff]
    %v1627 = vld [vmem:[#allocation3 + $0x1a0] sm:$0xff]
    %v1628 = vld [vmem:[#allocation3 + $0x1a8] sm:$0xff]
    %v1629 = vld [vmem:[#allocation3 + $0x1b0] sm:$0xff]
    %v1630 = vld [vmem:[#allocation3 + $0x1b8] sm:$0xff]
    %v1631 = vld [vmem:[#allocation3 + $0x1c0] sm:$0xff]
    %v1632 = vld [vmem:[#allocation3 + $0x1c8] sm:$0xff]
    %v1633 = vld [vmem:[#allocation3 + $0x1d0] sm:$0xff]
    %v1634 = vld [vmem:[#allocation3 + $0x1d8] sm:$0xff]
    %v1635 = vld [vmem:[#allocation3 + $0x1e0] sm:$0xff]
    %v1636 = vld [vmem:[#allocation3 + $0x1e8] sm:$0xff]
    %v1637 = vld [vmem:[#allocation3 + $0x1f0] sm:$0xff]
    %v1638 = vld [vmem:[#allocation3 + $0x1f8] sm:$0xff]
    %v1639 = vsub.f32 %v1129, %v1575
    %v1640 = vsub.f32 %v1132, %v1576
    %v1641 = vsub.f32 %v1137, %v1577
    %v1642 = vsub.f32 %v1140, %v1578
    %v1643 = vsub.f32 %v1145, %v1579
    %v1644 = vsub.f32 %v1148, %v1580
    %v1645 = vsub.f32 %v1153, %v1581
    %v1646 = vsub.f32 %v1156, %v1582
    %v1647 = vsub.f32 %v1161, %v1583
    %v1648 = vsub.f32 %v1164, %v1584
    %v1649 = vsub.f32 %v1169, %v1585
    %v1650 = vsub.f32 %v1172, %v1586
    %v1651 = vsub.f32 %v1177, %v1587
    %v1652 = vsub.f32 %v1180, %v1588
    %v1653 = vsub.f32 %v1185, %v1589
    %v1654 = vsub.f32 %v1188, %v1590
    %v1655 = vsub.f32 %v1193, %v1591
    %v1656 = vsub.f32 %v1196, %v1592
    %v1657 = vsub.f32 %v1201, %v1593
    %v1658 = vsub.f32 %v1204, %v1594
    %v1659 = vsub.f32 %v1209, %v1595
    %v1660 = vsub.f32 %v1212, %v1596
    %v1661 = vsub.f32 %v1217, %v1597
    %v1662 = vsub.f32 %v1220, %v1598
    %v1663 = vsub.f32 %v1225, %v1599
    %v1664 = vsub.f32 %v1228, %v1600
    %v1665 = vsub.f32 %v1233, %v1601
    %v1666 = vsub.f32 %v1236, %v1602
    %v1667 = vsub.f32 %v1241, %v1603
    %v1668 = vsub.f32 %v1244, %v1604
    %v1669 = vsub.f32 %v1249, %v1605
    %v1670 = vsub.f32 %v1252, %v1606
    %v1671 = vsub.f32 %v1257, %v1607
    %v1672 = vsub.f32 %v1260, %v1608
    %v1673 = vsub.f32 %v1265, %v1609
    %v1674 = vsub.f32 %v1268, %v1610
    %v1675 = vsub.f32 %v1273, %v1611
    %v1676 = vsub.f32 %v1276, %v1612
    %v1677 = vsub.f32 %v1281, %v1613
    %v1678 = vsub.f32 %v1284, %v1614
    %v1679 = vsub.f32 %v1289, %v1615
    %v1680 = vsub.f32 %v1292, %v1616
    %v1681 = vsub.f32 %v1297, %v1617
    %v1682 = vsub.f32 %v1300, %v1618
    %v1683 = vsub.f32 %v1305, %v1619
    %v1684 = vsub.f32 %v1308, %v1620
    %v1685 = vsub.f32 %v1313, %v1621
    %v1686 = vsub.f32 %v1316, %v1622
    %v1687 = vsub.f32 %v1321, %v1623
    %v1688 = vsub.f32 %v1324, %v1624
    %v1689 = vsub.f32 %v1329, %v1625
    %v1690 = vsub.f32 %v1332, %v1626
    %v1691 = vsub.f32 %v1337, %v1627
    %v1692 = vsub.f32 %v1340, %v1628
    %v1693 = vsub.f32 %v1345, %v1629
    %v1694 = vsub.f32 %v1348, %v1630
    %v1695 = vsub.f32 %v1353, %v1631
    %v1696 = vsub.f32 %v1356, %v1632
    %v1697 = vsub.f32 %v1361, %v1633
    %v1698 = vsub.f32 %v1364, %v1634
    %v1699 = vsub.f32 %v1369, %v1635
    %v1700 = vsub.f32 %v1372, %v1636
    %v1701 = vsub.f32 %v1377, %v1637
    %v1702 = vsub.f32 %v1380, %v1638
    %v1703 = vmul.f32 %v1639, %v1639
    %v1704 = vmul.f32 %v1640, %v1640
    %v1705 = vmul.f32 %v1641, %v1641
    %v1706 = vmul.f32 %v1642, %v1642
    %v1707 = vmul.f32 %v1643, %v1643
    %v1708 = vmul.f32 %v1644, %v1644
    %v1709 = vmul.f32 %v1645, %v1645
    %v1710 = vmul.f32 %v1646, %v1646
    %v1711 = vmul.f32 %v1647, %v1647
    %v1712 = vmul.f32 %v1648, %v1648
    %v1713 = vmul.f32 %v1649, %v1649
    %v1714 = vmul.f32 %v1650, %v1650
    %v1715 = vmul.f32 %v1651, %v1651
    %v1716 = vmul.f32 %v1652, %v1652
    %v1717 = vmul.f32 %v1653, %v1653
    %v1718 = vmul.f32 %v1654, %v1654
    %v1719 = vmul.f32 %v1655, %v1655
    %v1720 = vmul.f32 %v1656, %v1656
    %v1721 = vmul.f32 %v1657, %v1657
    %v1722 = vmul.f32 %v1658, %v1658
    %v1723 = vmul.f32 %v1659, %v1659
    %v1724 = vmul.f32 %v1660, %v1660
    %v1725 = vmul.f32 %v1661, %v1661
    %v1726 = vmul.f32 %v1662, %v1662
    %v1727 = vmul.f32 %v1663, %v1663
    %v1728 = vmul.f32 %v1664, %v1664
    %v1729 = vmul.f32 %v1665, %v1665
    %v1730 = vmul.f32 %v1666, %v1666
    %v1731 = vmul.f32 %v1667, %v1667
    %v1732 = vmul.f32 %v1668, %v1668
    %v1733 = vmul.f32 %v1669, %v1669
    %v1734 = vmul.f32 %v1670, %v1670
    %v1735 = vmul.f32 %v1671, %v1671
    %v1736 = vmul.f32 %v1672, %v1672
    %v1737 = vmul.f32 %v1673, %v1673
    %v1738 = vmul.f32 %v1674, %v1674
    %v1739 = vmul.f32 %v1675, %v1675
    %v1740 = vmul.f32 %v1676, %v1676
    %v1741 = vmul.f32 %v1677, %v1677
    %v1742 = vmul.f32 %v1678, %v1678
    %v1743 = vmul.f32 %v1679, %v1679
    %v1744 = vmul.f32 %v1680, %v1680
    %v1745 = vmul.f32 %v1681, %v1681
    %v1746 = vmul.f32 %v1682, %v1682
    %v1747 = vmul.f32 %v1683, %v1683
    %v1748 = vmul.f32 %v1684, %v1684
    %v1749 = vmul.f32 %v1685, %v1685
    %v1750 = vmul.f32 %v1686, %v1686
    %v1751 = vmul.f32 %v1687, %v1687
    %v1752 = vmul.f32 %v1688, %v1688
    %v1753 = vmul.f32 %v1689, %v1689
    %v1754 = vmul.f32 %v1690, %v1690
    %v1755 = vmul.f32 %v1691, %v1691
    %v1756 = vmul.f32 %v1692, %v1692
    %v1757 = vmul.f32 %v1693, %v1693
    %v1758 = vmul.f32 %v1694, %v1694
    %v1759 = vmul.f32 %v1695, %v1695
    %v1760 = vmul.f32 %v1696, %v1696
    %v1761 = vmul.f32 %v1697, %v1697
    %v1762 = vmul.f32 %v1698, %v1698
    %v1763 = vmul.f32 %v1699, %v1699
    %v1764 = vmul.f32 %v1700, %v1700
    %v1765 = vmul.f32 %v1701, %v1701
    %v1766 = vmul.f32 %v1702, %v1702
    %v1767 = vadd.f32 %v1703, %v1704
    %v1768 = vadd.f32 %v1767, %v1705
    %v1769 = vadd.f32 %v1768, %v1706
    %v1770 = vadd.f32 %v1769, %v1707
    %v1771 = vadd.f32 %v1770, %v1708
    %v1772 = vadd.f32 %v1771, %v1709
    %v1773 = vadd.f32 %v1772, %v1710
    %v1774 = vadd.f32 %v1773, %v1711
    %v1775 = vadd.f32 %v1774, %v1712
    %v1776 = vadd.f32 %v1775, %v1713
    %v1777 = vadd.f32 %v1776, %v1714
    %v1778 = vadd.f32 %v1777, %v1715
    %v1779 = vadd.f32 %v1778, %v1716
    %v1780 = vadd.f32 %v1779, %v1717
    %v1781 = vadd.f32 %v1780, %v1718
    %v1782 = vadd.f32 %v1781, %v1719
    %v1783 = vadd.f32 %v1782, %v1720
    %v1784 = vadd.f32 %v1783, %v1721
    %v1785 = vadd.f32 %v1784, %v1722
    %v1786 = vadd.f32 %v1785, %v1723
    %v1787 = vadd.f32 %v1786, %v1724
    %v1788 = vadd.f32 %v1787, %v1725
    %v1789 = vadd.f32 %v1788, %v1726
    %v1790 = vadd.f32 %v1789, %v1727
    %v1791 = vadd.f32 %v1790, %v1728
    %v1792 = vadd.f32 %v1791, %v1729
    %v1793 = vadd.f32 %v1792, %v1730
    %v1794 = vadd.f32 %v1793, %v1731
    %v1795 = vadd.f32 %v1794, %v1732
    %v1796 = vadd.f32 %v1795, %v1733
    %v1797 = vadd.f32 %v1796, %v1734
    %v1798 = vadd.f32 %v1797, %v1735
    %v1799 = vadd.f32 %v1798, %v1736
    %v1800 = vadd.f32 %v1799, %v1737
    %v1801 = vadd.f32 %v1800, %v1738
    %v1802 = vadd.f32 %v1801, %v1739
    %v1803 = vadd.f32 %v1802, %v1740
    %v1804 = vadd.f32 %v1803, %v1741
    %v1805 = vadd.f32 %v1804, %v1742
    %v1806 = vadd.f32 %v1805, %v1743
    %v1807 = vadd.f32 %v1806, %v1744
    %v1808 = vadd.f32 %v1807, %v1745
    %v1809 = vadd.f32 %v1808, %v1746
    %v1810 = vadd.f32 %v1809, %v1747
    %v1811 = vadd.f32 %v1810, %v1748
    %v1812 = vadd.f32 %v1811, %v1749
    %v1813 = vadd.f32 %v1812, %v1750
    %v1814 = vadd.f32 %v1813, %v1751
    %v1815 = vadd.f32 %v1814, %v1752
    %v1816 = vadd.f32 %v1815, %v1753
    %v1817 = vadd.f32 %v1816, %v1754
    %v1818 = vadd.f32 %v1817, %v1755
    %v1819 = vadd.f32 %v1818, %v1756
    %v1820 = vadd.f32 %v1819, %v1757
    %v1821 = vadd.f32 %v1820, %v1758
    %v1822 = vadd.f32 %v1821, %v1759
    %v1823 = vadd.f32 %v1822, %v1760
    %v1824 = vadd.f32 %v1823, %v1761
    %v1825 = vadd.f32 %v1824, %v1762
    %v1826 = vadd.f32 %v1825, %v1763
    %v1827 = vadd.f32 %v1826, %v1764
    %v1828 = vadd.f32 %v1827, %v1765
    %v1829 = vadd.f32 %v1828, %v1766
    %1830 = vadd.xlane.f32.xlu0 %v1829
    %v1831 = vpop.xlane.xlu0 %1830
    %v1832 = vrot.slane %v1831, 4
    %v1833 = vadd.f32 %v1831, %v1832
    %v1834 = vrot.slane %v1833, 2
    %v1835 = vadd.f32 %v1833, %v1834
    %v1836 = vrot.slane %v1835, 1
    %v1837 = vadd.f32 %v1835, %v1836
    %s1838 = vtos %v1837
    %v1839 = vstv %s1838
    %v1840 = vmul.f32 %v1839, 0.00048828125
    %vm1841 = vcmask 0
    %1842 = vst.msk [vmem:[#allocation8] sm:$0x1] %vm1841, %v1840
    %v1843 = vpack.c.bf16 %v1640, %v1639
    %v1844 = vpack.c.bf16 %v1642, %v1641
    %v1845 = vpack.c.bf16 %v1644, %v1643
    %v1846 = vpack.c.bf16 %v1646, %v1645
    %v1847 = vpack.c.bf16 %v1648, %v1647
    %v1848 = vpack.c.bf16 %v1650, %v1649
    %v1849 = vpack.c.bf16 %v1652, %v1651
    %v1850 = vpack.c.bf16 %v1654, %v1653
    %v1851 = vpack.c.bf16 %v1656, %v1655
    %v1852 = vpack.c.bf16 %v1658, %v1657
    %v1853 = vpack.c.bf16 %v1660, %v1659
    %v1854 = vpack.c.bf16 %v1662, %v1661
    %v1855 = vpack.c.bf16 %v1664, %v1663
    %v1856 = vpack.c.bf16 %v1666, %v1665
    %v1857 = vpack.c.bf16 %v1668, %v1667
    %v1858 = vpack.c.bf16 %v1670, %v1669
    %v1859 = vpack.c.bf16 %v1672, %v1671
    %v1860 = vpack.c.bf16 %v1674, %v1673
    %v1861 = vpack.c.bf16 %v1676, %v1675
    %v1862 = vpack.c.bf16 %v1678, %v1677
    %v1863 = vpack.c.bf16 %v1680, %v1679
    %v1864 = vpack.c.bf16 %v1682, %v1681
    %v1865 = vpack.c.bf16 %v1684, %v1683
    %v1866 = vpack.c.bf16 %v1686, %v1685
    %v1867 = vpack.c.bf16 %v1688, %v1687
    %v1868 = vpack.c.bf16 %v1690, %v1689
    %v1869 = vpack.c.bf16 %v1692, %v1691
    %v1870 = vpack.c.bf16 %v1694, %v1693
    %v1871 = vpack.c.bf16 %v1696, %v1695
    %v1872 = vpack.c.bf16 %v1698, %v1697
    %v1873 = vpack.c.bf16 %v1700, %v1699
    %v1874 = vpack.c.bf16 %v1702, %v1701
    %1875 = vxpose.xlu0.c.b16.start [1/8] %v1062, 128
    %1876 = vxpose.xlu0.c.b16.cont [2/8] %v1063, 128
    %1877 = vxpose.xlu0.c.b16.cont [3/8] %v1064, 128
    %1878 = vxpose.xlu0.c.b16.cont [4/8] %v1065, 128
    %1879 = vxpose.xlu0.c.b16.cont [5/8] %v1066, 128
    %1880 = vxpose.xlu0.c.b16.cont [6/8] %v1067, 128
    %1881 = vxpose.xlu0.c.b16.cont [7/8] %v1068, 128
    %1882 = vxpose.xlu0.c.b16.end [8/8] %v1069, 128
    %v1883 = vpop.trf.xlu0
    %v1884 = vpop.trf.xlu0
    %v1885 = vpop.trf.xlu0
    %v1886 = vpop.trf.xlu0
    %v1887 = vpop.trf.xlu0
    %v1888 = vpop.trf.xlu0
    %v1889 = vpop.trf.xlu0
    %v1890 = vpop.trf.xlu0
    %1891 = vxpose.xlu0.c.b16.start [1/8] %v1070, 128
    %1892 = vxpose.xlu0.c.b16.cont [2/8] %v1071, 128
    %1893 = vxpose.xlu0.c.b16.cont [3/8] %v1072, 128
    %1894 = vxpose.xlu0.c.b16.cont [4/8] %v1073, 128
    %1895 = vxpose.xlu0.c.b16.cont [5/8] %v1074, 128
    %1896 = vxpose.xlu0.c.b16.cont [6/8] %v1075, 128
    %1897 = vxpose.xlu0.c.b16.cont [7/8] %v1076, 128
    %1898 = vxpose.xlu0.c.b16.end [8/8] %v1077, 128
    %v1899 = vpop.trf.xlu0
    %v1900 = vpop.trf.xlu0
    %v1901 = vpop.trf.xlu0
    %v1902 = vpop.trf.xlu0
    %v1903 = vpop.trf.xlu0
    %v1904 = vpop.trf.xlu0
    %v1905 = vpop.trf.xlu0
    %v1906 = vpop.trf.xlu0
    %1907 = vxpose.xlu0.c.b16.start [1/8] %v1078, 128
    %1908 = vxpose.xlu0.c.b16.cont [2/8] %v1079, 128
    %1909 = vxpose.xlu0.c.b16.cont [3/8] %v1080, 128
    %1910 = vxpose.xlu0.c.b16.cont [4/8] %v1081, 128
    %1911 = vxpose.xlu0.c.b16.cont [5/8] %v1082, 128
    %1912 = vxpose.xlu0.c.b16.cont [6/8] %v1083, 128
    %1913 = vxpose.xlu0.c.b16.cont [7/8] %v1084, 128
    %1914 = vxpose.xlu0.c.b16.end [8/8] %v1085, 128
    %v1915 = vpop.trf.xlu0
    %v1916 = vpop.trf.xlu0
    %v1917 = vpop.trf.xlu0
    %v1918 = vpop.trf.xlu0
    %v1919 = vpop.trf.xlu0
    %v1920 = vpop.trf.xlu0
    %v1921 = vpop.trf.xlu0
    %v1922 = vpop.trf.xlu0
    %1923 = vxpose.xlu0.c.b16.start [1/8] %v1086, 128
    %1924 = vxpose.xlu0.c.b16.cont [2/8] %v1087, 128
    %1925 = vxpose.xlu0.c.b16.cont [3/8] %v1088, 128
    %1926 = vxpose.xlu0.c.b16.cont [4/8] %v1089, 128
    %1927 = vxpose.xlu0.c.b16.cont [5/8] %v1090, 128
    %1928 = vxpose.xlu0.c.b16.cont [6/8] %v1091, 128
    %1929 = vxpose.xlu0.c.b16.cont [7/8] %v1092, 128
    %1930 = vxpose.xlu0.c.b16.end [8/8] %v1093, 128
    %v1931 = vpop.trf.xlu0
    %v1932 = vpop.trf.xlu0
    %v1933 = vpop.trf.xlu0
    %v1934 = vpop.trf.xlu0
    %v1935 = vpop.trf.xlu0
    %v1936 = vpop.trf.xlu0
    %v1937 = vpop.trf.xlu0
    %v1938 = vpop.trf.xlu0
    %1939 = vmatprep.subr.bf16.mxu0 0
    %1940 = vmatpush1.bf16.msra.mxu0 %v1843
    %1941 = vmatprep.subr.bf16.mxu0 0
    %1942 = vmatpush1.bf16.msra.mxu0 %v1844
    %1943 = vmatprep.subr.bf16.mxu0 0
    %1944 = vmatpush1.bf16.msra.mxu0 %v1845
    %1945 = vmatprep.subr.bf16.mxu0 0
    %1946 = vmatpush1.bf16.msra.mxu0 %v1846
    %1947 = vmatprep.subr.bf16.mxu0 0
    %1948 = vmatpush1.bf16.msra.mxu0 %v1847
    %1949 = vmatprep.subr.bf16.mxu0 0
    %1950 = vmatpush1.bf16.msra.mxu0 %v1848
    %1951 = vmatprep.subr.bf16.mxu0 0
    %1952 = vmatpush1.bf16.msra.mxu0 %v1849
    %1953 = vmatprep.subr.bf16.mxu0 0
    %1954 = vmatpush1.bf16.msra.mxu0 %v1850
    %1955 = vmatprep.subr.bf16.mxu0 0
    %1956 = vmatpush1.bf16.msra.mxu0 %v1851
    %1957 = vmatprep.subr.bf16.mxu0 0
    %1958 = vmatpush1.bf16.msra.mxu0 %v1852
    %1959 = vmatprep.subr.bf16.mxu0 0
    %1960 = vmatpush1.bf16.msra.mxu0 %v1853
    %1961 = vmatprep.subr.bf16.mxu0 0
    %1962 = vmatpush1.bf16.msra.mxu0 %v1854
    %1963 = vmatprep.subr.bf16.mxu0 0
    %1964 = vmatpush1.bf16.msra.mxu0 %v1855
    %1965 = vmatprep.subr.bf16.mxu0 0
    %1966 = vmatpush1.bf16.msra.mxu0 %v1856
    %1967 = vmatprep.subr.bf16.mxu0 0
    %1968 = vmatpush1.bf16.msra.mxu0 %v1857
    %1969 = vmatprep.subr.bf16.mxu0 0
    %1970 = vmatpush1.bf16.msra.mxu0 %v1858
    %1971 = vmatprep.mubr.bf16.mxu0 %v1899
    %1972 = vmatmul.mubr.bf16.gmra.mrb[0].mxu0 %v1883
    %v1973 = vpop.f32.mrb[0].mxu0
    %v1974 = vadd.f32 0.0, %v1973
    %v1975 = vpop.f32.mrb[0].mxu0
    %v1976 = vpop.f32.mrb[0].mxu0
    %v1977 = vadd.f32 0.0, %v1976
    %v1978 = vpop.f32.mrb[0].mxu0
    %1979 = vmatprep.mubr.bf16.mxu0 %v1900
    %1980 = vmatmul.mubr.bf16.gmra.mrb[0].mxu0 %v1884
    %v1981 = vpop.f32.mrb[0].mxu0
    %v1982 = vadd.f32 0.0, %v1981
    %v1983 = vpop.f32.mrb[0].mxu0
    %v1984 = vpop.f32.mrb[0].mxu0
    %v1985 = vadd.f32 0.0, %v1984
    %v1986 = vpop.f32.mrb[0].mxu0
    %1987 = vmatprep.mubr.bf16.mxu0 %v1901
    %1988 = vmatmul.mubr.bf16.gmra.mrb[0].mxu0 %v1885
    %v1989 = vpop.f32.mrb[0].mxu0
    %v1990 = vadd.f32 0.0, %v1989
    %v1991 = vpop.f32.mrb[0].mxu0
    %v1992 = vpop.f32.mrb[0].mxu0
    %v1993 = vadd.f32 0.0, %v1992
    %v1994 = vpop.f32.mrb[0].mxu0
    %1995 = vmatprep.mubr.bf16.mxu0 %v1902
    %1996 = vmatmul.mubr.bf16.gmra.mrb[0].mxu0 %v1886
    %v1997 = vpop.f32.mrb[0].mxu0
    %v1998 = vadd.f32 0.0, %v1997
    %v1999 = vpop.f32.mrb[0].mxu0
    %v2000 = vpop.f32.mrb[0].mxu0
    %v2001 = vadd.f32 0.0, %v2000
    %v2002 = vpop.f32.mrb[0].mxu0
    %2003 = vmatprep.mubr.bf16.mxu0 %v1903
    %2004 = vmatmul.mubr.bf16.gmra.mrb[0].mxu0 %v1887
    %v2005 = vpop.f32.mrb[0].mxu0
    %v2006 = vadd.f32 0.0, %v2005
    %v2007 = vpop.f32.mrb[0].mxu0
    %v2008 = vpop.f32.mrb[0].mxu0
    %v2009 = vadd.f32 0.0, %v2008
    %v2010 = vpop.f32.mrb[0].mxu0
    %2011 = vmatprep.mubr.bf16.mxu0 %v1904
    %2012 = vmatmul.mubr.bf16.gmra.mrb[0].mxu0 %v1888
    %v2013 = vpop.f32.mrb[0].mxu0
    %v2014 = vadd.f32 0.0, %v2013
    %v2015 = vpop.f32.mrb[0].mxu0
    %v2016 = vpop.f32.mrb[0].mxu0
    %v2017 = vadd.f32 0.0, %v2016
    %v2018 = vpop.f32.mrb[0].mxu0
    %2019 = vmatprep.mubr.bf16.mxu0 %v1905
    %2020 = vmatmul.mubr.bf16.gmra.mrb[0].mxu0 %v1889
    %v2021 = vpop.f32.mrb[0].mxu0
    %v2022 = vadd.f32 0.0, %v2021
    %v2023 = vpop.f32.mrb[0].mxu0
    %v2024 = vpop.f32.mrb[0].mxu0
    %v2025 = vadd.f32 0.0, %v2024
    %v2026 = vpop.f32.mrb[0].mxu0
    %2027 = vmatprep.mubr.bf16.mxu0 %v1906
    %2028 = vmatmul.mubr.bf16.gmra.mrb[0].mxu0 %v1890
    %v2029 = vpop.f32.mrb[0].mxu0
    %v2030 = vadd.f32 0.0, %v2029
    %v2031 = vpop.f32.mrb[0].mxu0
    %v2032 = vpop.f32.mrb[0].mxu0
    %v2033 = vadd.f32 0.0, %v2032
    %v2034 = vpop.f32.mrb[0].mxu0
    %2035 = vdwg.mxu0
    %2036 = vmatprep.subr.bf16.mxu0 0
    %2037 = vmatpush1.bf16.msra.mxu0 %v1859
    %2038 = vmatprep.subr.bf16.mxu0 0
    %2039 = vmatpush1.bf16.msra.mxu0 %v1860
    %2040 = vmatprep.subr.bf16.mxu0 0
    %2041 = vmatpush1.bf16.msra.mxu0 %v1861
    %2042 = vmatprep.subr.bf16.mxu0 0
    %2043 = vmatpush1.bf16.msra.mxu0 %v1862
    %2044 = vmatprep.subr.bf16.mxu0 0
    %2045 = vmatpush1.bf16.msra.mxu0 %v1863
    %2046 = vmatprep.subr.bf16.mxu0 0
    %2047 = vmatpush1.bf16.msra.mxu0 %v1864
    %2048 = vmatprep.subr.bf16.mxu0 0
    %2049 = vmatpush1.bf16.msra.mxu0 %v1865
    %2050 = vmatprep.subr.bf16.mxu0 0
    %2051 = vmatpush1.bf16.msra.mxu0 %v1866
    %2052 = vmatprep.subr.bf16.mxu0 0
    %2053 = vmatpush1.bf16.msra.mxu0 %v1867
    %2054 = vmatprep.subr.bf16.mxu0 0
    %2055 = vmatpush1.bf16.msra.mxu0 %v1868
    %2056 = vmatprep.subr.bf16.mxu0 0
    %2057 = vmatpush1.bf16.msra.mxu0 %v1869
    %2058 = vmatprep.subr.bf16.mxu0 0
    %2059 = vmatpush1.bf16.msra.mxu0 %v1870
    %2060 = vmatprep.subr.bf16.mxu0 0
    %2061 = vmatpush1.bf16.msra.mxu0 %v1871
    %2062 = vmatprep.subr.bf16.mxu0 0
    %2063 = vmatpush1.bf16.msra.mxu0 %v1872
    %2064 = vmatprep.subr.bf16.mxu0 0
    %2065 = vmatpush1.bf16.msra.mxu0 %v1873
    %2066 = vmatprep.subr.bf16.mxu0 0
    %2067 = vmatpush1.bf16.msra.mxu0 %v1874
    %2068 = vmatprep.mubr.bf16.mxu0 %v1931
    %2069 = vmatmul.mubr.bf16.gmra.mrb[0].mxu0 %v1915
    %v2070 = vpop.f32.mrb[0].mxu0
    %v2071 = vadd.f32 %v1974, %v2070
    %v2072 = vpop.f32.mrb[0].mxu0
    %v2073 = vpop.f32.mrb[0].mxu0
    %v2074 = vadd.f32 %v1977, %v2073
    %v2075 = vpop.f32.mrb[0].mxu0
    %2076 = vmatprep.mubr.bf16.mxu0 %v1932
    %2077 = vmatmul.mubr.bf16.gmra.mrb[0].mxu0 %v1916
    %v2078 = vpop.f32.mrb[0].mxu0
    %v2079 = vadd.f32 %v1982, %v2078
    %v2080 = vpop.f32.mrb[0].mxu0
    %v2081 = vpop.f32.mrb[0].mxu0
    %v2082 = vadd.f32 %v1985, %v2081
    %v2083 = vpop.f32.mrb[0].mxu0
    %2084 = vmatprep.mubr.bf16.mxu0 %v1933
    %2085 = vmatmul.mubr.bf16.gmra.mrb[0].mxu0 %v1917
    %v2086 = vpop.f32.mrb[0].mxu0
    %v2087 = vadd.f32 %v1990, %v2086
    %v2088 = vpop.f32.mrb[0].mxu0
    %v2089 = vpop.f32.mrb[0].mxu0
    %v2090 = vadd.f32 %v1993, %v2089
    %v2091 = vpop.f32.mrb[0].mxu0
    %2092 = vmatprep.mubr.bf16.mxu0 %v1934
    %2093 = vmatmul.mubr.bf16.gmra.mrb[0].mxu0 %v1918
    %v2094 = vpop.f32.mrb[0].mxu0
    %v2095 = vadd.f32 %v1998, %v2094
    %v2096 = vpop.f32.mrb[0].mxu0
    %v2097 = vpop.f32.mrb[0].mxu0
    %v2098 = vadd.f32 %v2001, %v2097
    %v2099 = vpop.f32.mrb[0].mxu0
    %2100 = vmatprep.mubr.bf16.mxu0 %v1935
    %2101 = vmatmul.mubr.bf16.gmra.mrb[0].mxu0 %v1919
    %v2102 = vpop.f32.mrb[0].mxu0
    %v2103 = vadd.f32 %v2006, %v2102
    %v2104 = vpop.f32.mrb[0].mxu0
    %v2105 = vpop.f32.mrb[0].mxu0
    %v2106 = vadd.f32 %v2009, %v2105
    %v2107 = vpop.f32.mrb[0].mxu0
    %2108 = vmatprep.mubr.bf16.mxu0 %v1936
    %2109 = vmatmul.mubr.bf16.gmra.mrb[0].mxu0 %v1920
    %v2110 = vpop.f32.mrb[0].mxu0
    %v2111 = vadd.f32 %v2014, %v2110
    %v2112 = vpop.f32.mrb[0].mxu0
    %v2113 = vpop.f32.mrb[0].mxu0
    %v2114 = vadd.f32 %v2017, %v2113
    %v2115 = vpop.f32.mrb[0].mxu0
    %2116 = vmatprep.mubr.bf16.mxu0 %v1937
    %2117 = vmatmul.mubr.bf16.gmra.mrb[0].mxu0 %v1921
    %v2118 = vpop.f32.mrb[0].mxu0
    %v2119 = vadd.f32 %v2022, %v2118
    %v2120 = vpop.f32.mrb[0].mxu0
    %v2121 = vpop.f32.mrb[0].mxu0
    %v2122 = vadd.f32 %v2025, %v2121
    %v2123 = vpop.f32.mrb[0].mxu0
    %2124 = vmatprep.mubr.bf16.mxu0 %v1938
    %2125 = vmatmul.mubr.bf16.gmra.mrb[0].mxu0 %v1922
    %v2126 = vpop.f32.mrb[0].mxu0
    %v2127 = vadd.f32 %v2030, %v2126
    %v2128 = vpop.f32.mrb[0].mxu0
    %v2129 = vpop.f32.mrb[0].mxu0
    %v2130 = vadd.f32 %v2033, %v2129
    %v2131 = vpop.f32.mrb[0].mxu0
    %2132 = vdwg.mxu0
    %v2133 = vmul.f32 %v2071, 0.0009765625
    %v2134 = vmul.f32 %v2074, 0.0009765625
    %v2135 = vmul.f32 %v2079, 0.0009765625
    %v2136 = vmul.f32 %v2082, 0.0009765625
    %v2137 = vmul.f32 %v2087, 0.0009765625
    %v2138 = vmul.f32 %v2090, 0.0009765625
    %v2139 = vmul.f32 %v2095, 0.0009765625
    %v2140 = vmul.f32 %v2098, 0.0009765625
    %v2141 = vmul.f32 %v2103, 0.0009765625
    %v2142 = vmul.f32 %v2106, 0.0009765625
    %v2143 = vmul.f32 %v2111, 0.0009765625
    %v2144 = vmul.f32 %v2114, 0.0009765625
    %v2145 = vmul.f32 %v2119, 0.0009765625
    %v2146 = vmul.f32 %v2122, 0.0009765625
    %v2147 = vmul.f32 %v2127, 0.0009765625
    %v2148 = vmul.f32 %v2130, 0.0009765625
    %2149 = vmatprep.subr.bf16.mxu0 0
    %2150 = vmatpush1.bf16.xpose.msra.mxu0 %v701
    %2151 = vmatprep.subr.bf16.mxu0 0
    %2152 = vmatpush1.bf16.xpose.msra.mxu0 %v702
    %2153 = vmatprep.subr.bf16.mxu0 0
    %2154 = vmatpush1.bf16.xpose.msra.mxu0 %v703
    %2155 = vmatprep.subr.bf16.mxu0 0
    %2156 = vmatpush1.bf16.xpose.msra.mxu0 %v704
    %2157 = vmatprep.subr.bf16.mxu0 0
    %2158 = vmatpush1.bf16.xpose.msra.mxu0 %v705
    %2159 = vmatprep.subr.bf16.mxu0 0
    %2160 = vmatpush1.bf16.xpose.msra.mxu0 %v706
    %2161 = vmatprep.subr.bf16.mxu0 0
    %2162 = vmatpush1.bf16.xpose.msra.mxu0 %v707
    %2163 = vmatprep.subr.bf16.mxu0 0
    %2164 = vmatpush1.bf16.xpose.msra.mxu0 %v708
    %2165 = vmatprep.subr.bf16.mxu0 0
    %2166 = vmatpush1.bf16.xpose.msra.mxu0 0
    %2167 = vmatprep.subr.bf16.mxu0 0
    %2168 = vmatpush1.bf16.xpose.msra.mxu0 0
    %2169 = vmatprep.subr.bf16.mxu0 0
    %2170 = vmatpush1.bf16.xpose.msra.mxu0 0
    %2171 = vmatprep.subr.bf16.mxu0 0
    %2172 = vmatpush1.bf16.xpose.msra.mxu0 0
    %2173 = vmatprep.subr.bf16.mxu0 0
    %2174 = vmatpush1.bf16.xpose.msra.mxu0 0
    %2175 = vmatprep.subr.bf16.mxu0 0
    %2176 = vmatpush1.bf16.xpose.msra.mxu0 0
    %2177 = vmatprep.subr.bf16.mxu0 0
    %2178 = vmatpush1.bf16.xpose.msra.mxu0 0
    %2179 = vmatprep.subr.bf16.mxu0 0
    %2180 = vmatpush1.bf16.xpose.msra.mxu0 0
    %2181 = vmatprep.mubr.bf16.mxu0 0
    %2182 = vmatmul.mubr.bf16.gmra.mrb[0].mxu0 %v1843
    %v2183 = vpop.f32.mrb[0].mxu0
    %v2184 = vadd.f32 0.0, %v2183
    %v2185 = vpop.f32.mrb[0].mxu0
    %v2186 = vpop.f32.mrb[0].mxu0
    %v2187 = vadd.f32 0.0, %v2186
    %v2188 = vpop.f32.mrb[0].mxu0
    %2189 = vmatprep.mubr.bf16.mxu0 0
    %2190 = vmatmul.mubr.bf16.gmra.mrb[0].mxu0 %v1844
    %v2191 = vpop.f32.mrb[0].mxu0
    %v2192 = vadd.f32 0.0, %v2191
    %v2193 = vpop.f32.mrb[0].mxu0
    %v2194 = vpop.f32.mrb[0].mxu0
    %v2195 = vadd.f32 0.0, %v2194
    %v2196 = vpop.f32.mrb[0].mxu0
    %2197 = vmatprep.mubr.bf16.mxu0 0
    %2198 = vmatmul.mubr.bf16.gmra.mrb[0].mxu0 %v1845
    %v2199 = vpop.f32.mrb[0].mxu0
    %v2200 = vadd.f32 0.0, %v2199
    %v2201 = vpop.f32.mrb[0].mxu0
    %v2202 = vpop.f32.mrb[0].mxu0
    %v2203 = vadd.f32 0.0, %v2202
    %v2204 = vpop.f32.mrb[0].mxu0
    %2205 = vmatprep.mubr.bf16.mxu0 0
    %2206 = vmatmul.mubr.bf16.gmra.mrb[0].mxu0 %v1846
    %v2207 = vpop.f32.mrb[0].mxu0
    %v2208 = vadd.f32 0.0, %v2207
    %v2209 = vpop.f32.mrb[0].mxu0
    %v2210 = vpop.f32.mrb[0].mxu0
    %v2211 = vadd.f32 0.0, %v2210
    %v2212 = vpop.f32.mrb[0].mxu0
    %2213 = vmatprep.mubr.bf16.mxu0 0
    %2214 = vmatmul.mubr.bf16.gmra.mrb[0].mxu0 %v1847
    %v2215 = vpop.f32.mrb[0].mxu0
    %v2216 = vadd.f32 0.0, %v2215
    %v2217 = vpop.f32.mrb[0].mxu0
    %v2218 = vpop.f32.mrb[0].mxu0
    %v2219 = vadd.f32 0.0, %v2218
    %v2220 = vpop.f32.mrb[0].mxu0
    %2221 = vmatprep.mubr.bf16.mxu0 0
    %2222 = vmatmul.mubr.bf16.gmra.mrb[0].mxu0 %v1848
    %v2223 = vpop.f32.mrb[0].mxu0
    %v2224 = vadd.f32 0.0, %v2223
    %v2225 = vpop.f32.mrb[0].mxu0
    %v2226 = vpop.f32.mrb[0].mxu0
    %v2227 = vadd.f32 0.0, %v2226
    %v2228 = vpop.f32.mrb[0].mxu0
    %2229 = vmatprep.mubr.bf16.mxu0 0
    %2230 = vmatmul.mubr.bf16.gmra.mrb[0].mxu0 %v1849
    %v2231 = vpop.f32.mrb[0].mxu0
    %v2232 = vadd.f32 0.0, %v2231
    %v2233 = vpop.f32.mrb[0].mxu0
    %v2234 = vpop.f32.mrb[0].mxu0
    %v2235 = vadd.f32 0.0, %v2234
    %v2236 = vpop.f32.mrb[0].mxu0
    %2237 = vmatprep.mubr.bf16.mxu0 0
    %2238 = vmatmul.mubr.bf16.gmra.mrb[0].mxu0 %v1850
    %v2239 = vpop.f32.mrb[0].mxu0
    %v2240 = vadd.f32 0.0, %v2239
    %v2241 = vpop.f32.mrb[0].mxu0
    %v2242 = vpop.f32.mrb[0].mxu0
    %v2243 = vadd.f32 0.0, %v2242
    %v2244 = vpop.f32.mrb[0].mxu0
    %2245 = vmatprep.mubr.bf16.mxu0 0
    %2246 = vmatmul.mubr.bf16.gmra.mrb[0].mxu0 %v1851
    %v2247 = vpop.f32.mrb[0].mxu0
    %v2248 = vadd.f32 0.0, %v2247
    %v2249 = vpop.f32.mrb[0].mxu0
    %v2250 = vpop.f32.mrb[0].mxu0
    %v2251 = vadd.f32 0.0, %v2250
    %v2252 = vpop.f32.mrb[0].mxu0
    %2253 = vmatprep.mubr.bf16.mxu0 0
    %2254 = vmatmul.mubr.bf16.gmra.mrb[0].mxu0 %v1852
    %v2255 = vpop.f32.mrb[0].mxu0
    %v2256 = vadd.f32 0.0, %v2255
    %v2257 = vpop.f32.mrb[0].mxu0
    %v2258 = vpop.f32.mrb[0].mxu0
    %v2259 = vadd.f32 0.0, %v2258
    %v2260 = vpop.f32.mrb[0].mxu0
    %2261 = vmatprep.mubr.bf16.mxu0 0
    %2262 = vmatmul.mubr.bf16.gmra.mrb[0].mxu0 %v1853
    %v2263 = vpop.f32.mrb[0].mxu0
    %v2264 = vadd.f32 0.0, %v2263
    %v2265 = vpop.f32.mrb[0].mxu0
    %v2266 = vpop.f32.mrb[0].mxu0
    %v2267 = vadd.f32 0.0, %v2266
    %v2268 = vpop.f32.mrb[0].mxu0
    %2269 = vmatprep.mubr.bf16.mxu0 0
    %2270 = vmatmul.mubr.bf16.gmra.mrb[0].mxu0 %v1854
    %v2271 = vpop.f32.mrb[0].mxu0
    %v2272 = vadd.f32 0.0, %v2271
    %v2273 = vpop.f32.mrb[0].mxu0
    %v2274 = vpop.f32.mrb[0].mxu0
    %v2275 = vadd.f32 0.0, %v2274
    %v2276 = vpop.f32.mrb[0].mxu0
    %2277 = vmatprep.mubr.bf16.mxu0 0
    %2278 = vmatmul.mubr.bf16.gmra.mrb[0].mxu0 %v1855
    %v2279 = vpop.f32.mrb[0].mxu0
    %v2280 = vadd.f32 0.0, %v2279
    %v2281 = vpop.f32.mrb[0].mxu0
    %v2282 = vpop.f32.mrb[0].mxu0
    %v2283 = vadd.f32 0.0, %v2282
    %v2284 = vpop.f32.mrb[0].mxu0
    %2285 = vmatprep.mubr.bf16.mxu0 0
    %2286 = vmatmul.mubr.bf16.gmra.mrb[0].mxu0 %v1856
    %v2287 = vpop.f32.mrb[0].mxu0
    %v2288 = vadd.f32 0.0, %v2287
    %v2289 = vpop.f32.mrb[0].mxu0
    %v2290 = vpop.f32.mrb[0].mxu0
    %v2291 = vadd.f32 0.0, %v2290
    %v2292 = vpop.f32.mrb[0].mxu0
    %2293 = vmatprep.mubr.bf16.mxu0 0
    %2294 = vmatmul.mubr.bf16.gmra.mrb[0].mxu0 %v1857
    %v2295 = vpop.f32.mrb[0].mxu0
    %v2296 = vadd.f32 0.0, %v2295
    %v2297 = vpop.f32.mrb[0].mxu0
    %v2298 = vpop.f32.mrb[0].mxu0
    %v2299 = vadd.f32 0.0, %v2298
    %v2300 = vpop.f32.mrb[0].mxu0
    %2301 = vmatprep.mubr.bf16.mxu0 0
    %2302 = vmatmul.mubr.bf16.gmra.mrb[0].mxu0 %v1858
    %v2303 = vpop.f32.mrb[0].mxu0
    %v2304 = vadd.f32 0.0, %v2303
    %v2305 = vpop.f32.mrb[0].mxu0
    %v2306 = vpop.f32.mrb[0].mxu0
    %v2307 = vadd.f32 0.0, %v2306
    %v2308 = vpop.f32.mrb[0].mxu0
    %2309 = vmatprep.mubr.bf16.mxu0 0
    %2310 = vmatmul.mubr.bf16.gmra.mrb[0].mxu0 %v1859
    %v2311 = vpop.f32.mrb[0].mxu0
    %v2312 = vadd.f32 0.0, %v2311
    %v2313 = vpop.f32.mrb[0].mxu0
    %v2314 = vpop.f32.mrb[0].mxu0
    %v2315 = vadd.f32 0.0, %v2314
    %v2316 = vpop.f32.mrb[0].mxu0
    %2317 = vmatprep.mubr.bf16.mxu0 0
    %2318 = vmatmul.mubr.bf16.gmra.mrb[0].mxu0 %v1860
    %v2319 = vpop.f32.mrb[0].mxu0
    %v2320 = vadd.f32 0.0, %v2319
    %v2321 = vpop.f32.mrb[0].mxu0
    %v2322 = vpop.f32.mrb[0].mxu0
    %v2323 = vadd.f32 0.0, %v2322
    %v2324 = vpop.f32.mrb[0].mxu0
    %2325 = vmatprep.mubr.bf16.mxu0 0
    %2326 = vmatmul.mubr.bf16.gmra.mrb[0].mxu0 %v1861
    %v2327 = vpop.f32.mrb[0].mxu0
    %v2328 = vadd.f32 0.0, %v2327
    %v2329 = vpop.f32.mrb[0].mxu0
    %v2330 = vpop.f32.mrb[0].mxu0
    %v2331 = vadd.f32 0.0, %v2330
    %v2332 = vpop.f32.mrb[0].mxu0
    %2333 = vmatprep.mubr.bf16.mxu0 0
    %2334 = vmatmul.mubr.bf16.gmra.mrb[0].mxu0 %v1862
    %v2335 = vpop.f32.mrb[0].mxu0
    %v2336 = vadd.f32 0.0, %v2335
    %v2337 = vpop.f32.mrb[0].mxu0
    %v2338 = vpop.f32.mrb[0].mxu0
    %v2339 = vadd.f32 0.0, %v2338
    %v2340 = vpop.f32.mrb[0].mxu0
    %2341 = vmatprep.mubr.bf16.mxu0 0
    %2342 = vmatmul.mubr.bf16.gmra.mrb[0].mxu0 %v1863
    %v2343 = vpop.f32.mrb[0].mxu0
    %v2344 = vadd.f32 0.0, %v2343
    %v2345 = vpop.f32.mrb[0].mxu0
    %v2346 = vpop.f32.mrb[0].mxu0
    %v2347 = vadd.f32 0.0, %v2346
    %v2348 = vpop.f32.mrb[0].mxu0
    %2349 = vmatprep.mubr.bf16.mxu0 0
    %2350 = vmatmul.mubr.bf16.gmra.mrb[0].mxu0 %v1864
    %v2351 = vpop.f32.mrb[0].mxu0
    %v2352 = vadd.f32 0.0, %v2351
    %v2353 = vpop.f32.mrb[0].mxu0
    %v2354 = vpop.f32.mrb[0].mxu0
    %v2355 = vadd.f32 0.0, %v2354
    %v2356 = vpop.f32.mrb[0].mxu0
    %2357 = vmatprep.mubr.bf16.mxu0 0
    %2358 = vmatmul.mubr.bf16.gmra.mrb[0].mxu0 %v1865
    %v2359 = vpop.f32.mrb[0].mxu0
    %v2360 = vadd.f32 0.0, %v2359
    %v2361 = vpop.f32.mrb[0].mxu0
    %v2362 = vpop.f32.mrb[0].mxu0
    %v2363 = vadd.f32 0.0, %v2362
    %v2364 = vpop.f32.mrb[0].mxu0
    %2365 = vmatprep.mubr.bf16.mxu0 0
    %2366 = vmatmul.mubr.bf16.gmra.mrb[0].mxu0 %v1866
    %v2367 = vpop.f32.mrb[0].mxu0
    %v2368 = vadd.f32 0.0, %v2367
    %v2369 = vpop.f32.mrb[0].mxu0
    %v2370 = vpop.f32.mrb[0].mxu0
    %v2371 = vadd.f32 0.0, %v2370
    %v2372 = vpop.f32.mrb[0].mxu0
    %2373 = vmatprep.mubr.bf16.mxu0 0
    %2374 = vmatmul.mubr.bf16.gmra.mrb[0].mxu0 %v1867
    %v2375 = vpop.f32.mrb[0].mxu0
    %v2376 = vadd.f32 0.0, %v2375
    %v2377 = vpop.f32.mrb[0].mxu0
    %v2378 = vpop.f32.mrb[0].mxu0
    %v2379 = vadd.f32 0.0, %v2378
    %v2380 = vpop.f32.mrb[0].mxu0
    %2381 = vmatprep.mubr.bf16.mxu0 0
    %2382 = vmatmul.mubr.bf16.gmra.mrb[0].mxu0 %v1868
    %v2383 = vpop.f32.mrb[0].mxu0
    %v2384 = vadd.f32 0.0, %v2383
    %v2385 = vpop.f32.mrb[0].mxu0
    %v2386 = vpop.f32.mrb[0].mxu0
    %v2387 = vadd.f32 0.0, %v2386
    %v2388 = vpop.f32.mrb[0].mxu0
    %2389 = vmatprep.mubr.bf16.mxu0 0
    %2390 = vmatmul.mubr.bf16.gmra.mrb[0].mxu0 %v1869
    %v2391 = vpop.f32.mrb[0].mxu0
    %v2392 = vadd.f32 0.0, %v2391
    %v2393 = vpop.f32.mrb[0].mxu0
    %v2394 = vpop.f32.mrb[0].mxu0
    %v2395 = vadd.f32 0.0, %v2394
    %v2396 = vpop.f32.mrb[0].mxu0
    %2397 = vmatprep.mubr.bf16.mxu0 0
    %2398 = vmatmul.mubr.bf16.gmra.mrb[0].mxu0 %v1870
    %v2399 = vpop.f32.mrb[0].mxu0
    %v2400 = vadd.f32 0.0, %v2399
    %v2401 = vpop.f32.mrb[0].mxu0
    %v2402 = vpop.f32.mrb[0].mxu0
    %v2403 = vadd.f32 0.0, %v2402
    %v2404 = vpop.f32.mrb[0].mxu0
    %2405 = vmatprep.mubr.bf16.mxu0 0
    %2406 = vmatmul.mubr.bf16.gmra.mrb[0].mxu0 %v1871
    %v2407 = vpop.f32.mrb[0].mxu0
    %v2408 = vadd.f32 0.0, %v2407
    %v2409 = vpop.f32.mrb[0].mxu0
    %v2410 = vpop.f32.mrb[0].mxu0
    %v2411 = vadd.f32 0.0, %v2410
    %v2412 = vpop.f32.mrb[0].mxu0
    %2413 = vmatprep.mubr.bf16.mxu0 0
    %2414 = vmatmul.mubr.bf16.gmra.mrb[0].mxu0 %v1872
    %v2415 = vpop.f32.mrb[0].mxu0
    %v2416 = vadd.f32 0.0, %v2415
    %v2417 = vpop.f32.mrb[0].mxu0
    %v2418 = vpop.f32.mrb[0].mxu0
    %v2419 = vadd.f32 0.0, %v2418
    %v2420 = vpop.f32.mrb[0].mxu0
    %2421 = vmatprep.mubr.bf16.mxu0 0
    %2422 = vmatmul.mubr.bf16.gmra.mrb[0].mxu0 %v1873
    %v2423 = vpop.f32.mrb[0].mxu0
    %v2424 = vadd.f32 0.0, %v2423
    %v2425 = vpop.f32.mrb[0].mxu0
    %v2426 = vpop.f32.mrb[0].mxu0
    %v2427 = vadd.f32 0.0, %v2426
    %v2428 = vpop.f32.mrb[0].mxu0
    %2429 = vmatprep.mubr.bf16.mxu0 0
    %2430 = vmatmul.mubr.bf16.gmra.mrb[0].mxu0 %v1874
    %v2431 = vpop.f32.mrb[0].mxu0
    %v2432 = vadd.f32 0.0, %v2431
    %v2433 = vpop.f32.mrb[0].mxu0
    %v2434 = vpop.f32.mrb[0].mxu0
    %v2435 = vadd.f32 0.0, %v2434
    %v2436 = vpop.f32.mrb[0].mxu0
    %2437 = vdwg.mxu0
    %vm2438 = vcmp.gt.bf16.partialorder %v1062, 0
    %vm2439 = vcmp.gt.bf16.partialorder %v1063, 0
    %vm2440 = vcmp.gt.bf16.partialorder %v1064, 0
    %vm2441 = vcmp.gt.bf16.partialorder %v1065, 0
    %vm2442 = vcmp.gt.bf16.partialorder %v1066, 0
    %vm2443 = vcmp.gt.bf16.partialorder %v1067, 0
    %vm2444 = vcmp.gt.bf16.partialorder %v1068, 0
    %vm2445 = vcmp.gt.bf16.partialorder %v1069, 0
    %vm2446 = vcmp.gt.bf16.partialorder %v1070, 0
    %vm2447 = vcmp.gt.bf16.partialorder %v1071, 0
    %vm2448 = vcmp.gt.bf16.partialorder %v1072, 0
    %vm2449 = vcmp.gt.bf16.partialorder %v1073, 0
    %vm2450 = vcmp.gt.bf16.partialorder %v1074, 0
    %vm2451 = vcmp.gt.bf16.partialorder %v1075, 0
    %vm2452 = vcmp.gt.bf16.partialorder %v1076, 0
    %vm2453 = vcmp.gt.bf16.partialorder %v1077, 0
    %vm2454 = vcmp.gt.bf16.partialorder %v1078, 0
    %vm2455 = vcmp.gt.bf16.partialorder %v1079, 0
    %vm2456 = vcmp.gt.bf16.partialorder %v1080, 0
    %vm2457 = vcmp.gt.bf16.partialorder %v1081, 0
    %vm2458 = vcmp.gt.bf16.partialorder %v1082, 0
    %vm2459 = vcmp.gt.bf16.partialorder %v1083, 0
    %vm2460 = vcmp.gt.bf16.partialorder %v1084, 0
    %vm2461 = vcmp.gt.bf16.partialorder %v1085, 0
    %vm2462 = vcmp.gt.bf16.partialorder %v1086, 0
    %vm2463 = vcmp.gt.bf16.partialorder %v1087, 0
    %vm2464 = vcmp.gt.bf16.partialorder %v1088, 0
    %vm2465 = vcmp.gt.bf16.partialorder %v1089, 0
    %vm2466 = vcmp.gt.bf16.partialorder %v1090, 0
    %vm2467 = vcmp.gt.bf16.partialorder %v1091, 0
    %vm2468 = vcmp.gt.bf16.partialorder %v1092, 0
    %vm2469 = vcmp.gt.bf16.partialorder %v1093, 0
    %v2470 = vsel %vm2438, 65537, 0
    %v2471 = vsel %vm2439, 65537, 0
    %v2472 = vsel %vm2440, 65537, 0
    %v2473 = vsel %vm2441, 65537, 0
    %v2474 = vsel %vm2442, 65537, 0
    %v2475 = vsel %vm2443, 65537, 0
    %v2476 = vsel %vm2444, 65537, 0
    %v2477 = vsel %vm2445, 65537, 0
    %v2478 = vsel %vm2446, 65537, 0
    %v2479 = vsel %vm2447, 65537, 0
    %v2480 = vsel %vm2448, 65537, 0
    %v2481 = vsel %vm2449, 65537, 0
    %v2482 = vsel %vm2450, 65537, 0
    %v2483 = vsel %vm2451, 65537, 0
    %v2484 = vsel %vm2452, 65537, 0
    %v2485 = vsel %vm2453, 65537, 0
    %v2486 = vsel %vm2454, 65537, 0
    %v2487 = vsel %vm2455, 65537, 0
    %v2488 = vsel %vm2456, 65537, 0
    %v2489 = vsel %vm2457, 65537, 0
    %v2490 = vsel %vm2458, 65537, 0
    %v2491 = vsel %vm2459, 65537, 0
    %v2492 = vsel %vm2460, 65537, 0
    %v2493 = vsel %vm2461, 65537, 0
    %v2494 = vsel %vm2462, 65537, 0
    %v2495 = vsel %vm2463, 65537, 0
    %v2496 = vsel %vm2464, 65537, 0
    %v2497 = vsel %vm2465, 65537, 0
    %v2498 = vsel %vm2466, 65537, 0
    %v2499 = vsel %vm2467, 65537, 0
    %v2500 = vsel %vm2468, 65537, 0
    %v2501 = vsel %vm2469, 65537, 0
    %v2502 = vunpack.c.l.b16 %v2470
    %v2503 = vunpack.c.h.b16 %v2470
    %v2504 = vunpack.c.l.b16 %v2471
    %v2505 = vunpack.c.h.b16 %v2471
    %v2506 = vunpack.c.l.b16 %v2472
    %v2507 = vunpack.c.h.b16 %v2472
    %v2508 = vunpack.c.l.b16 %v2473
    %v2509 = vunpack.c.h.b16 %v2473
    %v2510 = vunpack.c.l.b16 %v2474
    %v2511 = vunpack.c.h.b16 %v2474
    %v2512 = vunpack.c.l.b16 %v2475
    %v2513 = vunpack.c.h.b16 %v2475
    %v2514 = vunpack.c.l.b16 %v2476
    %v2515 = vunpack.c.h.b16 %v2476
    %v2516 = vunpack.c.l.b16 %v2477
    %v2517 = vunpack.c.h.b16 %v2477
    %v2518 = vunpack.c.l.b16 %v2478
    %v2519 = vunpack.c.h.b16 %v2478
    %v2520 = vunpack.c.l.b16 %v2479
    %v2521 = vunpack.c.h.b16 %v2479
    %v2522 = vunpack.c.l.b16 %v2480
    %v2523 = vunpack.c.h.b16 %v2480
    %v2524 = vunpack.c.l.b16 %v2481
    %v2525 = vunpack.c.h.b16 %v2481
    %v2526 = vunpack.c.l.b16 %v2482
    %v2527 = vunpack.c.h.b16 %v2482
    %v2528 = vunpack.c.l.b16 %v2483
    %v2529 = vunpack.c.h.b16 %v2483
    %v2530 = vunpack.c.l.b16 %v2484
    %v2531 = vunpack.c.h.b16 %v2484
    %v2532 = vunpack.c.l.b16 %v2485
    %v2533 = vunpack.c.h.b16 %v2485
    %v2534 = vunpack.c.l.b16 %v2486
    %v2535 = vunpack.c.h.b16 %v2486
    %v2536 = vunpack.c.l.b16 %v2487
    %v2537 = vunpack.c.h.b16 %v2487
    %v2538 = vunpack.c.l.b16 %v2488
    %v2539 = vunpack.c.h.b16 %v2488
    %v2540 = vunpack.c.l.b16 %v2489
    %v2541 = vunpack.c.h.b16 %v2489
    %v2542 = vunpack.c.l.b16 %v2490
    %v2543 = vunpack.c.h.b16 %v2490
    %v2544 = vunpack.c.l.b16 %v2491
    %v2545 = vunpack.c.h.b16 %v2491
    %v2546 = vunpack.c.l.b16 %v2492
    %v2547 = vunpack.c.h.b16 %v2492
    %v2548 = vunpack.c.l.b16 %v2493
    %v2549 = vunpack.c.h.b16 %v2493
    %v2550 = vunpack.c.l.b16 %v2494
    %v2551 = vunpack.c.h.b16 %v2494
    %v2552 = vunpack.c.l.b16 %v2495
    %v2553 = vunpack.c.h.b16 %v2495
    %v2554 = vunpack.c.l.b16 %v2496
    %v2555 = vunpack.c.h.b16 %v2496
    %v2556 = vunpack.c.l.b16 %v2497
    %v2557 = vunpack.c.h.b16 %v2497
    %v2558 = vunpack.c.l.b16 %v2498
    %v2559 = vunpack.c.h.b16 %v2498
    %v2560 = vunpack.c.l.b16 %v2499
    %v2561 = vunpack.c.h.b16 %v2499
    %v2562 = vunpack.c.l.b16 %v2500
    %v2563 = vunpack.c.h.b16 %v2500
    %v2564 = vunpack.c.l.b16 %v2501
    %v2565 = vunpack.c.h.b16 %v2501
    %v2566 = vpack.c.b16 %v2502, %v2502
    %v2567 = vpack.c.b16 %v2503, %v2503
    %v2568 = vpack.c.b16 %v2504, %v2504
    %v2569 = vpack.c.b16 %v2505, %v2505
    %v2570 = vpack.c.b16 %v2506, %v2506
    %v2571 = vpack.c.b16 %v2507, %v2507
    %v2572 = vpack.c.b16 %v2508, %v2508
    %v2573 = vpack.c.b16 %v2509, %v2509
    %v2574 = vpack.c.b16 %v2510, %v2510
    %v2575 = vpack.c.b16 %v2511, %v2511
    %v2576 = vpack.c.b16 %v2512, %v2512
    %v2577 = vpack.c.b16 %v2513, %v2513
    %v2578 = vpack.c.b16 %v2514, %v2514
    %v2579 = vpack.c.b16 %v2515, %v2515
    %v2580 = vpack.c.b16 %v2516, %v2516
    %v2581 = vpack.c.b16 %v2517, %v2517
    %v2582 = vpack.c.b16 %v2518, %v2518
    %v2583 = vpack.c.b16 %v2519, %v2519
    %v2584 = vpack.c.b16 %v2520, %v2520
    %v2585 = vpack.c.b16 %v2521, %v2521
    %v2586 = vpack.c.b16 %v2522, %v2522
    %v2587 = vpack.c.b16 %v2523, %v2523
    %v2588 = vpack.c.b16 %v2524, %v2524
    %v2589 = vpack.c.b16 %v2525, %v2525
    %v2590 = vpack.c.b16 %v2526, %v2526
    %v2591 = vpack.c.b16 %v2527, %v2527
    %v2592 = vpack.c.b16 %v2528, %v2528
    %v2593 = vpack.c.b16 %v2529, %v2529
    %v2594 = vpack.c.b16 %v2530, %v2530
    %v2595 = vpack.c.b16 %v2531, %v2531
    %v2596 = vpack.c.b16 %v2532, %v2532
    %v2597 = vpack.c.b16 %v2533, %v2533
    %v2598 = vpack.c.b16 %v2534, %v2534
    %v2599 = vpack.c.b16 %v2535, %v2535
    %v2600 = vpack.c.b16 %v2536, %v2536
    %v2601 = vpack.c.b16 %v2537, %v2537
    %v2602 = vpack.c.b16 %v2538, %v2538
    %v2603 = vpack.c.b16 %v2539, %v2539
    %v2604 = vpack.c.b16 %v2540, %v2540
    %v2605 = vpack.c.b16 %v2541, %v2541
    %v2606 = vpack.c.b16 %v2542, %v2542
    %v2607 = vpack.c.b16 %v2543, %v2543
    %v2608 = vpack.c.b16 %v2544, %v2544
    %v2609 = vpack.c.b16 %v2545, %v2545
    %v2610 = vpack.c.b16 %v2546, %v2546
    %v2611 = vpack.c.b16 %v2547, %v2547
    %v2612 = vpack.c.b16 %v2548, %v2548
    %v2613 = vpack.c.b16 %v2549, %v2549
    %v2614 = vpack.c.b16 %v2550, %v2550
    %v2615 = vpack.c.b16 %v2551, %v2551
    %v2616 = vpack.c.b16 %v2552, %v2552
    %v2617 = vpack.c.b16 %v2553, %v2553
    %v2618 = vpack.c.b16 %v2554, %v2554
    %v2619 = vpack.c.b16 %v2555, %v2555
    %v2620 = vpack.c.b16 %v2556, %v2556
    %v2621 = vpack.c.b16 %v2557, %v2557
    %v2622 = vpack.c.b16 %v2558, %v2558
    %v2623 = vpack.c.b16 %v2559, %v2559
    %v2624 = vpack.c.b16 %v2560, %v2560
    %v2625 = vpack.c.b16 %v2561, %v2561
    %v2626 = vpack.c.b16 %v2562, %v2562
    %v2627 = vpack.c.b16 %v2563, %v2563
    %v2628 = vpack.c.b16 %v2564, %v2564
    %v2629 = vpack.c.b16 %v2565, %v2565
    %vm2630 = vcmp.ne.s16.totalorder %v2566, 0
    %vm2631 = vcmp.ne.s16.totalorder %v2567, 0
    %vm2632 = vcmp.ne.s16.totalorder %v2568, 0
    %vm2633 = vcmp.ne.s16.totalorder %v2569, 0
    %vm2634 = vcmp.ne.s16.totalorder %v2570, 0
    %vm2635 = vcmp.ne.s16.totalorder %v2571, 0
    %vm2636 = vcmp.ne.s16.totalorder %v2572, 0
    %vm2637 = vcmp.ne.s16.totalorder %v2573, 0
    %vm2638 = vcmp.ne.s16.totalorder %v2574, 0
    %vm2639 = vcmp.ne.s16.totalorder %v2575, 0
    %vm2640 = vcmp.ne.s16.totalorder %v2576, 0
    %vm2641 = vcmp.ne.s16.totalorder %v2577, 0
    %vm2642 = vcmp.ne.s16.totalorder %v2578, 0
    %vm2643 = vcmp.ne.s16.totalorder %v2579, 0
    %vm2644 = vcmp.ne.s16.totalorder %v2580, 0
    %vm2645 = vcmp.ne.s16.totalorder %v2581, 0
    %vm2646 = vcmp.ne.s16.totalorder %v2582, 0
    %vm2647 = vcmp.ne.s16.totalorder %v2583, 0
    %vm2648 = vcmp.ne.s16.totalorder %v2584, 0
    %vm2649 = vcmp.ne.s16.totalorder %v2585, 0
    %vm2650 = vcmp.ne.s16.totalorder %v2586, 0
    %vm2651 = vcmp.ne.s16.totalorder %v2587, 0
    %vm2652 = vcmp.ne.s16.totalorder %v2588, 0
    %vm2653 = vcmp.ne.s16.totalorder %v2589, 0
    %vm2654 = vcmp.ne.s16.totalorder %v2590, 0
    %vm2655 = vcmp.ne.s16.totalorder %v2591, 0
    %vm2656 = vcmp.ne.s16.totalorder %v2592, 0
    %vm2657 = vcmp.ne.s16.totalorder %v2593, 0
    %vm2658 = vcmp.ne.s16.totalorder %v2594, 0
    %vm2659 = vcmp.ne.s16.totalorder %v2595, 0
    %vm2660 = vcmp.ne.s16.totalorder %v2596, 0
    %vm2661 = vcmp.ne.s16.totalorder %v2597, 0
    %vm2662 = vcmp.ne.s16.totalorder %v2598, 0
    %vm2663 = vcmp.ne.s16.totalorder %v2599, 0
    %vm2664 = vcmp.ne.s16.totalorder %v2600, 0
    %vm2665 = vcmp.ne.s16.totalorder %v2601, 0
    %vm2666 = vcmp.ne.s16.totalorder %v2602, 0
    %vm2667 = vcmp.ne.s16.totalorder %v2603, 0
    %vm2668 = vcmp.ne.s16.totalorder %v2604, 0
    %vm2669 = vcmp.ne.s16.totalorder %v2605, 0
    %vm2670 = vcmp.ne.s16.totalorder %v2606, 0
    %vm2671 = vcmp.ne.s16.totalorder %v2607, 0
    %vm2672 = vcmp.ne.s16.totalorder %v2608, 0
    %vm2673 = vcmp.ne.s16.totalorder %v2609, 0
    %vm2674 = vcmp.ne.s16.totalorder %v2610, 0
    %vm2675 = vcmp.ne.s16.totalorder %v2611, 0
    %vm2676 = vcmp.ne.s16.totalorder %v2612, 0
    %vm2677 = vcmp.ne.s16.totalorder %v2613, 0
    %vm2678 = vcmp.ne.s16.totalorder %v2614, 0
    %vm2679 = vcmp.ne.s16.totalorder %v2615, 0
    %vm2680 = vcmp.ne.s16.totalorder %v2616, 0
    %vm2681 = vcmp.ne.s16.totalorder %v2617, 0
    %vm2682 = vcmp.ne.s16.totalorder %v2618, 0
    %vm2683 = vcmp.ne.s16.totalorder %v2619, 0
    %vm2684 = vcmp.ne.s16.totalorder %v2620, 0
    %vm2685 = vcmp.ne.s16.totalorder %v2621, 0
    %vm2686 = vcmp.ne.s16.totalorder %v2622, 0
    %vm2687 = vcmp.ne.s16.totalorder %v2623, 0
    %vm2688 = vcmp.ne.s16.totalorder %v2624, 0
    %vm2689 = vcmp.ne.s16.totalorder %v2625, 0
    %vm2690 = vcmp.ne.s16.totalorder %v2626, 0
    %vm2691 = vcmp.ne.s16.totalorder %v2627, 0
    %vm2692 = vcmp.ne.s16.totalorder %v2628, 0
    %vm2693 = vcmp.ne.s16.totalorder %v2629, 0
    %v2694 = vsel %vm2630, 65537, 0
    %v2695 = vsel %vm2631, 65537, 0
    %v2696 = vsel %vm2632, 65537, 0
    %v2697 = vsel %vm2633, 65537, 0
    %v2698 = vsel %vm2634, 65537, 0
    %v2699 = vsel %vm2635, 65537, 0
    %v2700 = vsel %vm2636, 65537, 0
    %v2701 = vsel %vm2637, 65537, 0
    %v2702 = vsel %vm2638, 65537, 0
    %v2703 = vsel %vm2639, 65537, 0
    %v2704 = vsel %vm2640, 65537, 0
    %v2705 = vsel %vm2641, 65537, 0
    %v2706 = vsel %vm2642, 65537, 0
    %v2707 = vsel %vm2643, 65537, 0
    %v2708 = vsel %vm2644, 65537, 0
    %v2709 = vsel %vm2645, 65537, 0
    %v2710 = vsel %vm2646, 65537, 0
    %v2711 = vsel %vm2647, 65537, 0
    %v2712 = vsel %vm2648, 65537, 0
    %v2713 = vsel %vm2649, 65537, 0
    %v2714 = vsel %vm2650, 65537, 0
    %v2715 = vsel %vm2651, 65537, 0
    %v2716 = vsel %vm2652, 65537, 0
    %v2717 = vsel %vm2653, 65537, 0
    %v2718 = vsel %vm2654, 65537, 0
    %v2719 = vsel %vm2655, 65537, 0
    %v2720 = vsel %vm2656, 65537, 0
    %v2721 = vsel %vm2657, 65537, 0
    %v2722 = vsel %vm2658, 65537, 0
    %v2723 = vsel %vm2659, 65537, 0
    %v2724 = vsel %vm2660, 65537, 0
    %v2725 = vsel %vm2661, 65537, 0
    %v2726 = vsel %vm2662, 65537, 0
    %v2727 = vsel %vm2663, 65537, 0
    %v2728 = vsel %vm2664, 65537, 0
    %v2729 = vsel %vm2665, 65537, 0
    %v2730 = vsel %vm2666, 65537, 0
    %v2731 = vsel %vm2667, 65537, 0
    %v2732 = vsel %vm2668, 65537, 0
    %v2733 = vsel %vm2669, 65537, 0
    %v2734 = vsel %vm2670, 65537, 0
    %v2735 = vsel %vm2671, 65537, 0
    %v2736 = vsel %vm2672, 65537, 0
    %v2737 = vsel %vm2673, 65537, 0
    %v2738 = vsel %vm2674, 65537, 0
    %v2739 = vsel %vm2675, 65537, 0
    %v2740 = vsel %vm2676, 65537, 0
    %v2741 = vsel %vm2677, 65537, 0
    %v2742 = vsel %vm2678, 65537, 0
    %v2743 = vsel %vm2679, 65537, 0
    %v2744 = vsel %vm2680, 65537, 0
    %v2745 = vsel %vm2681, 65537, 0
    %v2746 = vsel %vm2682, 65537, 0
    %v2747 = vsel %vm2683, 65537, 0
    %v2748 = vsel %vm2684, 65537, 0
    %v2749 = vsel %vm2685, 65537, 0
    %v2750 = vsel %vm2686, 65537, 0
    %v2751 = vsel %vm2687, 65537, 0
    %v2752 = vsel %vm2688, 65537, 0
    %v2753 = vsel %vm2689, 65537, 0
    %v2754 = vsel %vm2690, 65537, 0
    %v2755 = vsel %vm2691, 65537, 0
    %v2756 = vsel %vm2692, 65537, 0
    %v2757 = vsel %vm2693, 65537, 0
    %v2758 = vunpack.c.l.b16 %v2694
    %v2759 = vunpack.c.l.b16 %v2695
    %v2760 = vunpack.c.l.b16 %v2696
    %v2761 = vunpack.c.l.b16 %v2697
    %v2762 = vunpack.c.l.b16 %v2698
    %v2763 = vunpack.c.l.b16 %v2699
    %v2764 = vunpack.c.l.b16 %v2700
    %v2765 = vunpack.c.l.b16 %v2701
    %v2766 = vunpack.c.l.b16 %v2702
    %v2767 = vunpack.c.l.b16 %v2703
    %v2768 = vunpack.c.l.b16 %v2704
    %v2769 = vunpack.c.l.b16 %v2705
    %v2770 = vunpack.c.l.b16 %v2706
    %v2771 = vunpack.c.l.b16 %v2707
    %v2772 = vunpack.c.l.b16 %v2708
    %v2773 = vunpack.c.l.b16 %v2709
    %v2774 = vunpack.c.l.b16 %v2710
    %v2775 = vunpack.c.l.b16 %v2711
    %v2776 = vunpack.c.l.b16 %v2712
    %v2777 = vunpack.c.l.b16 %v2713
    %v2778 = vunpack.c.l.b16 %v2714
    %v2779 = vunpack.c.l.b16 %v2715
    %v2780 = vunpack.c.l.b16 %v2716
    %v2781 = vunpack.c.l.b16 %v2717
    %v2782 = vunpack.c.l.b16 %v2718
    %v2783 = vunpack.c.l.b16 %v2719
    %v2784 = vunpack.c.l.b16 %v2720
    %v2785 = vunpack.c.l.b16 %v2721
    %v2786 = vunpack.c.l.b16 %v2722
    %v2787 = vunpack.c.l.b16 %v2723
    %v2788 = vunpack.c.l.b16 %v2724
    %v2789 = vunpack.c.l.b16 %v2725
    %v2790 = vunpack.c.l.b16 %v2726
    %v2791 = vunpack.c.l.b16 %v2727
    %v2792 = vunpack.c.l.b16 %v2728
    %v2793 = vunpack.c.l.b16 %v2729
    %v2794 = vunpack.c.l.b16 %v2730
    %v2795 = vunpack.c.l.b16 %v2731
    %v2796 = vunpack.c.l.b16 %v2732
    %v2797 = vunpack.c.l.b16 %v2733
    %v2798 = vunpack.c.l.b16 %v2734
    %v2799 = vunpack.c.l.b16 %v2735
    %v2800 = vunpack.c.l.b16 %v2736
    %v2801 = vunpack.c.l.b16 %v2737
    %v2802 = vunpack.c.l.b16 %v2738
    %v2803 = vunpack.c.l.b16 %v2739
    %v2804 = vunpack.c.l.b16 %v2740
    %v2805 = vunpack.c.l.b16 %v2741
    %v2806 = vunpack.c.l.b16 %v2742
    %v2807 = vunpack.c.l.b16 %v2743
    %v2808 = vunpack.c.l.b16 %v2744
    %v2809 = vunpack.c.l.b16 %v2745
    %v2810 = vunpack.c.l.b16 %v2746
    %v2811 = vunpack.c.l.b16 %v2747
    %v2812 = vunpack.c.l.b16 %v2748
    %v2813 = vunpack.c.l.b16 %v2749
    %v2814 = vunpack.c.l.b16 %v2750
    %v2815 = vunpack.c.l.b16 %v2751
    %v2816 = vunpack.c.l.b16 %v2752
    %v2817 = vunpack.c.l.b16 %v2753
    %v2818 = vunpack.c.l.b16 %v2754
    %v2819 = vunpack.c.l.b16 %v2755
    %v2820 = vunpack.c.l.b16 %v2756
    %v2821 = vunpack.c.l.b16 %v2757
    %vm2822 = vcmp.ne.s32.totalorder %v2758, 0
    %vm2823 = vcmp.ne.s32.totalorder %v2759, 0
    %vm2824 = vcmp.ne.s32.totalorder %v2760, 0
    %vm2825 = vcmp.ne.s32.totalorder %v2761, 0
    %vm2826 = vcmp.ne.s32.totalorder %v2762, 0
    %vm2827 = vcmp.ne.s32.totalorder %v2763, 0
    %vm2828 = vcmp.ne.s32.totalorder %v2764, 0
    %vm2829 = vcmp.ne.s32.totalorder %v2765, 0
    %vm2830 = vcmp.ne.s32.totalorder %v2766, 0
    %vm2831 = vcmp.ne.s32.totalorder %v2767, 0
    %vm2832 = vcmp.ne.s32.totalorder %v2768, 0
    %vm2833 = vcmp.ne.s32.totalorder %v2769, 0
    %vm2834 = vcmp.ne.s32.totalorder %v2770, 0
    %vm2835 = vcmp.ne.s32.totalorder %v2771, 0
    %vm2836 = vcmp.ne.s32.totalorder %v2772, 0
    %vm2837 = vcmp.ne.s32.totalorder %v2773, 0
    %vm2838 = vcmp.ne.s32.totalorder %v2774, 0
    %vm2839 = vcmp.ne.s32.totalorder %v2775, 0
    %vm2840 = vcmp.ne.s32.totalorder %v2776, 0
    %vm2841 = vcmp.ne.s32.totalorder %v2777, 0
    %vm2842 = vcmp.ne.s32.totalorder %v2778, 0
    %vm2843 = vcmp.ne.s32.totalorder %v2779, 0
    %vm2844 = vcmp.ne.s32.totalorder %v2780, 0
    %vm2845 = vcmp.ne.s32.totalorder %v2781, 0
    %vm2846 = vcmp.ne.s32.totalorder %v2782, 0
    %vm2847 = vcmp.ne.s32.totalorder %v2783, 0
    %vm2848 = vcmp.ne.s32.totalorder %v2784, 0
    %vm2849 = vcmp.ne.s32.totalorder %v2785, 0
    %vm2850 = vcmp.ne.s32.totalorder %v2786, 0
    %vm2851 = vcmp.ne.s32.totalorder %v2787, 0
    %vm2852 = vcmp.ne.s32.totalorder %v2788, 0
    %vm2853 = vcmp.ne.s32.totalorder %v2789, 0
    %vm2854 = vcmp.ne.s32.totalorder %v2790, 0
    %vm2855 = vcmp.ne.s32.totalorder %v2791, 0
    %vm2856 = vcmp.ne.s32.totalorder %v2792, 0
    %vm2857 = vcmp.ne.s32.totalorder %v2793, 0
    %vm2858 = vcmp.ne.s32.totalorder %v2794, 0
    %vm2859 = vcmp.ne.s32.totalorder %v2795, 0
    %vm2860 = vcmp.ne.s32.totalorder %v2796, 0
    %vm2861 = vcmp.ne.s32.totalorder %v2797, 0
    %vm2862 = vcmp.ne.s32.totalorder %v2798, 0
    %vm2863 = vcmp.ne.s32.totalorder %v2799, 0
    %vm2864 = vcmp.ne.s32.totalorder %v2800, 0
    %vm2865 = vcmp.ne.s32.totalorder %v2801, 0
    %vm2866 = vcmp.ne.s32.totalorder %v2802, 0
    %vm2867 = vcmp.ne.s32.totalorder %v2803, 0
    %vm2868 = vcmp.ne.s32.totalorder %v2804, 0
    %vm2869 = vcmp.ne.s32.totalorder %v2805, 0
    %vm2870 = vcmp.ne.s32.totalorder %v2806, 0
    %vm2871 = vcmp.ne.s32.totalorder %v2807, 0
    %vm2872 = vcmp.ne.s32.totalorder %v2808, 0
    %vm2873 = vcmp.ne.s32.totalorder %v2809, 0
    %vm2874 = vcmp.ne.s32.totalorder %v2810, 0
    %vm2875 = vcmp.ne.s32.totalorder %v2811, 0
    %vm2876 = vcmp.ne.s32.totalorder %v2812, 0
    %vm2877 = vcmp.ne.s32.totalorder %v2813, 0
    %vm2878 = vcmp.ne.s32.totalorder %v2814, 0
    %vm2879 = vcmp.ne.s32.totalorder %v2815, 0
    %vm2880 = vcmp.ne.s32.totalorder %v2816, 0
    %vm2881 = vcmp.ne.s32.totalorder %v2817, 0
    %vm2882 = vcmp.ne.s32.totalorder %v2818, 0
    %vm2883 = vcmp.ne.s32.totalorder %v2819, 0
    %vm2884 = vcmp.ne.s32.totalorder %v2820, 0
    %vm2885 = vcmp.ne.s32.totalorder %v2821, 0
    %v2886 = vsel %vm2822, %v2184, 0.0
    %v2887 = vsel %vm2823, %v2187, 0.0
    %v2888 = vsel %vm2824, %v2192, 0.0
    %v2889 = vsel %vm2825, %v2195, 0.0
    %v2890 = vsel %vm2826, %v2200, 0.0
    %v2891 = vsel %vm2827, %v2203, 0.0
    %v2892 = vsel %vm2828, %v2208, 0.0
    %v2893 = vsel %vm2829, %v2211, 0.0
    %v2894 = vsel %vm2830, %v2216, 0.0
    %v2895 = vsel %vm2831, %v2219, 0.0
    %v2896 = vsel %vm2832, %v2224, 0.0
    %v2897 = vsel %vm2833, %v2227, 0.0
    %v2898 = vsel %vm2834, %v2232, 0.0
    %v2899 = vsel %vm2835, %v2235, 0.0
    %v2900 = vsel %vm2836, %v2240, 0.0
    %v2901 = vsel %vm2837, %v2243, 0.0
    %v2902 = vsel %vm2838, %v2248, 0.0
    %v2903 = vsel %vm2839, %v2251, 0.0
    %v2904 = vsel %vm2840, %v2256, 0.0
    %v2905 = vsel %vm2841, %v2259, 0.0
    %v2906 = vsel %vm2842, %v2264, 0.0
    %v2907 = vsel %vm2843, %v2267, 0.0
    %v2908 = vsel %vm2844, %v2272, 0.0
    %v2909 = vsel %vm2845, %v2275, 0.0
    %v2910 = vsel %vm2846, %v2280, 0.0
    %v2911 = vsel %vm2847, %v2283, 0.0
    %v2912 = vsel %vm2848, %v2288, 0.0
    %v2913 = vsel %vm2849, %v2291, 0.0
    %v2914 = vsel %vm2850, %v2296, 0.0
    %v2915 = vsel %vm2851, %v2299, 0.0
    %v2916 = vsel %vm2852, %v2304, 0.0
    %v2917 = vsel %vm2853, %v2307, 0.0
    %v2918 = vsel %vm2854, %v2312, 0.0
    %v2919 = vsel %vm2855, %v2315, 0.0
    %v2920 = vsel %vm2856, %v2320, 0.0
    %v2921 = vsel %vm2857, %v2323, 0.0
    %v2922 = vsel %vm2858, %v2328, 0.0
    %v2923 = vsel %vm2859, %v2331, 0.0
    %v2924 = vsel %vm2860, %v2336, 0.0
    %v2925 = vsel %vm2861, %v2339, 0.0
    %v2926 = vsel %vm2862, %v2344, 0.0
    %v2927 = vsel %vm2863, %v2347, 0.0
    %v2928 = vsel %vm2864, %v2352, 0.0
    %v2929 = vsel %vm2865, %v2355, 0.0
    %v2930 = vsel %vm2866, %v2360, 0.0
    %v2931 = vsel %vm2867, %v2363, 0.0
    %v2932 = vsel %vm2868, %v2368, 0.0
    %v2933 = vsel %vm2869, %v2371, 0.0
    %v2934 = vsel %vm2870, %v2376, 0.0
    %v2935 = vsel %vm2871, %v2379, 0.0
    %v2936 = vsel %vm2872, %v2384, 0.0
    %v2937 = vsel %vm2873, %v2387, 0.0
    %v2938 = vsel %vm2874, %v2392, 0.0
    %v2939 = vsel %vm2875, %v2395, 0.0
    %v2940 = vsel %vm2876, %v2400, 0.0
    %v2941 = vsel %vm2877, %v2403, 0.0
    %v2942 = vsel %vm2878, %v2408, 0.0
    %v2943 = vsel %vm2879, %v2411, 0.0
    %v2944 = vsel %vm2880, %v2416, 0.0
    %v2945 = vsel %vm2881, %v2419, 0.0
    %v2946 = vsel %vm2882, %v2424, 0.0
    %v2947 = vsel %vm2883, %v2427, 0.0
    %v2948 = vsel %vm2884, %v2432, 0.0
    %v2949 = vsel %vm2885, %v2435, 0.0
    %v2950 = vpack.c.bf16 %v2887, %v2886
    %v2951 = vpack.c.bf16 %v2889, %v2888
    %v2952 = vpack.c.bf16 %v2891, %v2890
    %v2953 = vpack.c.bf16 %v2893, %v2892
    %v2954 = vpack.c.bf16 %v2895, %v2894
    %v2955 = vpack.c.bf16 %v2897, %v2896
    %v2956 = vpack.c.bf16 %v2899, %v2898
    %v2957 = vpack.c.bf16 %v2901, %v2900
    %v2958 = vpack.c.bf16 %v2903, %v2902
    %v2959 = vpack.c.bf16 %v2905, %v2904
    %v2960 = vpack.c.bf16 %v2907, %v2906
    %v2961 = vpack.c.bf16 %v2909, %v2908
    %v2962 = vpack.c.bf16 %v2911, %v2910
    %v2963 = vpack.c.bf16 %v2913, %v2912
    %v2964 = vpack.c.bf16 %v2915, %v2914
    %v2965 = vpack.c.bf16 %v2917, %v2916
    %v2966 = vpack.c.bf16 %v2919, %v2918
    %v2967 = vpack.c.bf16 %v2921, %v2920
    %v2968 = vpack.c.bf16 %v2923, %v2922
    %v2969 = vpack.c.bf16 %v2925, %v2924
    %v2970 = vpack.c.bf16 %v2927, %v2926
    %v2971 = vpack.c.bf16 %v2929, %v2928
    %v2972 = vpack.c.bf16 %v2931, %v2930
    %v2973 = vpack.c.bf16 %v2933, %v2932
    %v2974 = vpack.c.bf16 %v2935, %v2934
    %v2975 = vpack.c.bf16 %v2937, %v2936
    %v2976 = vpack.c.bf16 %v2939, %v2938
    %v2977 = vpack.c.bf16 %v2941, %v2940
    %v2978 = vpack.c.bf16 %v2943, %v2942
    %v2979 = vpack.c.bf16 %v2945, %v2944
    %v2980 = vpack.c.bf16 %v2947, %v2946
    %v2981 = vpack.c.bf16 %v2949, %v2948
    %2982 = vxpose.xlu0.c.b16.start [1/8] %v572, 128
    %2983 = vxpose.xlu0.c.b16.cont [2/8] %v574, 128
    %2984 = vxpose.xlu0.c.b16.cont [3/8] %v576, 128
    %2985 = vxpose.xlu0.c.b16.cont [4/8] %v578, 128
    %2986 = vxpose.xlu0.c.b16.cont [5/8] %v580, 128
    %2987 = vxpose.xlu0.c.b16.cont [6/8] %v582, 128
    %2988 = vxpose.xlu0.c.b16.cont [7/8] %v584, 128
    %2989 = vxpose.xlu0.c.b16.end [8/8] %v586, 128
    %v2990 = vpop.trf.xlu0
    %v2991 = vpop.trf.xlu0
    %v2992 = vpop.trf.xlu0
    %v2993 = vpop.trf.xlu0
    %v2994 = vpop.trf.xlu0
    %v2995 = vpop.trf.xlu0
    %v2996 = vpop.trf.xlu0
    %v2997 = vpop.trf.xlu0
    %2998 = vxpose.xlu0.c.b16.start [1/8] %v573, 128
    %2999 = vxpose.xlu0.c.b16.cont [2/8] %v575, 128
    %3000 = vxpose.xlu0.c.b16.cont [3/8] %v577, 128
    %3001 = vxpose.xlu0.c.b16.cont [4/8] %v579, 128
    %3002 = vxpose.xlu0.c.b16.cont [5/8] %v581, 128
    %3003 = vxpose.xlu0.c.b16.cont [6/8] %v583, 128
    %3004 = vxpose.xlu0.c.b16.cont [7/8] %v585, 128
    %3005 = vxpose.xlu0.c.b16.end [8/8] %v587, 128
    %v3006 = vpop.trf.xlu0
    %v3007 = vpop.trf.xlu0
    %v3008 = vpop.trf.xlu0
    %v3009 = vpop.trf.xlu0
    %v3010 = vpop.trf.xlu0
    %v3011 = vpop.trf.xlu0
    %v3012 = vpop.trf.xlu0
    %v3013 = vpop.trf.xlu0
    %3014 = vxpose.xlu0.c.b16.start [1/8] %v588, 128
    %3015 = vxpose.xlu0.c.b16.cont [2/8] %v590, 128
    %3016 = vxpose.xlu0.c.b16.cont [3/8] %v592, 128
    %3017 = vxpose.xlu0.c.b16.cont [4/8] %v594, 128
    %3018 = vxpose.xlu0.c.b16.cont [5/8] %v596, 128
    %3019 = vxpose.xlu0.c.b16.cont [6/8] %v598, 128
    %3020 = vxpose.xlu0.c.b16.cont [7/8] %v600, 128
    %3021 = vxpose.xlu0.c.b16.end [8/8] %v602, 128
    %v3022 = vpop.trf.xlu0
    %v3023 = vpop.trf.xlu0
    %v3024 = vpop.trf.xlu0
    %v3025 = vpop.trf.xlu0
    %v3026 = vpop.trf.xlu0
    %v3027 = vpop.trf.xlu0
    %v3028 = vpop.trf.xlu0
    %v3029 = vpop.trf.xlu0
    %3030 = vxpose.xlu0.c.b16.start [1/8] %v589, 128
    %3031 = vxpose.xlu0.c.b16.cont [2/8] %v591, 128
    %3032 = vxpose.xlu0.c.b16.cont [3/8] %v593, 128
    %3033 = vxpose.xlu0.c.b16.cont [4/8] %v595, 128
    %3034 = vxpose.xlu0.c.b16.cont [5/8] %v597, 128
    %3035 = vxpose.xlu0.c.b16.cont [6/8] %v599, 128
    %3036 = vxpose.xlu0.c.b16.cont [7/8] %v601, 128
    %3037 = vxpose.xlu0.c.b16.end [8/8] %v603, 128
    %v3038 = vpop.trf.xlu0
    %v3039 = vpop.trf.xlu0
    %v3040 = vpop.trf.xlu0
    %v3041 = vpop.trf.xlu0
    %v3042 = vpop.trf.xlu0
    %v3043 = vpop.trf.xlu0
    %v3044 = vpop.trf.xlu0
    %v3045 = vpop.trf.xlu0
    %3046 = vxpose.xlu0.c.b16.start [1/8] %v604, 128
    %3047 = vxpose.xlu0.c.b16.cont [2/8] %v606, 128
    %3048 = vxpose.xlu0.c.b16.cont [3/8] %v608, 128
    %3049 = vxpose.xlu0.c.b16.cont [4/8] %v610, 128
    %3050 = vxpose.xlu0.c.b16.cont [5/8] %v612, 128
    %3051 = vxpose.xlu0.c.b16.cont [6/8] %v614, 128
    %3052 = vxpose.xlu0.c.b16.cont [7/8] %v616, 128
    %3053 = vxpose.xlu0.c.b16.end [8/8] %v618, 128
    %v3054 = vpop.trf.xlu0
    %v3055 = vpop.trf.xlu0
    %v3056 = vpop.trf.xlu0
    %v3057 = vpop.trf.xlu0
    %v3058 = vpop.trf.xlu0
    %v3059 = vpop.trf.xlu0
    %v3060 = vpop.trf.xlu0
    %v3061 = vpop.trf.xlu0
    %3062 = vxpose.xlu0.c.b16.start [1/8] %v605, 128
    %3063 = vxpose.xlu0.c.b16.cont [2/8] %v607, 128
    %3064 = vxpose.xlu0.c.b16.cont [3/8] %v609, 128
    %3065 = vxpose.xlu0.c.b16.cont [4/8] %v611, 128
    %3066 = vxpose.xlu0.c.b16.cont [5/8] %v613, 128
    %3067 = vxpose.xlu0.c.b16.cont [6/8] %v615, 128
    %3068 = vxpose.xlu0.c.b16.cont [7/8] %v617, 128
    %3069 = vxpose.xlu0.c.b16.end [8/8] %v619, 128
    %v3070 = vpop.trf.xlu0
    %v3071 = vpop.trf.xlu0
    %v3072 = vpop.trf.xlu0
    %v3073 = vpop.trf.xlu0
    %v3074 = vpop.trf.xlu0
    %v3075 = vpop.trf.xlu0
    %v3076 = vpop.trf.xlu0
    %v3077 = vpop.trf.xlu0
    %3078 = vxpose.xlu0.c.b16.start [1/8] %v620, 128
    %3079 = vxpose.xlu0.c.b16.cont [2/8] %v622, 128
    %3080 = vxpose.xlu0.c.b16.cont [3/8] %v624, 128
    %3081 = vxpose.xlu0.c.b16.cont [4/8] %v626, 128
    %3082 = vxpose.xlu0.c.b16.cont [5/8] %v628, 128
    %3083 = vxpose.xlu0.c.b16.cont [6/8] %v630, 128
    %3084 = vxpose.xlu0.c.b16.cont [7/8] %v632, 128
    %3085 = vxpose.xlu0.c.b16.end [8/8] %v634, 128
    %v3086 = vpop.trf.xlu0
    %v3087 = vpop.trf.xlu0
    %v3088 = vpop.trf.xlu0
    %v3089 = vpop.trf.xlu0
    %v3090 = vpop.trf.xlu0
    %v3091 = vpop.trf.xlu0
    %v3092 = vpop.trf.xlu0
    %v3093 = vpop.trf.xlu0
    %3094 = vxpose.xlu0.c.b16.start [1/8] %v621, 128
    %3095 = vxpose.xlu0.c.b16.cont [2/8] %v623, 128
    %3096 = vxpose.xlu0.c.b16.cont [3/8] %v625, 128
    %3097 = vxpose.xlu0.c.b16.cont [4/8] %v627, 128
    %3098 = vxpose.xlu0.c.b16.cont [5/8] %v629, 128
    %3099 = vxpose.xlu0.c.b16.cont [6/8] %v631, 128
    %3100 = vxpose.xlu0.c.b16.cont [7/8] %v633, 128
    %3101 = vxpose.xlu0.c.b16.end [8/8] %v635, 128
    %v3102 = vpop.trf.xlu0
    %v3103 = vpop.trf.xlu0
    %v3104 = vpop.trf.xlu0
    %v3105 = vpop.trf.xlu0
    %v3106 = vpop.trf.xlu0
    %v3107 = vpop.trf.xlu0
    %v3108 = vpop.trf.xlu0
    %v3109 = vpop.trf.xlu0
    %3110 = vmatprep.subr.bf16.mxu0 0
    %3111 = vmatpush1.bf16.msra.mxu0 %v2950
    %3112 = vmatprep.subr.bf16.mxu0 0
    %3113 = vmatpush1.bf16.msra.mxu0 %v2951
    %3114 = vmatprep.subr.bf16.mxu0 0
    %3115 = vmatpush1.bf16.msra.mxu0 %v2952
    %3116 = vmatprep.subr.bf16.mxu0 0
    %3117 = vmatpush1.bf16.msra.mxu0 %v2953
    %3118 = vmatprep.subr.bf16.mxu0 0
    %3119 = vmatpush1.bf16.msra.mxu0 %v2954
    %3120 = vmatprep.subr.bf16.mxu0 0
    %3121 = vmatpush1.bf16.msra.mxu0 %v2955
    %3122 = vmatprep.subr.bf16.mxu0 0
    %3123 = vmatpush1.bf16.msra.mxu0 %v2956
    %3124 = vmatprep.subr.bf16.mxu0 0
    %3125 = vmatpush1.bf16.msra.mxu0 %v2957
    %3126 = vmatprep.subr.bf16.mxu0 0
    %3127 = vmatpush1.bf16.msra.mxu0 %v2958
    %3128 = vmatprep.subr.bf16.mxu0 0
    %3129 = vmatpush1.bf16.msra.mxu0 %v2959
    %3130 = vmatprep.subr.bf16.mxu0 0
    %3131 = vmatpush1.bf16.msra.mxu0 %v2960
    %3132 = vmatprep.subr.bf16.mxu0 0
    %3133 = vmatpush1.bf16.msra.mxu0 %v2961
    %3134 = vmatprep.subr.bf16.mxu0 0
    %3135 = vmatpush1.bf16.msra.mxu0 %v2962
    %3136 = vmatprep.subr.bf16.mxu0 0
    %3137 = vmatpush1.bf16.msra.mxu0 %v2963
    %3138 = vmatprep.subr.bf16.mxu0 0
    %3139 = vmatpush1.bf16.msra.mxu0 %v2964
    %3140 = vmatprep.subr.bf16.mxu0 0
    %3141 = vmatpush1.bf16.msra.mxu0 %v2965
    %3142 = vmatprep.mubr.bf16.mxu0 %v3022
    %3143 = vmatmul.mubr.bf16.gmra.mrb[0].mxu0 %v2990
    %v3144 = vpop.f32.mrb[0].mxu0
    %v3145 = vadd.f32 0.0, %v3144
    %v3146 = vpop.f32.mrb[0].mxu0
    %v3147 = vpop.f32.mrb[0].mxu0
    %v3148 = vadd.f32 0.0, %v3147
    %v3149 = vpop.f32.mrb[0].mxu0
    %3150 = vmatprep.mubr.bf16.mxu0 %v3023
    %3151 = vmatmul.mubr.bf16.gmra.mrb[0].mxu0 %v2991
    %v3152 = vpop.f32.mrb[0].mxu0
    %v3153 = vadd.f32 0.0, %v3152
    %v3154 = vpop.f32.mrb[0].mxu0
    %v3155 = vpop.f32.mrb[0].mxu0
    %v3156 = vadd.f32 0.0, %v3155
    %v3157 = vpop.f32.mrb[0].mxu0
    %3158 = vmatprep.mubr.bf16.mxu0 %v3024
    %3159 = vmatmul.mubr.bf16.gmra.mrb[0].mxu0 %v2992
    %v3160 = vpop.f32.mrb[0].mxu0
    %v3161 = vadd.f32 0.0, %v3160
    %v3162 = vpop.f32.mrb[0].mxu0
    %v3163 = vpop.f32.mrb[0].mxu0
    %v3164 = vadd.f32 0.0, %v3163
    %v3165 = vpop.f32.mrb[0].mxu0
    %3166 = vmatprep.mubr.bf16.mxu0 %v3025
    %3167 = vmatmul.mubr.bf16.gmra.mrb[0].mxu0 %v2993
    %v3168 = vpop.f32.mrb[0].mxu0
    %v3169 = vadd.f32 0.0, %v3168
    %v3170 = vpop.f32.mrb[0].mxu0
    %v3171 = vpop.f32.mrb[0].mxu0
    %v3172 = vadd.f32 0.0, %v3171
    %v3173 = vpop.f32.mrb[0].mxu0
    %3174 = vmatprep.mubr.bf16.mxu0 %v3026
    %3175 = vmatmul.mubr.bf16.gmra.mrb[0].mxu0 %v2994
    %v3176 = vpop.f32.mrb[0].mxu0
    %v3177 = vadd.f32 0.0, %v3176
    %v3178 = vpop.f32.mrb[0].mxu0
    %v3179 = vpop.f32.mrb[0].mxu0
    %v3180 = vadd.f32 0.0, %v3179
    %v3181 = vpop.f32.mrb[0].mxu0
    %3182 = vmatprep.mubr.bf16.mxu0 %v3027
    %3183 = vmatmul.mubr.bf16.gmra.mrb[0].mxu0 %v2995
    %v3184 = vpop.f32.mrb[0].mxu0
    %v3185 = vadd.f32 0.0, %v3184
    %v3186 = vpop.f32.mrb[0].mxu0
    %v3187 = vpop.f32.mrb[0].mxu0
    %v3188 = vadd.f32 0.0, %v3187
    %v3189 = vpop.f32.mrb[0].mxu0
    %3190 = vmatprep.mubr.bf16.mxu0 %v3028
    %3191 = vmatmul.mubr.bf16.gmra.mrb[0].mxu0 %v2996
    %v3192 = vpop.f32.mrb[0].mxu0
    %v3193 = vadd.f32 0.0, %v3192
    %v3194 = vpop.f32.mrb[0].mxu0
    %v3195 = vpop.f32.mrb[0].mxu0
    %v3196 = vadd.f32 0.0, %v3195
    %v3197 = vpop.f32.mrb[0].mxu0
    %3198 = vmatprep.mubr.bf16.mxu0 %v3029
    %3199 = vmatmul.mubr.bf16.gmra.mrb[0].mxu0 %v2997
    %v3200 = vpop.f32.mrb[0].mxu0
    %v3201 = vadd.f32 0.0, %v3200
    %v3202 = vpop.f32.mrb[0].mxu0
    %v3203 = vpop.f32.mrb[0].mxu0
    %v3204 = vadd.f32 0.0, %v3203
    %v3205 = vpop.f32.mrb[0].mxu0
    %3206 = vmatprep.mubr.bf16.mxu0 %v3038
    %3207 = vmatmul.mubr.bf16.gmra.mrb[0].mxu0 %v3006
    %v3208 = vpop.f32.mrb[0].mxu0
    %v3209 = vadd.f32 0.0, %v3208
    %v3210 = vpop.f32.mrb[0].mxu0
    %v3211 = vpop.f32.mrb[0].mxu0
    %v3212 = vadd.f32 0.0, %v3211
    %v3213 = vpop.f32.mrb[0].mxu0
    %3214 = vmatprep.mubr.bf16.mxu0 %v3039
    %3215 = vmatmul.mubr.bf16.gmra.mrb[0].mxu0 %v3007
    %v3216 = vpop.f32.mrb[0].mxu0
    %v3217 = vadd.f32 0.0, %v3216
    %v3218 = vpop.f32.mrb[0].mxu0
    %v3219 = vpop.f32.mrb[0].mxu0
    %v3220 = vadd.f32 0.0, %v3219
    %v3221 = vpop.f32.mrb[0].mxu0
    %3222 = vmatprep.mubr.bf16.mxu0 %v3040
    %3223 = vmatmul.mubr.bf16.gmra.mrb[0].mxu0 %v3008
    %v3224 = vpop.f32.mrb[0].mxu0
    %v3225 = vadd.f32 0.0, %v3224
    %v3226 = vpop.f32.mrb[0].mxu0
    %v3227 = vpop.f32.mrb[0].mxu0
    %v3228 = vadd.f32 0.0, %v3227
    %v3229 = vpop.f32.mrb[0].mxu0
    %3230 = vmatprep.mubr.bf16.mxu0 %v3041
    %3231 = vmatmul.mubr.bf16.gmra.mrb[0].mxu0 %v3009
    %v3232 = vpop.f32.mrb[0].mxu0
    %v3233 = vadd.f32 0.0, %v3232
    %v3234 = vpop.f32.mrb[0].mxu0
    %v3235 = vpop.f32.mrb[0].mxu0
    %v3236 = vadd.f32 0.0, %v3235
    %v3237 = vpop.f32.mrb[0].mxu0
    %3238 = vmatprep.mubr.bf16.mxu0 %v3042
    %3239 = vmatmul.mubr.bf16.gmra.mrb[0].mxu0 %v3010
    %v3240 = vpop.f32.mrb[0].mxu0
    %v3241 = vadd.f32 0.0, %v3240
    %v3242 = vpop.f32.mrb[0].mxu0
    %v3243 = vpop.f32.mrb[0].mxu0
    %v3244 = vadd.f32 0.0, %v3243
    %v3245 = vpop.f32.mrb[0].mxu0
    %3246 = vmatprep.mubr.bf16.mxu0 %v3043
    %3247 = vmatmul.mubr.bf16.gmra.mrb[0].mxu0 %v3011
    %v3248 = vpop.f32.mrb[0].mxu0
    %v3249 = vadd.f32 0.0, %v3248
    %v3250 = vpop.f32.mrb[0].mxu0
    %v3251 = vpop.f32.mrb[0].mxu0
    %v3252 = vadd.f32 0.0, %v3251
    %v3253 = vpop.f32.mrb[0].mxu0
    %3254 = vmatprep.mubr.bf16.mxu0 %v3044
    %3255 = vmatmul.mubr.bf16.gmra.mrb[0].mxu0 %v3012
    %v3256 = vpop.f32.mrb[0].mxu0
    %v3257 = vadd.f32 0.0, %v3256
    %v3258 = vpop.f32.mrb[0].mxu0
    %v3259 = vpop.f32.mrb[0].mxu0
    %v3260 = vadd.f32 0.0, %v3259
    %v3261 = vpop.f32.mrb[0].mxu0
    %3262 = vmatprep.mubr.bf16.mxu0 %v3045
    %3263 = vmatmul.mubr.bf16.gmra.mrb[0].mxu0 %v3013
    %v3264 = vpop.f32.mrb[0].mxu0
    %v3265 = vadd.f32 0.0, %v3264
    %v3266 = vpop.f32.mrb[0].mxu0
    %v3267 = vpop.f32.mrb[0].mxu0
    %v3268 = vadd.f32 0.0, %v3267
    %v3269 = vpop.f32.mrb[0].mxu0
    %3270 = vdwg.mxu0
    %3271 = vmatprep.subr.bf16.mxu0 0
    %3272 = vmatpush1.bf16.msra.mxu0 %v2966
    %3273 = vmatprep.subr.bf16.mxu0 0
    %3274 = vmatpush1.bf16.msra.mxu0 %v2967
    %3275 = vmatprep.subr.bf16.mxu0 0
    %3276 = vmatpush1.bf16.msra.mxu0 %v2968
    %3277 = vmatprep.subr.bf16.mxu0 0
    %3278 = vmatpush1.bf16.msra.mxu0 %v2969
    %3279 = vmatprep.subr.bf16.mxu0 0
    %3280 = vmatpush1.bf16.msra.mxu0 %v2970
    %3281 = vmatprep.subr.bf16.mxu0 0
    %3282 = vmatpush1.bf16.msra.mxu0 %v2971
    %3283 = vmatprep.subr.bf16.mxu0 0
    %3284 = vmatpush1.bf16.msra.mxu0 %v2972
    %3285 = vmatprep.subr.bf16.mxu0 0
    %3286 = vmatpush1.bf16.msra.mxu0 %v2973
    %3287 = vmatprep.subr.bf16.mxu0 0
    %3288 = vmatpush1.bf16.msra.mxu0 %v2974
    %3289 = vmatprep.subr.bf16.mxu0 0
    %3290 = vmatpush1.bf16.msra.mxu0 %v2975
    %3291 = vmatprep.subr.bf16.mxu0 0
    %3292 = vmatpush1.bf16.msra.mxu0 %v2976
    %3293 = vmatprep.subr.bf16.mxu0 0
    %3294 = vmatpush1.bf16.msra.mxu0 %v2977
    %3295 = vmatprep.subr.bf16.mxu0 0
    %3296 = vmatpush1.bf16.msra.mxu0 %v2978
    %3297 = vmatprep.subr.bf16.mxu0 0
    %3298 = vmatpush1.bf16.msra.mxu0 %v2979
    %3299 = vmatprep.subr.bf16.mxu0 0
    %3300 = vmatpush1.bf16.msra.mxu0 %v2980
    %3301 = vmatprep.subr.bf16.mxu0 0
    %3302 = vmatpush1.bf16.msra.mxu0 %v2981
    %3303 = vmatprep.mubr.bf16.mxu0 %v3086
    %3304 = vmatmul.mubr.bf16.gmra.mrb[0].mxu0 %v3054
    %v3305 = vpop.f32.mrb[0].mxu0
    %v3306 = vadd.f32 %v3145, %v3305
    %v3307 = vpop.f32.mrb[0].mxu0
    %v3308 = vpop.f32.mrb[0].mxu0
    %v3309 = vadd.f32 %v3148, %v3308
    %v3310 = vpop.f32.mrb[0].mxu0
    %3311 = vmatprep.mubr.bf16.mxu0 %v3087
    %3312 = vmatmul.mubr.bf16.gmra.mrb[0].mxu0 %v3055
    %v3313 = vpop.f32.mrb[0].mxu0
    %v3314 = vadd.f32 %v3153, %v3313
    %v3315 = vpop.f32.mrb[0].mxu0
    %v3316 = vpop.f32.mrb[0].mxu0
    %v3317 = vadd.f32 %v3156, %v3316
    %v3318 = vpop.f32.mrb[0].mxu0
    %3319 = vmatprep.mubr.bf16.mxu0 %v3088
    %3320 = vmatmul.mubr.bf16.gmra.mrb[0].mxu0 %v3056
    %v3321 = vpop.f32.mrb[0].mxu0
    %v3322 = vadd.f32 %v3161, %v3321
    %v3323 = vpop.f32.mrb[0].mxu0
    %v3324 = vpop.f32.mrb[0].mxu0
    %v3325 = vadd.f32 %v3164, %v3324
    %v3326 = vpop.f32.mrb[0].mxu0
    %3327 = vmatprep.mubr.bf16.mxu0 %v3089
    %3328 = vmatmul.mubr.bf16.gmra.mrb[0].mxu0 %v3057
    %v3329 = vpop.f32.mrb[0].mxu0
    %v3330 = vadd.f32 %v3169, %v3329
    %v3331 = vpop.f32.mrb[0].mxu0
    %v3332 = vpop.f32.mrb[0].mxu0
    %v3333 = vadd.f32 %v3172, %v3332
    %v3334 = vpop.f32.mrb[0].mxu0
    %3335 = vmatprep.mubr.bf16.mxu0 %v3090
    %3336 = vmatmul.mubr.bf16.gmra.mrb[0].mxu0 %v3058
    %v3337 = vpop.f32.mrb[0].mxu0
    %v3338 = vadd.f32 %v3177, %v3337
    %v3339 = vpop.f32.mrb[0].mxu0
    %v3340 = vpop.f32.mrb[0].mxu0
    %v3341 = vadd.f32 %v3180, %v3340
    %v3342 = vpop.f32.mrb[0].mxu0
    %3343 = vmatprep.mubr.bf16.mxu0 %v3091
    %3344 = vmatmul.mubr.bf16.gmra.mrb[0].mxu0 %v3059
    %v3345 = vpop.f32.mrb[0].mxu0
    %v3346 = vadd.f32 %v3185, %v3345
    %v3347 = vpop.f32.mrb[0].mxu0
    %v3348 = vpop.f32.mrb[0].mxu0
    %v3349 = vadd.f32 %v3188, %v3348
    %v3350 = vpop.f32.mrb[0].mxu0
    %3351 = vmatprep.mubr.bf16.mxu0 %v3092
    %3352 = vmatmul.mubr.bf16.gmra.mrb[0].mxu0 %v3060
    %v3353 = vpop.f32.mrb[0].mxu0
    %v3354 = vadd.f32 %v3193, %v3353
    %v3355 = vpop.f32.mrb[0].mxu0
    %v3356 = vpop.f32.mrb[0].mxu0
    %v3357 = vadd.f32 %v3196, %v3356
    %v3358 = vpop.f32.mrb[0].mxu0
    %3359 = vmatprep.mubr.bf16.mxu0 %v3093
    %3360 = vmatmul.mubr.bf16.gmra.mrb[0].mxu0 %v3061
    %v3361 = vpop.f32.mrb[0].mxu0
    %v3362 = vadd.f32 %v3201, %v3361
    %v3363 = vpop.f32.mrb[0].mxu0
    %v3364 = vpop.f32.mrb[0].mxu0
    %v3365 = vadd.f32 %v3204, %v3364
    %v3366 = vpop.f32.mrb[0].mxu0
    %3367 = vmatprep.mubr.bf16.mxu0 %v3102
    %3368 = vmatmul.mubr.bf16.gmra.mrb[0].mxu0 %v3070
    %v3369 = vpop.f32.mrb[0].mxu0
    %v3370 = vadd.f32 %v3209, %v3369
    %v3371 = vpop.f32.mrb[0].mxu0
    %v3372 = vpop.f32.mrb[0].mxu0
    %v3373 = vadd.f32 %v3212, %v3372
    %v3374 = vpop.f32.mrb[0].mxu0
    %3375 = vmatprep.mubr.bf16.mxu0 %v3103
    %3376 = vmatmul.mubr.bf16.gmra.mrb[0].mxu0 %v3071
    %v3377 = vpop.f32.mrb[0].mxu0
    %v3378 = vadd.f32 %v3217, %v3377
    %v3379 = vpop.f32.mrb[0].mxu0
    %v3380 = vpop.f32.mrb[0].mxu0
    %v3381 = vadd.f32 %v3220, %v3380
    %v3382 = vpop.f32.mrb[0].mxu0
    %3383 = vmatprep.mubr.bf16.mxu0 %v3104
    %3384 = vmatmul.mubr.bf16.gmra.mrb[0].mxu0 %v3072
    %v3385 = vpop.f32.mrb[0].mxu0
    %v3386 = vadd.f32 %v3225, %v3385
    %v3387 = vpop.f32.mrb[0].mxu0
    %v3388 = vpop.f32.mrb[0].mxu0
    %v3389 = vadd.f32 %v3228, %v3388
    %v3390 = vpop.f32.mrb[0].mxu0
    %3391 = vmatprep.mubr.bf16.mxu0 %v3105
    %3392 = vmatmul.mubr.bf16.gmra.mrb[0].mxu0 %v3073
    %v3393 = vpop.f32.mrb[0].mxu0
    %v3394 = vadd.f32 %v3233, %v3393
    %v3395 = vpop.f32.mrb[0].mxu0
    %v3396 = vpop.f32.mrb[0].mxu0
    %v3397 = vadd.f32 %v3236, %v3396
    %v3398 = vpop.f32.mrb[0].mxu0
    %3399 = vmatprep.mubr.bf16.mxu0 %v3106
    %3400 = vmatmul.mubr.bf16.gmra.mrb[0].mxu0 %v3074
    %v3401 = vpop.f32.mrb[0].mxu0
    %v3402 = vadd.f32 %v3241, %v3401
    %v3403 = vpop.f32.mrb[0].mxu0
    %v3404 = vpop.f32.mrb[0].mxu0
    %v3405 = vadd.f32 %v3244, %v3404
    %v3406 = vpop.f32.mrb[0].mxu0
    %3407 = vmatprep.mubr.bf16.mxu0 %v3107
    %3408 = vmatmul.mubr.bf16.gmra.mrb[0].mxu0 %v3075
    %v3409 = vpop.f32.mrb[0].mxu0
    %v3410 = vadd.f32 %v3249, %v3409
    %v3411 = vpop.f32.mrb[0].mxu0
    %v3412 = vpop.f32.mrb[0].mxu0
    %v3413 = vadd.f32 %v3252, %v3412
    %v3414 = vpop.f32.mrb[0].mxu0
    %3415 = vmatprep.mubr.bf16.mxu0 %v3108
    %3416 = vmatmul.mubr.bf16.gmra.mrb[0].mxu0 %v3076
    %v3417 = vpop.f32.mrb[0].mxu0
    %v3418 = vadd.f32 %v3257, %v3417
    %v3419 = vpop.f32.mrb[0].mxu0
    %v3420 = vpop.f32.mrb[0].mxu0
    %v3421 = vadd.f32 %v3260, %v3420
    %v3422 = vpop.f32.mrb[0].mxu0
    %3423 = vmatprep.mubr.bf16.mxu0 %v3109
    %3424 = vmatmul.mubr.bf16.gmra.mrb[0].mxu0 %v3077
    %v3425 = vpop.f32.mrb[0].mxu0
    %v3426 = vadd.f32 %v3265, %v3425
    %v3427 = vpop.f32.mrb[0].mxu0
    %v3428 = vpop.f32.mrb[0].mxu0
    %v3429 = vadd.f32 %v3268, %v3428
    %v3430 = vpop.f32.mrb[0].mxu0
    %3431 = vdwg.mxu0
    %v3432 = vmul.f32 %v3306, 0.0009765625
    %v3433 = vmul.f32 %v3309, 0.0009765625
    %v3434 = vmul.f32 %v3314, 0.0009765625
    %v3435 = vmul.f32 %v3317, 0.0009765625
    %v3436 = vmul.f32 %v3322, 0.0009765625
    %v3437 = vmul.f32 %v3325, 0.0009765625
    %v3438 = vmul.f32 %v3330, 0.0009765625
    %v3439 = vmul.f32 %v3333, 0.0009765625
    %v3440 = vmul.f32 %v3338, 0.0009765625
    %v3441 = vmul.f32 %v3341, 0.0009765625
    %v3442 = vmul.f32 %v3346, 0.0009765625
    %v3443 = vmul.f32 %v3349, 0.0009765625
    %v3444 = vmul.f32 %v3354, 0.0009765625
    %v3445 = vmul.f32 %v3357, 0.0009765625
    %v3446 = vmul.f32 %v3362, 0.0009765625
    %v3447 = vmul.f32 %v3365, 0.0009765625
    %v3448 = vmul.f32 %v3370, 0.0009765625
    %v3449 = vmul.f32 %v3373, 0.0009765625
    %v3450 = vmul.f32 %v3378, 0.0009765625
    %v3451 = vmul.f32 %v3381, 0.0009765625
    %v3452 = vmul.f32 %v3386, 0.0009765625
    %v3453 = vmul.f32 %v3389, 0.0009765625
    %v3454 = vmul.f32 %v3394, 0.0009765625
    %v3455 = vmul.f32 %v3397, 0.0009765625
    %v3456 = vmul.f32 %v3402, 0.0009765625
    %v3457 = vmul.f32 %v3405, 0.0009765625
    %v3458 = vmul.f32 %v3410, 0.0009765625
    %v3459 = vmul.f32 %v3413, 0.0009765625
    %v3460 = vmul.f32 %v3418, 0.0009765625
    %v3461 = vmul.f32 %v3421, 0.0009765625
    %v3462 = vmul.f32 %v3426, 0.0009765625
    %v3463 = vmul.f32 %v3429, 0.0009765625
    %s3464 = sld [smem:[#allocation5]]
    %s3465 = sld [smem:[#allocation5 + $0x1]]
    %v3466 = vld [vmem:[%s4] sm:$0xff]
    %v3467 = vld [vmem:[%s4 + $0x8] sm:$0xff]
    %v3468 = vld [vmem:[%s4 + $0x10] sm:$0xff]
    %v3469 = vld [vmem:[%s4 + $0x18] sm:$0xff]
    %v3470 = vld [vmem:[%s4 + $0x20] sm:$0xff]
    %v3471 = vld [vmem:[%s4 + $0x28] sm:$0xff]
    %v3472 = vld [vmem:[%s4 + $0x30] sm:$0xff]
    %v3473 = vld [vmem:[%s4 + $0x38] sm:$0xff]
    %v3474 = vld [vmem:[%s4 + $0x40] sm:$0xff]
    %v3475 = vld [vmem:[%s4 + $0x48] sm:$0xff]
    %v3476 = vld [vmem:[%s4 + $0x50] sm:$0xff]
    %v3477 = vld [vmem:[%s4 + $0x58] sm:$0xff]
    %v3478 = vld [vmem:[%s4 + $0x60] sm:$0xff]
    %v3479 = vld [vmem:[%s4 + $0x68] sm:$0xff]
    %v3480 = vld [vmem:[%s4 + $0x70] sm:$0xff]
    %v3481 = vld [vmem:[%s4 + $0x78] sm:$0xff]
    %v3482 = vmul.f32 %v3466, 0.9
    %v3483 = vmul.f32 %v3467, 0.9
    %v3484 = vmul.f32 %v3468, 0.9
    %v3485 = vmul.f32 %v3469, 0.9
    %v3486 = vmul.f32 %v3470, 0.9
    %v3487 = vmul.f32 %v3471, 0.9
    %v3488 = vmul.f32 %v3472, 0.9
    %v3489 = vmul.f32 %v3473, 0.9
    %v3490 = vmul.f32 %v3474, 0.9
    %v3491 = vmul.f32 %v3475, 0.9
    %v3492 = vmul.f32 %v3476, 0.9
    %v3493 = vmul.f32 %v3477, 0.9
    %v3494 = vmul.f32 %v3478, 0.9
    %v3495 = vmul.f32 %v3479, 0.9
    %v3496 = vmul.f32 %v3480, 0.9
    %v3497 = vmul.f32 %v3481, 0.9
    %v3498 = vmul.f32 %v3432, 0.1
    %v3499 = vmul.f32 %v3433, 0.1
    %v3500 = vmul.f32 %v3434, 0.1
    %v3501 = vmul.f32 %v3435, 0.1
    %v3502 = vmul.f32 %v3436, 0.1
    %v3503 = vmul.f32 %v3437, 0.1
    %v3504 = vmul.f32 %v3438, 0.1
    %v3505 = vmul.f32 %v3439, 0.1
    %v3506 = vmul.f32 %v3440, 0.1
    %v3507 = vmul.f32 %v3441, 0.1
    %v3508 = vmul.f32 %v3442, 0.1
    %v3509 = vmul.f32 %v3443, 0.1
    %v3510 = vmul.f32 %v3444, 0.1
    %v3511 = vmul.f32 %v3445, 0.1
    %v3512 = vmul.f32 %v3446, 0.1
    %v3513 = vmul.f32 %v3447, 0.1
    %v3514 = vadd.f32 %v3482, %v3498
    %v3515 = vadd.f32 %v3483, %v3499
    %v3516 = vadd.f32 %v3484, %v3500
    %v3517 = vadd.f32 %v3485, %v3501
    %v3518 = vadd.f32 %v3486, %v3502
    %v3519 = vadd.f32 %v3487, %v3503
    %v3520 = vadd.f32 %v3488, %v3504
    %v3521 = vadd.f32 %v3489, %v3505
    %v3522 = vadd.f32 %v3490, %v3506
    %v3523 = vadd.f32 %v3491, %v3507
    %v3524 = vadd.f32 %v3492, %v3508
    %v3525 = vadd.f32 %v3493, %v3509
    %v3526 = vadd.f32 %v3494, %v3510
    %v3527 = vadd.f32 %v3495, %v3511
    %v3528 = vadd.f32 %v3496, %v3512
    %v3529 = vadd.f32 %v3497, %v3513
    %v3530 = vld [vmem:[%s5] sm:$0xff]
    %v3531 = vld [vmem:[%s5 + $0x8] sm:$0xff]
    %v3532 = vld [vmem:[%s5 + $0x10] sm:$0xff]
    %v3533 = vld [vmem:[%s5 + $0x18] sm:$0xff]
    %v3534 = vld [vmem:[%s5 + $0x20] sm:$0xff]
    %v3535 = vld [vmem:[%s5 + $0x28] sm:$0xff]
    %v3536 = vld [vmem:[%s5 + $0x30] sm:$0xff]
    %v3537 = vld [vmem:[%s5 + $0x38] sm:$0xff]
    %v3538 = vld [vmem:[%s5 + $0x40] sm:$0xff]
    %v3539 = vld [vmem:[%s5 + $0x48] sm:$0xff]
    %v3540 = vld [vmem:[%s5 + $0x50] sm:$0xff]
    %v3541 = vld [vmem:[%s5 + $0x58] sm:$0xff]
    %v3542 = vld [vmem:[%s5 + $0x60] sm:$0xff]
    %v3543 = vld [vmem:[%s5 + $0x68] sm:$0xff]
    %v3544 = vld [vmem:[%s5 + $0x70] sm:$0xff]
    %v3545 = vld [vmem:[%s5 + $0x78] sm:$0xff]
    %v3546 = vmul.f32 %v3530, 0.99
    %v3547 = vmul.f32 %v3531, 0.99
    %v3548 = vmul.f32 %v3532, 0.99
    %v3549 = vmul.f32 %v3533, 0.99
    %v3550 = vmul.f32 %v3534, 0.99
    %v3551 = vmul.f32 %v3535, 0.99
    %v3552 = vmul.f32 %v3536, 0.99
    %v3553 = vmul.f32 %v3537, 0.99
    %v3554 = vmul.f32 %v3538, 0.99
    %v3555 = vmul.f32 %v3539, 0.99
    %v3556 = vmul.f32 %v3540, 0.99
    %v3557 = vmul.f32 %v3541, 0.99
    %v3558 = vmul.f32 %v3542, 0.99
    %v3559 = vmul.f32 %v3543, 0.99
    %v3560 = vmul.f32 %v3544, 0.99
    %v3561 = vmul.f32 %v3545, 0.99
    %v3562 = vmul.f32 %v3432, %v3432
    %v3563 = vmul.f32 %v3433, %v3433
    %v3564 = vmul.f32 %v3434, %v3434
    %v3565 = vmul.f32 %v3435, %v3435
    %v3566 = vmul.f32 %v3436, %v3436
    %v3567 = vmul.f32 %v3437, %v3437
    %v3568 = vmul.f32 %v3438, %v3438
    %v3569 = vmul.f32 %v3439, %v3439
    %v3570 = vmul.f32 %v3440, %v3440
    %v3571 = vmul.f32 %v3441, %v3441
    %v3572 = vmul.f32 %v3442, %v3442
    %v3573 = vmul.f32 %v3443, %v3443
    %v3574 = vmul.f32 %v3444, %v3444
    %v3575 = vmul.f32 %v3445, %v3445
    %v3576 = vmul.f32 %v3446, %v3446
    %v3577 = vmul.f32 %v3447, %v3447
    %v3578 = vmul.f32 %v3562, 0.01
    %v3579 = vmul.f32 %v3563, 0.01
    %v3580 = vmul.f32 %v3564, 0.01
    %v3581 = vmul.f32 %v3565, 0.01
    %v3582 = vmul.f32 %v3566, 0.01
    %v3583 = vmul.f32 %v3567, 0.01
    %v3584 = vmul.f32 %v3568, 0.01
    %v3585 = vmul.f32 %v3569, 0.01
    %v3586 = vmul.f32 %v3570, 0.01
    %v3587 = vmul.f32 %v3571, 0.01
    %v3588 = vmul.f32 %v3572, 0.01
    %v3589 = vmul.f32 %v3573, 0.01
    %v3590 = vmul.f32 %v3574, 0.01
    %v3591 = vmul.f32 %v3575, 0.01
    %v3592 = vmul.f32 %v3576, 0.01
    %v3593 = vmul.f32 %v3577, 0.01
    %v3594 = vadd.f32 %v3546, %v3578
    %v3595 = vadd.f32 %v3547, %v3579
    %v3596 = vadd.f32 %v3548, %v3580
    %v3597 = vadd.f32 %v3549, %v3581
    %v3598 = vadd.f32 %v3550, %v3582
    %v3599 = vadd.f32 %v3551, %v3583
    %v3600 = vadd.f32 %v3552, %v3584
    %v3601 = vadd.f32 %v3553, %v3585
    %v3602 = vadd.f32 %v3554, %v3586
    %v3603 = vadd.f32 %v3555, %v3587
    %v3604 = vadd.f32 %v3556, %v3588
    %v3605 = vadd.f32 %v3557, %v3589
    %v3606 = vadd.f32 %v3558, %v3590
    %v3607 = vadd.f32 %v3559, %v3591
    %v3608 = vadd.f32 %v3560, %v3592
    %v3609 = vadd.f32 %v3561, %v3593
    %v3610 = vstv %s3464
    %v3611 = vmul.f32 %v3514, %v3610
    %v3612 = vmul.f32 %v3515, %v3610
    %v3613 = vmul.f32 %v3516, %v3610
    %v3614 = vmul.f32 %v3517, %v3610
    %v3615 = vmul.f32 %v3518, %v3610
    %v3616 = vmul.f32 %v3519, %v3610
    %v3617 = vmul.f32 %v3520, %v3610
    %v3618 = vmul.f32 %v3521, %v3610
    %v3619 = vmul.f32 %v3522, %v3610
    %v3620 = vmul.f32 %v3523, %v3610
    %v3621 = vmul.f32 %v3524, %v3610
    %v3622 = vmul.f32 %v3525, %v3610
    %v3623 = vmul.f32 %v3526, %v3610
    %v3624 = vmul.f32 %v3527, %v3610
    %v3625 = vmul.f32 %v3528, %v3610
    %v3626 = vmul.f32 %v3529, %v3610
    %v3627 = vstv %s3465
    %v3628 = vmul.f32 %v3594, %v3627
    %v3629 = vmul.f32 %v3595, %v3627
    %v3630 = vmul.f32 %v3596, %v3627
    %v3631 = vmul.f32 %v3597, %v3627
    %v3632 = vmul.f32 %v3598, %v3627
    %v3633 = vmul.f32 %v3599, %v3627
    %v3634 = vmul.f32 %v3600, %v3627
    %v3635 = vmul.f32 %v3601, %v3627
    %v3636 = vmul.f32 %v3602, %v3627
    %v3637 = vmul.f32 %v3603, %v3627
    %v3638 = vmul.f32 %v3604, %v3627
    %v3639 = vmul.f32 %v3605, %v3627
    %v3640 = vmul.f32 %v3606, %v3627
    %v3641 = vmul.f32 %v3607, %v3627
    %v3642 = vmul.f32 %v3608, %v3627
    %v3643 = vmul.f32 %v3609, %v3627
    %v3644 = vrsqrt.pop %v3628
    %v3645 = vmul.f32 %v3628, %v3644
    %vm3646 = vcmp.eq.f32.partialorder %v3628, inf
    %v3647 = vsel %vm3646, %v3628, %v3645
    %vm3648 = vcmp.eq.f32.partialorder %v3628, 0.0
    %v3649 = vand.u32 %v3628, 2147483648
    %v3650 = vsel %vm3648, %v3649, %v3647
    %v3651 = vrsqrt.pop %v3629
    %v3652 = vmul.f32 %v3629, %v3651
    %vm3653 = vcmp.eq.f32.partialorder %v3629, inf
    %v3654 = vsel %vm3653, %v3629, %v3652
    %vm3655 = vcmp.eq.f32.partialorder %v3629, 0.0
    %v3656 = vand.u32 %v3629, 2147483648
    %v3657 = vsel %vm3655, %v3656, %v3654
    %v3658 = vrsqrt.pop %v3630
    %v3659 = vmul.f32 %v3630, %v3658
    %vm3660 = vcmp.eq.f32.partialorder %v3630, inf
    %v3661 = vsel %vm3660, %v3630, %v3659
    %vm3662 = vcmp.eq.f32.partialorder %v3630, 0.0
    %v3663 = vand.u32 %v3630, 2147483648
    %v3664 = vsel %vm3662, %v3663, %v3661
    %v3665 = vrsqrt.pop %v3631
    %v3666 = vmul.f32 %v3631, %v3665
    %vm3667 = vcmp.eq.f32.partialorder %v3631, inf
    %v3668 = vsel %vm3667, %v3631, %v3666
    %vm3669 = vcmp.eq.f32.partialorder %v3631, 0.0
    %v3670 = vand.u32 %v3631, 2147483648
    %v3671 = vsel %vm3669, %v3670, %v3668
    %v3672 = vrsqrt.pop %v3632
    %v3673 = vmul.f32 %v3632, %v3672
    %vm3674 = vcmp.eq.f32.partialorder %v3632, inf
    %v3675 = vsel %vm3674, %v3632, %v3673
    %vm3676 = vcmp.eq.f32.partialorder %v3632, 0.0
    %v3677 = vand.u32 %v3632, 2147483648
    %v3678 = vsel %vm3676, %v3677, %v3675
    %v3679 = vrsqrt.pop %v3633
    %v3680 = vmul.f32 %v3633, %v3679
    %vm3681 = vcmp.eq.f32.partialorder %v3633, inf
    %v3682 = vsel %vm3681, %v3633, %v3680
    %vm3683 = vcmp.eq.f32.partialorder %v3633, 0.0
    %v3684 = vand.u32 %v3633, 2147483648
    %v3685 = vsel %vm3683, %v3684, %v3682
    %v3686 = vrsqrt.pop %v3634
    %v3687 = vmul.f32 %v3634, %v3686
    %vm3688 = vcmp.eq.f32.partialorder %v3634, inf
    %v3689 = vsel %vm3688, %v3634, %v3687
    %vm3690 = vcmp.eq.f32.partialorder %v3634, 0.0
    %v3691 = vand.u32 %v3634, 2147483648
    %v3692 = vsel %vm3690, %v3691, %v3689
    %v3693 = vrsqrt.pop %v3635
    %v3694 = vmul.f32 %v3635, %v3693
    %vm3695 = vcmp.eq.f32.partialorder %v3635, inf
    %v3696 = vsel %vm3695, %v3635, %v3694
    %vm3697 = vcmp.eq.f32.partialorder %v3635, 0.0
    %v3698 = vand.u32 %v3635, 2147483648
    %v3699 = vsel %vm3697, %v3698, %v3696
    %v3700 = vrsqrt.pop %v3636
    %v3701 = vmul.f32 %v3636, %v3700
    %vm3702 = vcmp.eq.f32.partialorder %v3636, inf
    %v3703 = vsel %vm3702, %v3636, %v3701
    %vm3704 = vcmp.eq.f32.partialorder %v3636, 0.0
    %v3705 = vand.u32 %v3636, 2147483648
    %v3706 = vsel %vm3704, %v3705, %v3703
    %v3707 = vrsqrt.pop %v3637
    %v3708 = vmul.f32 %v3637, %v3707
    %vm3709 = vcmp.eq.f32.partialorder %v3637, inf
    %v3710 = vsel %vm3709, %v3637, %v3708
    %vm3711 = vcmp.eq.f32.partialorder %v3637, 0.0
    %v3712 = vand.u32 %v3637, 2147483648
    %v3713 = vsel %vm3711, %v3712, %v3710
    %v3714 = vrsqrt.pop %v3638
    %v3715 = vmul.f32 %v3638, %v3714
    %vm3716 = vcmp.eq.f32.partialorder %v3638, inf
    %v3717 = vsel %vm3716, %v3638, %v3715
    %vm3718 = vcmp.eq.f32.partialorder %v3638, 0.0
    %v3719 = vand.u32 %v3638, 2147483648
    %v3720 = vsel %vm3718, %v3719, %v3717
    %v3721 = vrsqrt.pop %v3639
    %v3722 = vmul.f32 %v3639, %v3721
    %vm3723 = vcmp.eq.f32.partialorder %v3639, inf
    %v3724 = vsel %vm3723, %v3639, %v3722
    %vm3725 = vcmp.eq.f32.partialorder %v3639, 0.0
    %v3726 = vand.u32 %v3639, 2147483648
    %v3727 = vsel %vm3725, %v3726, %v3724
    %v3728 = vrsqrt.pop %v3640
    %v3729 = vmul.f32 %v3640, %v3728
    %vm3730 = vcmp.eq.f32.partialorder %v3640, inf
    %v3731 = vsel %vm3730, %v3640, %v3729
    %vm3732 = vcmp.eq.f32.partialorder %v3640, 0.0
    %v3733 = vand.u32 %v3640, 2147483648
    %v3734 = vsel %vm3732, %v3733, %v3731
    %v3735 = vrsqrt.pop %v3641
    %v3736 = vmul.f32 %v3641, %v3735
    %vm3737 = vcmp.eq.f32.partialorder %v3641, inf
    %v3738 = vsel %vm3737, %v3641, %v3736
    %vm3739 = vcmp.eq.f32.partialorder %v3641, 0.0
    %v3740 = vand.u32 %v3641, 2147483648
    %v3741 = vsel %vm3739, %v3740, %v3738
    %v3742 = vrsqrt.pop %v3642
    %v3743 = vmul.f32 %v3642, %v3742
    %vm3744 = vcmp.eq.f32.partialorder %v3642, inf
    %v3745 = vsel %vm3744, %v3642, %v3743
    %vm3746 = vcmp.eq.f32.partialorder %v3642, 0.0
    %v3747 = vand.u32 %v3642, 2147483648
    %v3748 = vsel %vm3746, %v3747, %v3745
    %v3749 = vrsqrt.pop %v3643
    %v3750 = vmul.f32 %v3643, %v3749
    %vm3751 = vcmp.eq.f32.partialorder %v3643, inf
    %v3752 = vsel %vm3751, %v3643, %v3750
    %vm3753 = vcmp.eq.f32.partialorder %v3643, 0.0
    %v3754 = vand.u32 %v3643, 2147483648
    %v3755 = vsel %vm3753, %v3754, %v3752
    %v3756 = vadd.f32 %v3650, 1e-08
    %v3757 = vadd.f32 %v3657, 1e-08
    %v3758 = vadd.f32 %v3664, 1e-08
    %v3759 = vadd.f32 %v3671, 1e-08
    %v3760 = vadd.f32 %v3678, 1e-08
    %v3761 = vadd.f32 %v3685, 1e-08
    %v3762 = vadd.f32 %v3692, 1e-08
    %v3763 = vadd.f32 %v3699, 1e-08
    %v3764 = vadd.f32 %v3706, 1e-08
    %v3765 = vadd.f32 %v3713, 1e-08
    %v3766 = vadd.f32 %v3720, 1e-08
    %v3767 = vadd.f32 %v3727, 1e-08
    %v3768 = vadd.f32 %v3734, 1e-08
    %v3769 = vadd.f32 %v3741, 1e-08
    %v3770 = vadd.f32 %v3748, 1e-08
    %v3771 = vadd.f32 %v3755, 1e-08
    %v3772 = vld [vmem:[%s3] sm:$0xff]
    %v3773 = vld [vmem:[%s3 + $0x8] sm:$0xff]
    %v3774 = vld [vmem:[%s3 + $0x10] sm:$0xff]
    %v3775 = vld [vmem:[%s3 + $0x18] sm:$0xff]
    %v3776 = vld [vmem:[%s3 + $0x20] sm:$0xff]
    %v3777 = vld [vmem:[%s3 + $0x28] sm:$0xff]
    %v3778 = vld [vmem:[%s3 + $0x30] sm:$0xff]
    %v3779 = vld [vmem:[%s3 + $0x38] sm:$0xff]
    %v3780 = vld [vmem:[%s3 + $0x40] sm:$0xff]
    %v3781 = vld [vmem:[%s3 + $0x48] sm:$0xff]
    %v3782 = vld [vmem:[%s3 + $0x50] sm:$0xff]
    %v3783 = vld [vmem:[%s3 + $0x58] sm:$0xff]
    %v3784 = vld [vmem:[%s3 + $0x60] sm:$0xff]
    %v3785 = vld [vmem:[%s3 + $0x68] sm:$0xff]
    %v3786 = vld [vmem:[%s3 + $0x70] sm:$0xff]
    %v3787 = vld [vmem:[%s3 + $0x78] sm:$0xff]
    %v3788 = vmul.f32 %v3611, 0.0001
    %v3789 = vmul.f32 %v3612, 0.0001
    %v3790 = vmul.f32 %v3613, 0.0001
    %v3791 = vmul.f32 %v3614, 0.0001
    %v3792 = vmul.f32 %v3615, 0.0001
    %v3793 = vmul.f32 %v3616, 0.0001
    %v3794 = vmul.f32 %v3617, 0.0001
    %v3795 = vmul.f32 %v3618, 0.0001
    %v3796 = vmul.f32 %v3619, 0.0001
    %v3797 = vmul.f32 %v3620, 0.0001
    %v3798 = vmul.f32 %v3621, 0.0001
    %v3799 = vmul.f32 %v3622, 0.0001
    %v3800 = vmul.f32 %v3623, 0.0001
    %v3801 = vmul.f32 %v3624, 0.0001
    %v3802 = vmul.f32 %v3625, 0.0001
    %v3803 = vmul.f32 %v3626, 0.0001
    %v3804 = vrcp.pop %v3756
    %v3805 = vrcp.pop %v3757
    %v3806 = vrcp.pop %v3758
    %v3807 = vrcp.pop %v3759
    %v3808 = vrcp.pop %v3760
    %v3809 = vrcp.pop %v3761
    %v3810 = vrcp.pop %v3762
    %v3811 = vrcp.pop %v3763
    %v3812 = vrcp.pop %v3764
    %v3813 = vrcp.pop %v3765
    %v3814 = vrcp.pop %v3766
    %v3815 = vrcp.pop %v3767
    %v3816 = vrcp.pop %v3768
    %v3817 = vrcp.pop %v3769
    %v3818 = vrcp.pop %v3770
    %v3819 = vrcp.pop %v3771
    %v3820 = vmul.f32 %v3788, %v3804
    %v3821 = vmul.f32 %v3789, %v3805
    %v3822 = vmul.f32 %v3790, %v3806
    %v3823 = vmul.f32 %v3791, %v3807
    %v3824 = vmul.f32 %v3792, %v3808
    %v3825 = vmul.f32 %v3793, %v3809
    %v3826 = vmul.f32 %v3794, %v3810
    %v3827 = vmul.f32 %v3795, %v3811
    %v3828 = vmul.f32 %v3796, %v3812
    %v3829 = vmul.f32 %v3797, %v3813
    %v3830 = vmul.f32 %v3798, %v3814
    %v3831 = vmul.f32 %v3799, %v3815
    %v3832 = vmul.f32 %v3800, %v3816
    %v3833 = vmul.f32 %v3801, %v3817
    %v3834 = vmul.f32 %v3802, %v3818
    %v3835 = vmul.f32 %v3803, %v3819
    %v3836 = vsub.f32 %v3772, %v3820
    %v3837 = vsub.f32 %v3773, %v3821
    %v3838 = vsub.f32 %v3774, %v3822
    %v3839 = vsub.f32 %v3775, %v3823
    %v3840 = vsub.f32 %v3776, %v3824
    %v3841 = vsub.f32 %v3777, %v3825
    %v3842 = vsub.f32 %v3778, %v3826
    %v3843 = vsub.f32 %v3779, %v3827
    %v3844 = vsub.f32 %v3780, %v3828
    %v3845 = vsub.f32 %v3781, %v3829
    %v3846 = vsub.f32 %v3782, %v3830
    %v3847 = vsub.f32 %v3783, %v3831
    %v3848 = vsub.f32 %v3784, %v3832
    %v3849 = vsub.f32 %v3785, %v3833
    %v3850 = vsub.f32 %v3786, %v3834
    %v3851 = vsub.f32 %v3787, %v3835
    %3852 = vst [vmem:[%s8] sm:$0xff] %v3836
    %3853 = vst [vmem:[%s8 + $0x8] sm:$0xff] %v3837
    %3854 = vst [vmem:[%s8 + $0x10] sm:$0xff] %v3838
    %3855 = vst [vmem:[%s8 + $0x18] sm:$0xff] %v3839
    %3856 = vst [vmem:[%s8 + $0x20] sm:$0xff] %v3840
    %3857 = vst [vmem:[%s8 + $0x28] sm:$0xff] %v3841
    %3858 = vst [vmem:[%s8 + $0x30] sm:$0xff] %v3842
    %3859 = vst [vmem:[%s8 + $0x38] sm:$0xff] %v3843
    %3860 = vst [vmem:[%s8 + $0x40] sm:$0xff] %v3844
    %3861 = vst [vmem:[%s8 + $0x48] sm:$0xff] %v3845
    %3862 = vst [vmem:[%s8 + $0x50] sm:$0xff] %v3846
    %3863 = vst [vmem:[%s8 + $0x58] sm:$0xff] %v3847
    %3864 = vst [vmem:[%s8 + $0x60] sm:$0xff] %v3848
    %3865 = vst [vmem:[%s8 + $0x68] sm:$0xff] %v3849
    %3866 = vst [vmem:[%s8 + $0x70] sm:$0xff] %v3850
    %3867 = vst [vmem:[%s8 + $0x78] sm:$0xff] %v3851
    %3868 = vst [vmem:[%s9] sm:$0xff] %v3514
    %3869 = vst [vmem:[%s9 + $0x8] sm:$0xff] %v3515
    %3870 = vst [vmem:[%s9 + $0x10] sm:$0xff] %v3516
    %3871 = vst [vmem:[%s9 + $0x18] sm:$0xff] %v3517
    %3872 = vst [vmem:[%s9 + $0x20] sm:$0xff] %v3518
    %3873 = vst [vmem:[%s9 + $0x28] sm:$0xff] %v3519
    %3874 = vst [vmem:[%s9 + $0x30] sm:$0xff] %v3520
    %3875 = vst [vmem:[%s9 + $0x38] sm:$0xff] %v3521
    %3876 = vst [vmem:[%s9 + $0x40] sm:$0xff] %v3522
    %3877 = vst [vmem:[%s9 + $0x48] sm:$0xff] %v3523
    %3878 = vst [vmem:[%s9 + $0x50] sm:$0xff] %v3524
    %3879 = vst [vmem:[%s9 + $0x58] sm:$0xff] %v3525
    %3880 = vst [vmem:[%s9 + $0x60] sm:$0xff] %v3526
    %3881 = vst [vmem:[%s9 + $0x68] sm:$0xff] %v3527
    %3882 = vst [vmem:[%s9 + $0x70] sm:$0xff] %v3528
    %3883 = vst [vmem:[%s9 + $0x78] sm:$0xff] %v3529
    %3884 = vst [vmem:[%s10] sm:$0xff] %v3594
    %3885 = vst [vmem:[%s10 + $0x8] sm:$0xff] %v3595
    %3886 = vst [vmem:[%s10 + $0x10] sm:$0xff] %v3596
    %3887 = vst [vmem:[%s10 + $0x18] sm:$0xff] %v3597
    %3888 = vst [vmem:[%s10 + $0x20] sm:$0xff] %v3598
    %3889 = vst [vmem:[%s10 + $0x28] sm:$0xff] %v3599
    %3890 = vst [vmem:[%s10 + $0x30] sm:$0xff] %v3600
    %3891 = vst [vmem:[%s10 + $0x38] sm:$0xff] %v3601
    %3892 = vst [vmem:[%s10 + $0x40] sm:$0xff] %v3602
    %3893 = vst [vmem:[%s10 + $0x48] sm:$0xff] %v3603
    %3894 = vst [vmem:[%s10 + $0x50] sm:$0xff] %v3604
    %3895 = vst [vmem:[%s10 + $0x58] sm:$0xff] %v3605
    %3896 = vst [vmem:[%s10 + $0x60] sm:$0xff] %v3606
    %3897 = vst [vmem:[%s10 + $0x68] sm:$0xff] %v3607
    %3898 = vst [vmem:[%s10 + $0x70] sm:$0xff] %v3608
    %3899 = vst [vmem:[%s10 + $0x78] sm:$0xff] %v3609
    %s3900 = scalar_lea.vmem %s4, 128
    %v3901 = vld [vmem:[%s3900] sm:$0xff]
    %v3902 = vld [vmem:[%s3900 + $0x8] sm:$0xff]
    %v3903 = vld [vmem:[%s3900 + $0x10] sm:$0xff]
    %v3904 = vld [vmem:[%s3900 + $0x18] sm:$0xff]
    %v3905 = vld [vmem:[%s3900 + $0x20] sm:$0xff]
    %v3906 = vld [vmem:[%s3900 + $0x28] sm:$0xff]
    %v3907 = vld [vmem:[%s3900 + $0x30] sm:$0xff]
    %v3908 = vld [vmem:[%s3900 + $0x38] sm:$0xff]
    %v3909 = vld [vmem:[%s3900 + $0x40] sm:$0xff]
    %v3910 = vld [vmem:[%s3900 + $0x48] sm:$0xff]
    %v3911 = vld [vmem:[%s3900 + $0x50] sm:$0xff]
    %v3912 = vld [vmem:[%s3900 + $0x58] sm:$0xff]
    %v3913 = vld [vmem:[%s3900 + $0x60] sm:$0xff]
    %v3914 = vld [vmem:[%s3900 + $0x68] sm:$0xff]
    %v3915 = vld [vmem:[%s3900 + $0x70] sm:$0xff]
    %v3916 = vld [vmem:[%s3900 + $0x78] sm:$0xff]
    %v3917 = vmul.f32 %v3901, 0.9
    %v3918 = vmul.f32 %v3902, 0.9
    %v3919 = vmul.f32 %v3903, 0.9
    %v3920 = vmul.f32 %v3904, 0.9
    %v3921 = vmul.f32 %v3905, 0.9
    %v3922 = vmul.f32 %v3906, 0.9
    %v3923 = vmul.f32 %v3907, 0.9
    %v3924 = vmul.f32 %v3908, 0.9
    %v3925 = vmul.f32 %v3909, 0.9
    %v3926 = vmul.f32 %v3910, 0.9
    %v3927 = vmul.f32 %v3911, 0.9
    %v3928 = vmul.f32 %v3912, 0.9
    %v3929 = vmul.f32 %v3913, 0.9
    %v3930 = vmul.f32 %v3914, 0.9
    %v3931 = vmul.f32 %v3915, 0.9
    %v3932 = vmul.f32 %v3916, 0.9
    %v3933 = vmul.f32 %v2133, 0.1
    %v3934 = vmul.f32 %v2134, 0.1
    %v3935 = vmul.f32 %v2135, 0.1
    %v3936 = vmul.f32 %v2136, 0.1
    %v3937 = vmul.f32 %v2137, 0.1
    %v3938 = vmul.f32 %v2138, 0.1
    %v3939 = vmul.f32 %v2139, 0.1
    %v3940 = vmul.f32 %v2140, 0.1
    %v3941 = vmul.f32 %v2141, 0.1
    %v3942 = vmul.f32 %v2142, 0.1
    %v3943 = vmul.f32 %v2143, 0.1
    %v3944 = vmul.f32 %v2144, 0.1
    %v3945 = vmul.f32 %v2145, 0.1
    %v3946 = vmul.f32 %v2146, 0.1
    %v3947 = vmul.f32 %v2147, 0.1
    %v3948 = vmul.f32 %v2148, 0.1
    %v3949 = vadd.f32 %v3917, %v3933
    %v3950 = vadd.f32 %v3918, %v3934
    %v3951 = vadd.f32 %v3919, %v3935
    %v3952 = vadd.f32 %v3920, %v3936
    %v3953 = vadd.f32 %v3921, %v3937
    %v3954 = vadd.f32 %v3922, %v3938
    %v3955 = vadd.f32 %v3923, %v3939
    %v3956 = vadd.f32 %v3924, %v3940
    %v3957 = vadd.f32 %v3925, %v3941
    %v3958 = vadd.f32 %v3926, %v3942
    %v3959 = vadd.f32 %v3927, %v3943
    %v3960 = vadd.f32 %v3928, %v3944
    %v3961 = vadd.f32 %v3929, %v3945
    %v3962 = vadd.f32 %v3930, %v3946
    %v3963 = vadd.f32 %v3931, %v3947
    %v3964 = vadd.f32 %v3932, %v3948
    %s3965 = scalar_lea.vmem %s5, 128
    %v3966 = vld [vmem:[%s3965] sm:$0xff]
    %v3967 = vld [vmem:[%s3965 + $0x8] sm:$0xff]
    %v3968 = vld [vmem:[%s3965 + $0x10] sm:$0xff]
    %v3969 = vld [vmem:[%s3965 + $0x18] sm:$0xff]
    %v3970 = vld [vmem:[%s3965 + $0x20] sm:$0xff]
    %v3971 = vld [vmem:[%s3965 + $0x28] sm:$0xff]
    %v3972 = vld [vmem:[%s3965 + $0x30] sm:$0xff]
    %v3973 = vld [vmem:[%s3965 + $0x38] sm:$0xff]
    %v3974 = vld [vmem:[%s3965 + $0x40] sm:$0xff]
    %v3975 = vld [vmem:[%s3965 + $0x48] sm:$0xff]
    %v3976 = vld [vmem:[%s3965 + $0x50] sm:$0xff]
    %v3977 = vld [vmem:[%s3965 + $0x58] sm:$0xff]
    %v3978 = vld [vmem:[%s3965 + $0x60] sm:$0xff]
    %v3979 = vld [vmem:[%s3965 + $0x68] sm:$0xff]
    %v3980 = vld [vmem:[%s3965 + $0x70] sm:$0xff]
    %v3981 = vld [vmem:[%s3965 + $0x78] sm:$0xff]
    %v3982 = vmul.f32 %v3966, 0.99
    %v3983 = vmul.f32 %v3967, 0.99
    %v3984 = vmul.f32 %v3968, 0.99
    %v3985 = vmul.f32 %v3969, 0.99
    %v3986 = vmul.f32 %v3970, 0.99
    %v3987 = vmul.f32 %v3971, 0.99
    %v3988 = vmul.f32 %v3972, 0.99
    %v3989 = vmul.f32 %v3973, 0.99
    %v3990 = vmul.f32 %v3974, 0.99
    %v3991 = vmul.f32 %v3975, 0.99
    %v3992 = vmul.f32 %v3976, 0.99
    %v3993 = vmul.f32 %v3977, 0.99
    %v3994 = vmul.f32 %v3978, 0.99
    %v3995 = vmul.f32 %v3979, 0.99
    %v3996 = vmul.f32 %v3980, 0.99
    %v3997 = vmul.f32 %v3981, 0.99
    %v3998 = vmul.f32 %v2133, %v2133
    %v3999 = vmul.f32 %v2134, %v2134
    %v4000 = vmul.f32 %v2135, %v2135
    %v4001 = vmul.f32 %v2136, %v2136
    %v4002 = vmul.f32 %v2137, %v2137
    %v4003 = vmul.f32 %v2138, %v2138
    %v4004 = vmul.f32 %v2139, %v2139
    %v4005 = vmul.f32 %v2140, %v2140
    %v4006 = vmul.f32 %v2141, %v2141
    %v4007 = vmul.f32 %v2142, %v2142
    %v4008 = vmul.f32 %v2143, %v2143
    %v4009 = vmul.f32 %v2144, %v2144
    %v4010 = vmul.f32 %v2145, %v2145
    %v4011 = vmul.f32 %v2146, %v2146
    %v4012 = vmul.f32 %v2147, %v2147
    %v4013 = vmul.f32 %v2148, %v2148
    %v4014 = vmul.f32 %v3998, 0.01
    %v4015 = vmul.f32 %v3999, 0.01
    %v4016 = vmul.f32 %v4000, 0.01
    %v4017 = vmul.f32 %v4001, 0.01
    %v4018 = vmul.f32 %v4002, 0.01
    %v4019 = vmul.f32 %v4003, 0.01
    %v4020 = vmul.f32 %v4004, 0.01
    %v4021 = vmul.f32 %v4005, 0.01
    %v4022 = vmul.f32 %v4006, 0.01
    %v4023 = vmul.f32 %v4007, 0.01
    %v4024 = vmul.f32 %v4008, 0.01
    %v4025 = vmul.f32 %v4009, 0.01
    %v4026 = vmul.f32 %v4010, 0.01
    %v4027 = vmul.f32 %v4011, 0.01
    %v4028 = vmul.f32 %v4012, 0.01
    %v4029 = vmul.f32 %v4013, 0.01
    %v4030 = vadd.f32 %v3982, %v4014
    %v4031 = vadd.f32 %v3983, %v4015
    %v4032 = vadd.f32 %v3984, %v4016
    %v4033 = vadd.f32 %v3985, %v4017
    %v4034 = vadd.f32 %v3986, %v4018
    %v4035 = vadd.f32 %v3987, %v4019
    %v4036 = vadd.f32 %v3988, %v4020
    %v4037 = vadd.f32 %v3989, %v4021
    %v4038 = vadd.f32 %v3990, %v4022
    %v4039 = vadd.f32 %v3991, %v4023
    %v4040 = vadd.f32 %v3992, %v4024
    %v4041 = vadd.f32 %v3993, %v4025
    %v4042 = vadd.f32 %v3994, %v4026
    %v4043 = vadd.f32 %v3995, %v4027
    %v4044 = vadd.f32 %v3996, %v4028
    %v4045 = vadd.f32 %v3997, %v4029
    %v4046 = vmul.f32 %v3949, %v3610
    %v4047 = vmul.f32 %v3950, %v3610
    %v4048 = vmul.f32 %v3951, %v3610
    %v4049 = vmul.f32 %v3952, %v3610
    %v4050 = vmul.f32 %v3953, %v3610
    %v4051 = vmul.f32 %v3954, %v3610
    %v4052 = vmul.f32 %v3955, %v3610
    %v4053 = vmul.f32 %v3956, %v3610
    %v4054 = vmul.f32 %v3957, %v3610
    %v4055 = vmul.f32 %v3958, %v3610
    %v4056 = vmul.f32 %v3959, %v3610
    %v4057 = vmul.f32 %v3960, %v3610
    %v4058 = vmul.f32 %v3961, %v3610
    %v4059 = vmul.f32 %v3962, %v3610
    %v4060 = vmul.f32 %v3963, %v3610
    %v4061 = vmul.f32 %v3964, %v3610
    %v4062 = vmul.f32 %v4030, %v3627
    %v4063 = vmul.f32 %v4031, %v3627
    %v4064 = vmul.f32 %v4032, %v3627
    %v4065 = vmul.f32 %v4033, %v3627
    %v4066 = vmul.f32 %v4034, %v3627
    %v4067 = vmul.f32 %v4035, %v3627
    %v4068 = vmul.f32 %v4036, %v3627
    %v4069 = vmul.f32 %v4037, %v3627
    %v4070 = vmul.f32 %v4038, %v3627
    %v4071 = vmul.f32 %v4039, %v3627
    %v4072 = vmul.f32 %v4040, %v3627
    %v4073 = vmul.f32 %v4041, %v3627
    %v4074 = vmul.f32 %v4042, %v3627
    %v4075 = vmul.f32 %v4043, %v3627
    %v4076 = vmul.f32 %v4044, %v3627
    %v4077 = vmul.f32 %v4045, %v3627
    %v4078 = vrsqrt.pop %v4062
    %v4079 = vmul.f32 %v4062, %v4078
    %vm4080 = vcmp.eq.f32.partialorder %v4062, inf
    %v4081 = vsel %vm4080, %v4062, %v4079
    %vm4082 = vcmp.eq.f32.partialorder %v4062, 0.0
    %v4083 = vand.u32 %v4062, 2147483648
    %v4084 = vsel %vm4082, %v4083, %v4081
    %v4085 = vrsqrt.pop %v4063
    %v4086 = vmul.f32 %v4063, %v4085
    %vm4087 = vcmp.eq.f32.partialorder %v4063, inf
    %v4088 = vsel %vm4087, %v4063, %v4086
    %vm4089 = vcmp.eq.f32.partialorder %v4063, 0.0
    %v4090 = vand.u32 %v4063, 2147483648
    %v4091 = vsel %vm4089, %v4090, %v4088
    %v4092 = vrsqrt.pop %v4064
    %v4093 = vmul.f32 %v4064, %v4092
    %vm4094 = vcmp.eq.f32.partialorder %v4064, inf
    %v4095 = vsel %vm4094, %v4064, %v4093
    %vm4096 = vcmp.eq.f32.partialorder %v4064, 0.0
    %v4097 = vand.u32 %v4064, 2147483648
    %v4098 = vsel %vm4096, %v4097, %v4095
    %v4099 = vrsqrt.pop %v4065
    %v4100 = vmul.f32 %v4065, %v4099
    %vm4101 = vcmp.eq.f32.partialorder %v4065, inf
    %v4102 = vsel %vm4101, %v4065, %v4100
    %vm4103 = vcmp.eq.f32.partialorder %v4065, 0.0
    %v4104 = vand.u32 %v4065, 2147483648
    %v4105 = vsel %vm4103, %v4104, %v4102
    %v4106 = vrsqrt.pop %v4066
    %v4107 = vmul.f32 %v4066, %v4106
    %vm4108 = vcmp.eq.f32.partialorder %v4066, inf
    %v4109 = vsel %vm4108, %v4066, %v4107
    %vm4110 = vcmp.eq.f32.partialorder %v4066, 0.0
    %v4111 = vand.u32 %v4066, 2147483648
    %v4112 = vsel %vm4110, %v4111, %v4109
    %v4113 = vrsqrt.pop %v4067
    %v4114 = vmul.f32 %v4067, %v4113
    %vm4115 = vcmp.eq.f32.partialorder %v4067, inf
    %v4116 = vsel %vm4115, %v4067, %v4114
    %vm4117 = vcmp.eq.f32.partialorder %v4067, 0.0
    %v4118 = vand.u32 %v4067, 2147483648
    %v4119 = vsel %vm4117, %v4118, %v4116
    %v4120 = vrsqrt.pop %v4068
    %v4121 = vmul.f32 %v4068, %v4120
    %vm4122 = vcmp.eq.f32.partialorder %v4068, inf
    %v4123 = vsel %vm4122, %v4068, %v4121
    %vm4124 = vcmp.eq.f32.partialorder %v4068, 0.0
    %v4125 = vand.u32 %v4068, 2147483648
    %v4126 = vsel %vm4124, %v4125, %v4123
    %v4127 = vrsqrt.pop %v4069
    %v4128 = vmul.f32 %v4069, %v4127
    %vm4129 = vcmp.eq.f32.partialorder %v4069, inf
    %v4130 = vsel %vm4129, %v4069, %v4128
    %vm4131 = vcmp.eq.f32.partialorder %v4069, 0.0
    %v4132 = vand.u32 %v4069, 2147483648
    %v4133 = vsel %vm4131, %v4132, %v4130
    %v4134 = vrsqrt.pop %v4070
    %v4135 = vmul.f32 %v4070, %v4134
    %vm4136 = vcmp.eq.f32.partialorder %v4070, inf
    %v4137 = vsel %vm4136, %v4070, %v4135
    %vm4138 = vcmp.eq.f32.partialorder %v4070, 0.0
    %v4139 = vand.u32 %v4070, 2147483648
    %v4140 = vsel %vm4138, %v4139, %v4137
    %v4141 = vrsqrt.pop %v4071
    %v4142 = vmul.f32 %v4071, %v4141
    %vm4143 = vcmp.eq.f32.partialorder %v4071, inf
    %v4144 = vsel %vm4143, %v4071, %v4142
    %vm4145 = vcmp.eq.f32.partialorder %v4071, 0.0
    %v4146 = vand.u32 %v4071, 2147483648
    %v4147 = vsel %vm4145, %v4146, %v4144
    %v4148 = vrsqrt.pop %v4072
    %v4149 = vmul.f32 %v4072, %v4148
    %vm4150 = vcmp.eq.f32.partialorder %v4072, inf
    %v4151 = vsel %vm4150, %v4072, %v4149
    %vm4152 = vcmp.eq.f32.partialorder %v4072, 0.0
    %v4153 = vand.u32 %v4072, 2147483648
    %v4154 = vsel %vm4152, %v4153, %v4151
    %v4155 = vrsqrt.pop %v4073
    %v4156 = vmul.f32 %v4073, %v4155
    %vm4157 = vcmp.eq.f32.partialorder %v4073, inf
    %v4158 = vsel %vm4157, %v4073, %v4156
    %vm4159 = vcmp.eq.f32.partialorder %v4073, 0.0
    %v4160 = vand.u32 %v4073, 2147483648
    %v4161 = vsel %vm4159, %v4160, %v4158
    %v4162 = vrsqrt.pop %v4074
    %v4163 = vmul.f32 %v4074, %v4162
    %vm4164 = vcmp.eq.f32.partialorder %v4074, inf
    %v4165 = vsel %vm4164, %v4074, %v4163
    %vm4166 = vcmp.eq.f32.partialorder %v4074, 0.0
    %v4167 = vand.u32 %v4074, 2147483648
    %v4168 = vsel %vm4166, %v4167, %v4165
    %v4169 = vrsqrt.pop %v4075
    %v4170 = vmul.f32 %v4075, %v4169
    %vm4171 = vcmp.eq.f32.partialorder %v4075, inf
    %v4172 = vsel %vm4171, %v4075, %v4170
    %vm4173 = vcmp.eq.f32.partialorder %v4075, 0.0
    %v4174 = vand.u32 %v4075, 2147483648
    %v4175 = vsel %vm4173, %v4174, %v4172
    %v4176 = vrsqrt.pop %v4076
    %v4177 = vmul.f32 %v4076, %v4176
    %vm4178 = vcmp.eq.f32.partialorder %v4076, inf
    %v4179 = vsel %vm4178, %v4076, %v4177
    %vm4180 = vcmp.eq.f32.partialorder %v4076, 0.0
    %v4181 = vand.u32 %v4076, 2147483648
    %v4182 = vsel %vm4180, %v4181, %v4179
    %v4183 = vrsqrt.pop %v4077
    %v4184 = vmul.f32 %v4077, %v4183
    %vm4185 = vcmp.eq.f32.partialorder %v4077, inf
    %v4186 = vsel %vm4185, %v4077, %v4184
    %vm4187 = vcmp.eq.f32.partialorder %v4077, 0.0
    %v4188 = vand.u32 %v4077, 2147483648
    %v4189 = vsel %vm4187, %v4188, %v4186
    %v4190 = vadd.f32 %v4084, 1e-08
    %v4191 = vadd.f32 %v4091, 1e-08
    %v4192 = vadd.f32 %v4098, 1e-08
    %v4193 = vadd.f32 %v4105, 1e-08
    %v4194 = vadd.f32 %v4112, 1e-08
    %v4195 = vadd.f32 %v4119, 1e-08
    %v4196 = vadd.f32 %v4126, 1e-08
    %v4197 = vadd.f32 %v4133, 1e-08
    %v4198 = vadd.f32 %v4140, 1e-08
    %v4199 = vadd.f32 %v4147, 1e-08
    %v4200 = vadd.f32 %v4154, 1e-08
    %v4201 = vadd.f32 %v4161, 1e-08
    %v4202 = vadd.f32 %v4168, 1e-08
    %v4203 = vadd.f32 %v4175, 1e-08
    %v4204 = vadd.f32 %v4182, 1e-08
    %v4205 = vadd.f32 %v4189, 1e-08
    %v4206 = vld [vmem:[%s684] sm:$0xff]
    %v4207 = vld [vmem:[%s684 + $0x8] sm:$0xff]
    %v4208 = vld [vmem:[%s684 + $0x10] sm:$0xff]
    %v4209 = vld [vmem:[%s684 + $0x18] sm:$0xff]
    %v4210 = vld [vmem:[%s684 + $0x20] sm:$0xff]
    %v4211 = vld [vmem:[%s684 + $0x28] sm:$0xff]
    %v4212 = vld [vmem:[%s684 + $0x30] sm:$0xff]
    %v4213 = vld [vmem:[%s684 + $0x38] sm:$0xff]
    %v4214 = vld [vmem:[%s684 + $0x40] sm:$0xff]
    %v4215 = vld [vmem:[%s684 + $0x48] sm:$0xff]
    %v4216 = vld [vmem:[%s684 + $0x50] sm:$0xff]
    %v4217 = vld [vmem:[%s684 + $0x58] sm:$0xff]
    %v4218 = vld [vmem:[%s684 + $0x60] sm:$0xff]
    %v4219 = vld [vmem:[%s684 + $0x68] sm:$0xff]
    %v4220 = vld [vmem:[%s684 + $0x70] sm:$0xff]
    %v4221 = vld [vmem:[%s684 + $0x78] sm:$0xff]
    %v4222 = vmul.f32 %v4046, 0.0001
    %v4223 = vmul.f32 %v4047, 0.0001
    %v4224 = vmul.f32 %v4048, 0.0001
    %v4225 = vmul.f32 %v4049, 0.0001
    %v4226 = vmul.f32 %v4050, 0.0001
    %v4227 = vmul.f32 %v4051, 0.0001
    %v4228 = vmul.f32 %v4052, 0.0001
    %v4229 = vmul.f32 %v4053, 0.0001
    %v4230 = vmul.f32 %v4054, 0.0001
    %v4231 = vmul.f32 %v4055, 0.0001
    %v4232 = vmul.f32 %v4056, 0.0001
    %v4233 = vmul.f32 %v4057, 0.0001
    %v4234 = vmul.f32 %v4058, 0.0001
    %v4235 = vmul.f32 %v4059, 0.0001
    %v4236 = vmul.f32 %v4060, 0.0001
    %v4237 = vmul.f32 %v4061, 0.0001
    %v4238 = vrcp.pop %v4190
    %v4239 = vrcp.pop %v4191
    %v4240 = vrcp.pop %v4192
    %v4241 = vrcp.pop %v4193
    %v4242 = vrcp.pop %v4194
    %v4243 = vrcp.pop %v4195
    %v4244 = vrcp.pop %v4196
    %v4245 = vrcp.pop %v4197
    %v4246 = vrcp.pop %v4198
    %v4247 = vrcp.pop %v4199
    %v4248 = vrcp.pop %v4200
    %v4249 = vrcp.pop %v4201
    %v4250 = vrcp.pop %v4202
    %v4251 = vrcp.pop %v4203
    %v4252 = vrcp.pop %v4204
    %v4253 = vrcp.pop %v4205
    %v4254 = vmul.f32 %v4222, %v4238
    %v4255 = vmul.f32 %v4223, %v4239
    %v4256 = vmul.f32 %v4224, %v4240
    %v4257 = vmul.f32 %v4225, %v4241
    %v4258 = vmul.f32 %v4226, %v4242
    %v4259 = vmul.f32 %v4227, %v4243
    %v4260 = vmul.f32 %v4228, %v4244
    %v4261 = vmul.f32 %v4229, %v4245
    %v4262 = vmul.f32 %v4230, %v4246
    %v4263 = vmul.f32 %v4231, %v4247
    %v4264 = vmul.f32 %v4232, %v4248
    %v4265 = vmul.f32 %v4233, %v4249
    %v4266 = vmul.f32 %v4234, %v4250
    %v4267 = vmul.f32 %v4235, %v4251
    %v4268 = vmul.f32 %v4236, %v4252
    %v4269 = vmul.f32 %v4237, %v4253
    %v4270 = vsub.f32 %v4206, %v4254
    %v4271 = vsub.f32 %v4207, %v4255
    %v4272 = vsub.f32 %v4208, %v4256
    %v4273 = vsub.f32 %v4209, %v4257
    %v4274 = vsub.f32 %v4210, %v4258
    %v4275 = vsub.f32 %v4211, %v4259
    %v4276 = vsub.f32 %v4212, %v4260
    %v4277 = vsub.f32 %v4213, %v4261
    %v4278 = vsub.f32 %v4214, %v4262
    %v4279 = vsub.f32 %v4215, %v4263
    %v4280 = vsub.f32 %v4216, %v4264
    %v4281 = vsub.f32 %v4217, %v4265
    %v4282 = vsub.f32 %v4218, %v4266
    %v4283 = vsub.f32 %v4219, %v4267
    %v4284 = vsub.f32 %v4220, %v4268
    %v4285 = vsub.f32 %v4221, %v4269
    %s4286 = scalar_lea.vmem %s8, 128
    %4287 = vst [vmem:[%s4286] sm:$0xff] %v4270
    %4288 = vst [vmem:[%s4286 + $0x8] sm:$0xff] %v4271
    %4289 = vst [vmem:[%s4286 + $0x10] sm:$0xff] %v4272
    %4290 = vst [vmem:[%s4286 + $0x18] sm:$0xff] %v4273
    %4291 = vst [vmem:[%s4286 + $0x20] sm:$0xff] %v4274
    %4292 = vst [vmem:[%s4286 + $0x28] sm:$0xff] %v4275
    %4293 = vst [vmem:[%s4286 + $0x30] sm:$0xff] %v4276
    %4294 = vst [vmem:[%s4286 + $0x38] sm:$0xff] %v4277
    %4295 = vst [vmem:[%s4286 + $0x40] sm:$0xff] %v4278
    %4296 = vst [vmem:[%s4286 + $0x48] sm:$0xff] %v4279
    %4297 = vst [vmem:[%s4286 + $0x50] sm:$0xff] %v4280
    %4298 = vst [vmem:[%s4286 + $0x58] sm:$0xff] %v4281
    %4299 = vst [vmem:[%s4286 + $0x60] sm:$0xff] %v4282
    %4300 = vst [vmem:[%s4286 + $0x68] sm:$0xff] %v4283
    %4301 = vst [vmem:[%s4286 + $0x70] sm:$0xff] %v4284
    %4302 = vst [vmem:[%s4286 + $0x78] sm:$0xff] %v4285
    %s4303 = scalar_lea.vmem %s9, 128
    %4304 = vst [vmem:[%s4303] sm:$0xff] %v3949
    %4305 = vst [vmem:[%s4303 + $0x8] sm:$0xff] %v3950
    %4306 = vst [vmem:[%s4303 + $0x10] sm:$0xff] %v3951
    %4307 = vst [vmem:[%s4303 + $0x18] sm:$0xff] %v3952
    %4308 = vst [vmem:[%s4303 + $0x20] sm:$0xff] %v3953
    %4309 = vst [vmem:[%s4303 + $0x28] sm:$0xff] %v3954
    %4310 = vst [vmem:[%s4303 + $0x30] sm:$0xff] %v3955
    %4311 = vst [vmem:[%s4303 + $0x38] sm:$0xff] %v3956
    %4312 = vst [vmem:[%s4303 + $0x40] sm:$0xff] %v3957
    %4313 = vst [vmem:[%s4303 + $0x48] sm:$0xff] %v3958
    %4314 = vst [vmem:[%s4303 + $0x50] sm:$0xff] %v3959
    %4315 = vst [vmem:[%s4303 + $0x58] sm:$0xff] %v3960
    %4316 = vst [vmem:[%s4303 + $0x60] sm:$0xff] %v3961
    %4317 = vst [vmem:[%s4303 + $0x68] sm:$0xff] %v3962
    %4318 = vst [vmem:[%s4303 + $0x70] sm:$0xff] %v3963
    %4319 = vst [vmem:[%s4303 + $0x78] sm:$0xff] %v3964
    %s4320 = scalar_lea.vmem %s10, 128
    %4321 = vst [vmem:[%s4320] sm:$0xff] %v4030
    %4322 = vst [vmem:[%s4320 + $0x8] sm:$0xff] %v4031
    %4323 = vst [vmem:[%s4320 + $0x10] sm:$0xff] %v4032
    %4324 = vst [vmem:[%s4320 + $0x18] sm:$0xff] %v4033
    %4325 = vst [vmem:[%s4320 + $0x20] sm:$0xff] %v4034
    %4326 = vst [vmem:[%s4320 + $0x28] sm:$0xff] %v4035
    %4327 = vst [vmem:[%s4320 + $0x30] sm:$0xff] %v4036
    %4328 = vst [vmem:[%s4320 + $0x38] sm:$0xff] %v4037
    %4329 = vst [vmem:[%s4320 + $0x40] sm:$0xff] %v4038
    %4330 = vst [vmem:[%s4320 + $0x48] sm:$0xff] %v4039
    %4331 = vst [vmem:[%s4320 + $0x50] sm:$0xff] %v4040
    %4332 = vst [vmem:[%s4320 + $0x58] sm:$0xff] %v4041
    %4333 = vst [vmem:[%s4320 + $0x60] sm:$0xff] %v4042
    %4334 = vst [vmem:[%s4320 + $0x68] sm:$0xff] %v4043
    %4335 = vst [vmem:[%s4320 + $0x70] sm:$0xff] %v4044
    %4336 = vst [vmem:[%s4320 + $0x78] sm:$0xff] %v4045
    %s4337 = scalar_lea.vmem %s4, 256
    %v4338 = vld [vmem:[%s4337] sm:$0xff]
    %v4339 = vld [vmem:[%s4337 + $0x8] sm:$0xff]
    %v4340 = vld [vmem:[%s4337 + $0x10] sm:$0xff]
    %v4341 = vld [vmem:[%s4337 + $0x18] sm:$0xff]
    %v4342 = vld [vmem:[%s4337 + $0x20] sm:$0xff]
    %v4343 = vld [vmem:[%s4337 + $0x28] sm:$0xff]
    %v4344 = vld [vmem:[%s4337 + $0x30] sm:$0xff]
    %v4345 = vld [vmem:[%s4337 + $0x38] sm:$0xff]
    %v4346 = vld [vmem:[%s4337 + $0x40] sm:$0xff]
    %v4347 = vld [vmem:[%s4337 + $0x48] sm:$0xff]
    %v4348 = vld [vmem:[%s4337 + $0x50] sm:$0xff]
    %v4349 = vld [vmem:[%s4337 + $0x58] sm:$0xff]
    %v4350 = vld [vmem:[%s4337 + $0x60] sm:$0xff]
    %v4351 = vld [vmem:[%s4337 + $0x68] sm:$0xff]
    %v4352 = vld [vmem:[%s4337 + $0x70] sm:$0xff]
    %v4353 = vld [vmem:[%s4337 + $0x78] sm:$0xff]
    %v4354 = vmul.f32 %v4338, 0.9
    %v4355 = vmul.f32 %v4339, 0.9
    %v4356 = vmul.f32 %v4340, 0.9
    %v4357 = vmul.f32 %v4341, 0.9
    %v4358 = vmul.f32 %v4342, 0.9
    %v4359 = vmul.f32 %v4343, 0.9
    %v4360 = vmul.f32 %v4344, 0.9
    %v4361 = vmul.f32 %v4345, 0.9
    %v4362 = vmul.f32 %v4346, 0.9
    %v4363 = vmul.f32 %v4347, 0.9
    %v4364 = vmul.f32 %v4348, 0.9
    %v4365 = vmul.f32 %v4349, 0.9
    %v4366 = vmul.f32 %v4350, 0.9
    %v4367 = vmul.f32 %v4351, 0.9
    %v4368 = vmul.f32 %v4352, 0.9
    %v4369 = vmul.f32 %v4353, 0.9
    %v4370 = vmul.f32 %v3448, 0.1
    %v4371 = vmul.f32 %v3449, 0.1
    %v4372 = vmul.f32 %v3450, 0.1
    %v4373 = vmul.f32 %v3451, 0.1
    %v4374 = vmul.f32 %v3452, 0.1
    %v4375 = vmul.f32 %v3453, 0.1
    %v4376 = vmul.f32 %v3454, 0.1
    %v4377 = vmul.f32 %v3455, 0.1
    %v4378 = vmul.f32 %v3456, 0.1
    %v4379 = vmul.f32 %v3457, 0.1
    %v4380 = vmul.f32 %v3458, 0.1
    %v4381 = vmul.f32 %v3459, 0.1
    %v4382 = vmul.f32 %v3460, 0.1
    %v4383 = vmul.f32 %v3461, 0.1
    %v4384 = vmul.f32 %v3462, 0.1
    %v4385 = vmul.f32 %v3463, 0.1
    %v4386 = vadd.f32 %v4354, %v4370
    %v4387 = vadd.f32 %v4355, %v4371
    %v4388 = vadd.f32 %v4356, %v4372
    %v4389 = vadd.f32 %v4357, %v4373
    %v4390 = vadd.f32 %v4358, %v4374
    %v4391 = vadd.f32 %v4359, %v4375
    %v4392 = vadd.f32 %v4360, %v4376
    %v4393 = vadd.f32 %v4361, %v4377
    %v4394 = vadd.f32 %v4362, %v4378
    %v4395 = vadd.f32 %v4363, %v4379
    %v4396 = vadd.f32 %v4364, %v4380
    %v4397 = vadd.f32 %v4365, %v4381
    %v4398 = vadd.f32 %v4366, %v4382
    %v4399 = vadd.f32 %v4367, %v4383
    %v4400 = vadd.f32 %v4368, %v4384
    %v4401 = vadd.f32 %v4369, %v4385
    %s4402 = scalar_lea.vmem %s5, 256
    %v4403 = vld [vmem:[%s4402] sm:$0xff]
    %v4404 = vld [vmem:[%s4402 + $0x8] sm:$0xff]
    %v4405 = vld [vmem:[%s4402 + $0x10] sm:$0xff]
    %v4406 = vld [vmem:[%s4402 + $0x18] sm:$0xff]
    %v4407 = vld [vmem:[%s4402 + $0x20] sm:$0xff]
    %v4408 = vld [vmem:[%s4402 + $0x28] sm:$0xff]
    %v4409 = vld [vmem:[%s4402 + $0x30] sm:$0xff]
    %v4410 = vld [vmem:[%s4402 + $0x38] sm:$0xff]
    %v4411 = vld [vmem:[%s4402 + $0x40] sm:$0xff]
    %v4412 = vld [vmem:[%s4402 + $0x48] sm:$0xff]
    %v4413 = vld [vmem:[%s4402 + $0x50] sm:$0xff]
    %v4414 = vld [vmem:[%s4402 + $0x58] sm:$0xff]
    %v4415 = vld [vmem:[%s4402 + $0x60] sm:$0xff]
    %v4416 = vld [vmem:[%s4402 + $0x68] sm:$0xff]
    %v4417 = vld [vmem:[%s4402 + $0x70] sm:$0xff]
    %v4418 = vld [vmem:[%s4402 + $0x78] sm:$0xff]
    %v4419 = vmul.f32 %v4403, 0.99
    %v4420 = vmul.f32 %v4404, 0.99
    %v4421 = vmul.f32 %v4405, 0.99
    %v4422 = vmul.f32 %v4406, 0.99
    %v4423 = vmul.f32 %v4407, 0.99
    %v4424 = vmul.f32 %v4408, 0.99
    %v4425 = vmul.f32 %v4409, 0.99
    %v4426 = vmul.f32 %v4410, 0.99
    %v4427 = vmul.f32 %v4411, 0.99
    %v4428 = vmul.f32 %v4412, 0.99
    %v4429 = vmul.f32 %v4413, 0.99
    %v4430 = vmul.f32 %v4414, 0.99
    %v4431 = vmul.f32 %v4415, 0.99
    %v4432 = vmul.f32 %v4416, 0.99
    %v4433 = vmul.f32 %v4417, 0.99
    %v4434 = vmul.f32 %v4418, 0.99
    %v4435 = vmul.f32 %v3448, %v3448
    %v4436 = vmul.f32 %v3449, %v3449
    %v4437 = vmul.f32 %v3450, %v3450
    %v4438 = vmul.f32 %v3451, %v3451
    %v4439 = vmul.f32 %v3452, %v3452
    %v4440 = vmul.f32 %v3453, %v3453
    %v4441 = vmul.f32 %v3454, %v3454
    %v4442 = vmul.f32 %v3455, %v3455
    %v4443 = vmul.f32 %v3456, %v3456
    %v4444 = vmul.f32 %v3457, %v3457
    %v4445 = vmul.f32 %v3458, %v3458
    %v4446 = vmul.f32 %v3459, %v3459
    %v4447 = vmul.f32 %v3460, %v3460
    %v4448 = vmul.f32 %v3461, %v3461
    %v4449 = vmul.f32 %v3462, %v3462
    %v4450 = vmul.f32 %v3463, %v3463
    %v4451 = vmul.f32 %v4435, 0.01
    %v4452 = vmul.f32 %v4436, 0.01
    %v4453 = vmul.f32 %v4437, 0.01
    %v4454 = vmul.f32 %v4438, 0.01
    %v4455 = vmul.f32 %v4439, 0.01
    %v4456 = vmul.f32 %v4440, 0.01
    %v4457 = vmul.f32 %v4441, 0.01
    %v4458 = vmul.f32 %v4442, 0.01
    %v4459 = vmul.f32 %v4443, 0.01
    %v4460 = vmul.f32 %v4444, 0.01
    %v4461 = vmul.f32 %v4445, 0.01
    %v4462 = vmul.f32 %v4446, 0.01
    %v4463 = vmul.f32 %v4447, 0.01
    %v4464 = vmul.f32 %v4448, 0.01
    %v4465 = vmul.f32 %v4449, 0.01
    %v4466 = vmul.f32 %v4450, 0.01
    %v4467 = vadd.f32 %v4419, %v4451
    %v4468 = vadd.f32 %v4420, %v4452
    %v4469 = vadd.f32 %v4421, %v4453
    %v4470 = vadd.f32 %v4422, %v4454
    %v4471 = vadd.f32 %v4423, %v4455
    %v4472 = vadd.f32 %v4424, %v4456
    %v4473 = vadd.f32 %v4425, %v4457
    %v4474 = vadd.f32 %v4426, %v4458
    %v4475 = vadd.f32 %v4427, %v4459
    %v4476 = vadd.f32 %v4428, %v4460
    %v4477 = vadd.f32 %v4429, %v4461
    %v4478 = vadd.f32 %v4430, %v4462
    %v4479 = vadd.f32 %v4431, %v4463
    %v4480 = vadd.f32 %v4432, %v4464
    %v4481 = vadd.f32 %v4433, %v4465
    %v4482 = vadd.f32 %v4434, %v4466
    %v4483 = vmul.f32 %v4386, %v3610
    %v4484 = vmul.f32 %v4387, %v3610
    %v4485 = vmul.f32 %v4388, %v3610
    %v4486 = vmul.f32 %v4389, %v3610
    %v4487 = vmul.f32 %v4390, %v3610
    %v4488 = vmul.f32 %v4391, %v3610
    %v4489 = vmul.f32 %v4392, %v3610
    %v4490 = vmul.f32 %v4393, %v3610
    %v4491 = vmul.f32 %v4394, %v3610
    %v4492 = vmul.f32 %v4395, %v3610
    %v4493 = vmul.f32 %v4396, %v3610
    %v4494 = vmul.f32 %v4397, %v3610
    %v4495 = vmul.f32 %v4398, %v3610
    %v4496 = vmul.f32 %v4399, %v3610
    %v4497 = vmul.f32 %v4400, %v3610
    %v4498 = vmul.f32 %v4401, %v3610
    %v4499 = vmul.f32 %v4467, %v3627
    %v4500 = vmul.f32 %v4468, %v3627
    %v4501 = vmul.f32 %v4469, %v3627
    %v4502 = vmul.f32 %v4470, %v3627
    %v4503 = vmul.f32 %v4471, %v3627
    %v4504 = vmul.f32 %v4472, %v3627
    %v4505 = vmul.f32 %v4473, %v3627
    %v4506 = vmul.f32 %v4474, %v3627
    %v4507 = vmul.f32 %v4475, %v3627
    %v4508 = vmul.f32 %v4476, %v3627
    %v4509 = vmul.f32 %v4477, %v3627
    %v4510 = vmul.f32 %v4478, %v3627
    %v4511 = vmul.f32 %v4479, %v3627
    %v4512 = vmul.f32 %v4480, %v3627
    %v4513 = vmul.f32 %v4481, %v3627
    %v4514 = vmul.f32 %v4482, %v3627
    %v4515 = vrsqrt.pop %v4499
    %v4516 = vmul.f32 %v4499, %v4515
    %vm4517 = vcmp.eq.f32.partialorder %v4499, inf
    %v4518 = vsel %vm4517, %v4499, %v4516
    %vm4519 = vcmp.eq.f32.partialorder %v4499, 0.0
    %v4520 = vand.u32 %v4499, 2147483648
    %v4521 = vsel %vm4519, %v4520, %v4518
    %v4522 = vrsqrt.pop %v4500
    %v4523 = vmul.f32 %v4500, %v4522
    %vm4524 = vcmp.eq.f32.partialorder %v4500, inf
    %v4525 = vsel %vm4524, %v4500, %v4523
    %vm4526 = vcmp.eq.f32.partialorder %v4500, 0.0
    %v4527 = vand.u32 %v4500, 2147483648
    %v4528 = vsel %vm4526, %v4527, %v4525
    %v4529 = vrsqrt.pop %v4501
    %v4530 = vmul.f32 %v4501, %v4529
    %vm4531 = vcmp.eq.f32.partialorder %v4501, inf
    %v4532 = vsel %vm4531, %v4501, %v4530
    %vm4533 = vcmp.eq.f32.partialorder %v4501, 0.0
    %v4534 = vand.u32 %v4501, 2147483648
    %v4535 = vsel %vm4533, %v4534, %v4532
    %v4536 = vrsqrt.pop %v4502
    %v4537 = vmul.f32 %v4502, %v4536
    %vm4538 = vcmp.eq.f32.partialorder %v4502, inf
    %v4539 = vsel %vm4538, %v4502, %v4537
    %vm4540 = vcmp.eq.f32.partialorder %v4502, 0.0
    %v4541 = vand.u32 %v4502, 2147483648
    %v4542 = vsel %vm4540, %v4541, %v4539
    %v4543 = vrsqrt.pop %v4503
    %v4544 = vmul.f32 %v4503, %v4543
    %vm4545 = vcmp.eq.f32.partialorder %v4503, inf
    %v4546 = vsel %vm4545, %v4503, %v4544
    %vm4547 = vcmp.eq.f32.partialorder %v4503, 0.0
    %v4548 = vand.u32 %v4503, 2147483648
    %v4549 = vsel %vm4547, %v4548, %v4546
    %v4550 = vrsqrt.pop %v4504
    %v4551 = vmul.f32 %v4504, %v4550
    %vm4552 = vcmp.eq.f32.partialorder %v4504, inf
    %v4553 = vsel %vm4552, %v4504, %v4551
    %vm4554 = vcmp.eq.f32.partialorder %v4504, 0.0
    %v4555 = vand.u32 %v4504, 2147483648
    %v4556 = vsel %vm4554, %v4555, %v4553
    %v4557 = vrsqrt.pop %v4505
    %v4558 = vmul.f32 %v4505, %v4557
    %vm4559 = vcmp.eq.f32.partialorder %v4505, inf
    %v4560 = vsel %vm4559, %v4505, %v4558
    %vm4561 = vcmp.eq.f32.partialorder %v4505, 0.0
    %v4562 = vand.u32 %v4505, 2147483648
    %v4563 = vsel %vm4561, %v4562, %v4560
    %v4564 = vrsqrt.pop %v4506
    %v4565 = vmul.f32 %v4506, %v4564
    %vm4566 = vcmp.eq.f32.partialorder %v4506, inf
    %v4567 = vsel %vm4566, %v4506, %v4565
    %vm4568 = vcmp.eq.f32.partialorder %v4506, 0.0
    %v4569 = vand.u32 %v4506, 2147483648
    %v4570 = vsel %vm4568, %v4569, %v4567
    %v4571 = vrsqrt.pop %v4507
    %v4572 = vmul.f32 %v4507, %v4571
    %vm4573 = vcmp.eq.f32.partialorder %v4507, inf
    %v4574 = vsel %vm4573, %v4507, %v4572
    %vm4575 = vcmp.eq.f32.partialorder %v4507, 0.0
    %v4576 = vand.u32 %v4507, 2147483648
    %v4577 = vsel %vm4575, %v4576, %v4574
    %v4578 = vrsqrt.pop %v4508
    %v4579 = vmul.f32 %v4508, %v4578
    %vm4580 = vcmp.eq.f32.partialorder %v4508, inf
    %v4581 = vsel %vm4580, %v4508, %v4579
    %vm4582 = vcmp.eq.f32.partialorder %v4508, 0.0
    %v4583 = vand.u32 %v4508, 2147483648
    %v4584 = vsel %vm4582, %v4583, %v4581
    %v4585 = vrsqrt.pop %v4509
    %v4586 = vmul.f32 %v4509, %v4585
    %vm4587 = vcmp.eq.f32.partialorder %v4509, inf
    %v4588 = vsel %vm4587, %v4509, %v4586
    %vm4589 = vcmp.eq.f32.partialorder %v4509, 0.0
    %v4590 = vand.u32 %v4509, 2147483648
    %v4591 = vsel %vm4589, %v4590, %v4588
    %v4592 = vrsqrt.pop %v4510
    %v4593 = vmul.f32 %v4510, %v4592
    %vm4594 = vcmp.eq.f32.partialorder %v4510, inf
    %v4595 = vsel %vm4594, %v4510, %v4593
    %vm4596 = vcmp.eq.f32.partialorder %v4510, 0.0
    %v4597 = vand.u32 %v4510, 2147483648
    %v4598 = vsel %vm4596, %v4597, %v4595
    %v4599 = vrsqrt.pop %v4511
    %v4600 = vmul.f32 %v4511, %v4599
    %vm4601 = vcmp.eq.f32.partialorder %v4511, inf
    %v4602 = vsel %vm4601, %v4511, %v4600
    %vm4603 = vcmp.eq.f32.partialorder %v4511, 0.0
    %v4604 = vand.u32 %v4511, 2147483648
    %v4605 = vsel %vm4603, %v4604, %v4602
    %v4606 = vrsqrt.pop %v4512
    %v4607 = vmul.f32 %v4512, %v4606
    %vm4608 = vcmp.eq.f32.partialorder %v4512, inf
    %v4609 = vsel %vm4608, %v4512, %v4607
    %vm4610 = vcmp.eq.f32.partialorder %v4512, 0.0
    %v4611 = vand.u32 %v4512, 2147483648
    %v4612 = vsel %vm4610, %v4611, %v4609
    %v4613 = vrsqrt.pop %v4513
    %v4614 = vmul.f32 %v4513, %v4613
    %vm4615 = vcmp.eq.f32.partialorder %v4513, inf
    %v4616 = vsel %vm4615, %v4513, %v4614
    %vm4617 = vcmp.eq.f32.partialorder %v4513, 0.0
    %v4618 = vand.u32 %v4513, 2147483648
    %v4619 = vsel %vm4617, %v4618, %v4616
    %v4620 = vrsqrt.pop %v4514
    %v4621 = vmul.f32 %v4514, %v4620
    %vm4622 = vcmp.eq.f32.partialorder %v4514, inf
    %v4623 = vsel %vm4622, %v4514, %v4621
    %vm4624 = vcmp.eq.f32.partialorder %v4514, 0.0
    %v4625 = vand.u32 %v4514, 2147483648
    %v4626 = vsel %vm4624, %v4625, %v4623
    %v4627 = vadd.f32 %v4521, 1e-08
    %v4628 = vadd.f32 %v4528, 1e-08
    %v4629 = vadd.f32 %v4535, 1e-08
    %v4630 = vadd.f32 %v4542, 1e-08
    %v4631 = vadd.f32 %v4549, 1e-08
    %v4632 = vadd.f32 %v4556, 1e-08
    %v4633 = vadd.f32 %v4563, 1e-08
    %v4634 = vadd.f32 %v4570, 1e-08
    %v4635 = vadd.f32 %v4577, 1e-08
    %v4636 = vadd.f32 %v4584, 1e-08
    %v4637 = vadd.f32 %v4591, 1e-08
    %v4638 = vadd.f32 %v4598, 1e-08
    %v4639 = vadd.f32 %v4605, 1e-08
    %v4640 = vadd.f32 %v4612, 1e-08
    %v4641 = vadd.f32 %v4619, 1e-08
    %v4642 = vadd.f32 %v4626, 1e-08
    %v4643 = vld [vmem:[%s411] sm:$0xff]
    %v4644 = vld [vmem:[%s411 + $0x8] sm:$0xff]
    %v4645 = vld [vmem:[%s411 + $0x10] sm:$0xff]
    %v4646 = vld [vmem:[%s411 + $0x18] sm:$0xff]
    %v4647 = vld [vmem:[%s411 + $0x20] sm:$0xff]
    %v4648 = vld [vmem:[%s411 + $0x28] sm:$0xff]
    %v4649 = vld [vmem:[%s411 + $0x30] sm:$0xff]
    %v4650 = vld [vmem:[%s411 + $0x38] sm:$0xff]
    %v4651 = vld [vmem:[%s411 + $0x40] sm:$0xff]
    %v4652 = vld [vmem:[%s411 + $0x48] sm:$0xff]
    %v4653 = vld [vmem:[%s411 + $0x50] sm:$0xff]
    %v4654 = vld [vmem:[%s411 + $0x58] sm:$0xff]
    %v4655 = vld [vmem:[%s411 + $0x60] sm:$0xff]
    %v4656 = vld [vmem:[%s411 + $0x68] sm:$0xff]
    %v4657 = vld [vmem:[%s411 + $0x70] sm:$0xff]
    %v4658 = vld [vmem:[%s411 + $0x78] sm:$0xff]
    %v4659 = vmul.f32 %v4483, 0.0001
    %v4660 = vmul.f32 %v4484, 0.0001
    %v4661 = vmul.f32 %v4485, 0.0001
    %v4662 = vmul.f32 %v4486, 0.0001
    %v4663 = vmul.f32 %v4487, 0.0001
    %v4664 = vmul.f32 %v4488, 0.0001
    %v4665 = vmul.f32 %v4489, 0.0001
    %v4666 = vmul.f32 %v4490, 0.0001
    %v4667 = vmul.f32 %v4491, 0.0001
    %v4668 = vmul.f32 %v4492, 0.0001
    %v4669 = vmul.f32 %v4493, 0.0001
    %v4670 = vmul.f32 %v4494, 0.0001
    %v4671 = vmul.f32 %v4495, 0.0001
    %v4672 = vmul.f32 %v4496, 0.0001
    %v4673 = vmul.f32 %v4497, 0.0001
    %v4674 = vmul.f32 %v4498, 0.0001
    %v4675 = vrcp.pop %v4627
    %v4676 = vrcp.pop %v4628
    %v4677 = vrcp.pop %v4629
    %v4678 = vrcp.pop %v4630
    %v4679 = vrcp.pop %v4631
    %v4680 = vrcp.pop %v4632
    %v4681 = vrcp.pop %v4633
    %v4682 = vrcp.pop %v4634
    %v4683 = vrcp.pop %v4635
    %v4684 = vrcp.pop %v4636
    %v4685 = vrcp.pop %v4637
    %v4686 = vrcp.pop %v4638
    %v4687 = vrcp.pop %v4639
    %v4688 = vrcp.pop %v4640
    %v4689 = vrcp.pop %v4641
    %v4690 = vrcp.pop %v4642
    %v4691 = vmul.f32 %v4659, %v4675
    %v4692 = vmul.f32 %v4660, %v4676
    %v4693 = vmul.f32 %v4661, %v4677
    %v4694 = vmul.f32 %v4662, %v4678
    %v4695 = vmul.f32 %v4663, %v4679
    %v4696 = vmul.f32 %v4664, %v4680
    %v4697 = vmul.f32 %v4665, %v4681
    %v4698 = vmul.f32 %v4666, %v4682
    %v4699 = vmul.f32 %v4667, %v4683
    %v4700 = vmul.f32 %v4668, %v4684
    %v4701 = vmul.f32 %v4669, %v4685
    %v4702 = vmul.f32 %v4670, %v4686
    %v4703 = vmul.f32 %v4671, %v4687
    %v4704 = vmul.f32 %v4672, %v4688
    %v4705 = vmul.f32 %v4673, %v4689
    %v4706 = vmul.f32 %v4674, %v4690
    %v4707 = vsub.f32 %v4643, %v4691
    %v4708 = vsub.f32 %v4644, %v4692
    %v4709 = vsub.f32 %v4645, %v4693
    %v4710 = vsub.f32 %v4646, %v4694
    %v4711 = vsub.f32 %v4647, %v4695
    %v4712 = vsub.f32 %v4648, %v4696
    %v4713 = vsub.f32 %v4649, %v4697
    %v4714 = vsub.f32 %v4650, %v4698
    %v4715 = vsub.f32 %v4651, %v4699
    %v4716 = vsub.f32 %v4652, %v4700
    %v4717 = vsub.f32 %v4653, %v4701
    %v4718 = vsub.f32 %v4654, %v4702
    %v4719 = vsub.f32 %v4655, %v4703
    %v4720 = vsub.f32 %v4656, %v4704
    %v4721 = vsub.f32 %v4657, %v4705
    %v4722 = vsub.f32 %v4658, %v4706
    %s4723 = scalar_lea.vmem %s8, 256
    %4724 = vst [vmem:[%s4723] sm:$0xff] %v4707
    %4725 = vst [vmem:[%s4723 + $0x8] sm:$0xff] %v4708
    %4726 = vst [vmem:[%s4723 + $0x10] sm:$0xff] %v4709
    %4727 = vst [vmem:[%s4723 + $0x18] sm:$0xff] %v4710
    %4728 = vst [vmem:[%s4723 + $0x20] sm:$0xff] %v4711
    %4729 = vst [vmem:[%s4723 + $0x28] sm:$0xff] %v4712
    %4730 = vst [vmem:[%s4723 + $0x30] sm:$0xff] %v4713
    %4731 = vst [vmem:[%s4723 + $0x38] sm:$0xff] %v4714
    %4732 = vst [vmem:[%s4723 + $0x40] sm:$0xff] %v4715
    %4733 = vst [vmem:[%s4723 + $0x48] sm:$0xff] %v4716
    %4734 = vst [vmem:[%s4723 + $0x50] sm:$0xff] %v4717
    %4735 = vst [vmem:[%s4723 + $0x58] sm:$0xff] %v4718
    %4736 = vst [vmem:[%s4723 + $0x60] sm:$0xff] %v4719
    %4737 = vst [vmem:[%s4723 + $0x68] sm:$0xff] %v4720
    %4738 = vst [vmem:[%s4723 + $0x70] sm:$0xff] %v4721
    %4739 = vst [vmem:[%s4723 + $0x78] sm:$0xff] %v4722
    %s4740 = scalar_lea.vmem %s9, 256
    %4741 = vst [vmem:[%s4740] sm:$0xff] %v4386
    %4742 = vst [vmem:[%s4740 + $0x8] sm:$0xff] %v4387
    %4743 = vst [vmem:[%s4740 + $0x10] sm:$0xff] %v4388
    %4744 = vst [vmem:[%s4740 + $0x18] sm:$0xff] %v4389
    %4745 = vst [vmem:[%s4740 + $0x20] sm:$0xff] %v4390
    %4746 = vst [vmem:[%s4740 + $0x28] sm:$0xff] %v4391
    %4747 = vst [vmem:[%s4740 + $0x30] sm:$0xff] %v4392
    %4748 = vst [vmem:[%s4740 + $0x38] sm:$0xff] %v4393
    %4749 = vst [vmem:[%s4740 + $0x40] sm:$0xff] %v4394
    %4750 = vst [vmem:[%s4740 + $0x48] sm:$0xff] %v4395
    %4751 = vst [vmem:[%s4740 + $0x50] sm:$0xff] %v4396
    %4752 = vst [vmem:[%s4740 + $0x58] sm:$0xff] %v4397
    %4753 = vst [vmem:[%s4740 + $0x60] sm:$0xff] %v4398
    %4754 = vst [vmem:[%s4740 + $0x68] sm:$0xff] %v4399
    %4755 = vst [vmem:[%s4740 + $0x70] sm:$0xff] %v4400
    %4756 = vst [vmem:[%s4740 + $0x78] sm:$0xff] %v4401
    %s4757 = scalar_lea.vmem %s10, 256
    %4758 = vst [vmem:[%s4757] sm:$0xff] %v4467
    %4759 = vst [vmem:[%s4757 + $0x8] sm:$0xff] %v4468
    %4760 = vst [vmem:[%s4757 + $0x10] sm:$0xff] %v4469
    %4761 = vst [vmem:[%s4757 + $0x18] sm:$0xff] %v4470
    %4762 = vst [vmem:[%s4757 + $0x20] sm:$0xff] %v4471
    %4763 = vst [vmem:[%s4757 + $0x28] sm:$0xff] %v4472
    %4764 = vst [vmem:[%s4757 + $0x30] sm:$0xff] %v4473
    %4765 = vst [vmem:[%s4757 + $0x38] sm:$0xff] %v4474
    %4766 = vst [vmem:[%s4757 + $0x40] sm:$0xff] %v4475
    %4767 = vst [vmem:[%s4757 + $0x48] sm:$0xff] %v4476
    %4768 = vst [vmem:[%s4757 + $0x50] sm:$0xff] %v4477
    %4769 = vst [vmem:[%s4757 + $0x58] sm:$0xff] %v4478
    %4770 = vst [vmem:[%s4757 + $0x60] sm:$0xff] %v4479
    %4771 = vst [vmem:[%s4757 + $0x68] sm:$0xff] %v4480
    %4772 = vst [vmem:[%s4757 + $0x70] sm:$0xff] %v4481
    %4773 = vst [vmem:[%s4757 + $0x78] sm:$0xff] %v4482
    // Predicated region
    $region34: #{train_step.1} parent=1 // pred_check
      _
    $region35: #{train_step.1} parent=1 // pred_check_branch
      %4775 = sbr.rel (0) target = $region37
    $region36: #{train_step.1} parent=1 // pred_region
      %s4777 = ssub.s32 16, 16
      %4778 = vsyncadd [#allocation6], %s4777
      %s4780 = sshll.u32 [#allocation8], 4
      %s4781 = int_to_ptr.vmem [resolvable:$true] %s4780
      %4783 = dma.vmem_to_hbm [thread:$0]  %s4781, 16, %s7, [#allocation6]
    $region37: #{train_step.1} parent=1 // pred_fallthru
      _
    // Predicated region
    $region38: #{train_step.1} parent=1 // pred_check
      _
    $region39: #{train_step.1} parent=1 // pred_check_branch
      %4785 = sbr.rel (0) target = $region41
    $region40: #{train_step.1} parent=1 // pred_region
      _
    $region41: #{train_step.1} parent=1 // pred_fallthru
      _
    // Predicated region
    $region42: #{train_step.1} parent=1 // pred_check
      _
    $region43: #{train_step.1} parent=1 // pred_check_branch
      %4787 = sbr.rel (0) target = $region45
    $region44: #{train_step.1} parent=1 // pred_region
      _
    $region45: #{train_step.1} parent=1 // pred_fallthru
      _
    // Predicated region
    $region46: #{train_step.1} parent=1 // pred_check
      _
    $region47: #{train_step.1} parent=1 // pred_check_branch
      %4789 = sbr.rel (0) target = $region49
    $region48: #{train_step.1} parent=1 // pred_region
      _
    $region49: #{train_step.1} parent=1 // pred_fallthru
      _
    // Predicated region
    $region50: #{train_step.1} parent=1 // pred_check
      _
    $region51: #{train_step.1} parent=1 // pred_check_branch
      %4791 = sbr.rel (0) target = $region53
    $region52: #{train_step.1} parent=1 // pred_region
      %4792 = dma.done [#allocation6], 16
    $region53: #{train_step.1} parent=1 // pred_fallthru
      _
    // Predicated region
    $region54: #{train_step.1} parent=1 // pred_check
      _
    $region55: #{train_step.1} parent=1 // pred_check_branch
      %4794 = sbr.rel (0) target = $region57
    $region56: #{train_step.1} parent=1 // pred_region
      _
    $region57: #{train_step.1} parent=1 // pred_fallthru
      _
    // Predicated region
    $region58: #{train_step.1} parent=1 // pred_check
      _
    $region59: #{train_step.1} parent=1 // pred_check_branch
      %4796 = sbr.rel (0) target = $region61
    $region60: #{train_step.1} parent=1 // pred_region
      _
    $region61: #{train_step.1} parent=1 // pred_fallthru
      _
    // Predicated region
    $region62: #{train_step.1} parent=1 // pred_check
      _
    $region63: #{train_step.1} parent=1 // pred_check_branch
      %4798 = sbr.rel (0) target = $region65
    $region64: #{train_step.1} parent=1 // pred_region
      _
    $region65: #{train_step.1} parent=1 // pred_fallthru
      _
    %4799 = vsyncpa [#allocation6], 1
    %4800 = vsyncpa [#allocation7], 1

</llo_original>
